<compile_context>
chip_gen: v7x
topology: tpu7x:2x2x1
jax: 0.10.0
libtpu: 0.0.40
codegen_flags: <defaults>
</compile_context>

<pallas_src>
import jax
import jax.numpy as jnp
from jax import lax
from jax.experimental import pallas as pl
from jax.experimental.pallas import tpu as pltpu

# ---- small, TPU-friendly shapes ------------------------------------------------
D = 32      # ast_node_embedding_dim
N = 32      # number of AST nodes
P = 8       # number of AST paths for the single path type ('leaf_to_leaf')
L = 8       # max path length (node occurrences per path)
V = 8       # traversal-orientation vocab size (PAD = index 0)
M = P * L   # total node occurrences (l-major ordering: row = l*P + p)

VMEM_SPEC = pl.BlockSpec(memory_space=pltpu.MemorySpace.VMEM)


# ---- single fused kernel -------------------------------------------------------
def _fused_ast_paths_kernel(node_occ_ref, cv_ref, valid_col_ref, idx_row_ref,
                            valid_row_ref, len_f_ref, w_proj_ref, b_proj_ref,
                            w_ih_ref, w_hh_ref, b_x_ref, b_hn_ref,
                            nodes_out_ref, orient_out_ref, combined_out_ref,
                            ast_out_ref):
    valid = valid_col_ref[...]                                    # [M, 1] {0,1}

    # Traversal-orientation projection: Linear(concat(child_emb, vert_emb)),
    # then masked_fill of the woven GRU input (both node occurrences and edges).
    orient_in = (jnp.dot(cv_ref[...], w_proj_ref[...],
                         preferred_element_type=jnp.float32)
                 + b_proj_ref[...]) * valid                       # [M, D]
    nodes_in = node_occ_ref[...] * valid                          # [M, D]

    # Hoisted input-gate projection for ALL woven timesteps: one [2M, D]x[D, 3D]
    # matmul with biases (b_ir+b_hr, b_iz+b_hz, b_in) pre-folded in.
    x_all = jnp.concatenate([nodes_in, orient_in], axis=0)        # [2M, D]
    gx_all = jnp.dot(x_all, w_ih_ref[...],
                     preferred_element_type=jnp.float32) + b_x_ref[...]
    gx_nodes = gx_all[:M]                                         # [M, 3D]
    gx_orient = gx_all[M:]                                        # [M, 3D]

    w_hh = w_hh_ref[...]                                          # [D, 3D]
    b_hn = b_hn_ref[...]                                          # [1, D]

    h = jnp.zeros((P, D), jnp.float32)
    comb_acc = jnp.zeros((P, D), jnp.float32)
    node_outs = []

    def gru_substep(gx, h_prev, valid_l):
        # PyTorch GRU gate order (r, z, n); one MXU push per step on the
        # gate-concatenated recurrent weight.
        gh = jnp.dot(h_prev, w_hh, preferred_element_type=jnp.float32)  # [P, 3D]
        r = jax.nn.sigmoid(gx[:, 0:D] + gh[:, 0:D])
        z = jax.nn.sigmoid(gx[:, D:2 * D] + gh[:, D:2 * D])
        n = jnp.tanh(gx[:, 2 * D:3 * D] + r * (gh[:, 2 * D:3 * D] + b_hn))
        h_new = (1.0 - z) * n + z * h_prev
        # packed-sequence emulation: freeze state past the (doubled) path length;
        # exposed output is zero at padded positions (matches pad_packed_sequence).
        h_next = valid_l * h_new + (1.0 - valid_l) * h_prev
        return h_next, h_new * valid_l

    # Weave-free recurrence: per path position l, sub-step on the node occurrence
    # then on the traversal-orientation edge (woven t = 2l, 2l+1).  Statically
    # unrolled (16 sub-steps) for scheduler visibility.
    for l in range(L):
        valid_l = valid[l * P:(l + 1) * P, :]                     # [P, 1]
        h, out_node = gru_substep(gx_nodes[l * P:(l + 1) * P, :], h, valid_l)
        nodes_out_ref[l] = out_node
        node_outs.append(out_node)
        comb_acc = comb_acc + out_node
        h, out_orient = gru_substep(gx_orient[l * P:(l + 1) * P, :], h, valid_l)
        orient_out_ref[l] = out_orient

    # SequenceCombiner: masked mean over valid node occurrences.
    combined_out_ref[...] = comb_acc / jnp.maximum(len_f_ref[...], 1.0)

    # PathsFolded / ScatterCombiner(mean): scatter-mean of valid node-occurrence
    # encodings onto AST nodes, expressed as a one-hot matmul built in-kernel.
    idx = idx_row_ref[...]                                        # [1, M] int32
    oh = ((lax.broadcasted_iota(jnp.int32, (N, M), 0) == idx)
          .astype(jnp.float32) * valid_row_ref[...])              # [N, M]
    nodes_flat = jnp.concatenate(node_outs, axis=0)               # [M, D] (masked)
    sums = jnp.dot(oh, nodes_flat, preferred_element_type=jnp.float32)  # [N, D]
    counts = jnp.sum(oh, axis=1, keepdims=True)                   # [N, 1]
    # TODO(synk): nodes with zero valid occurrences get zeros, matching scatter_mean;
    #             attention-based ScatterCombiner variants are not implemented.
    ast_out_ref[...] = sums / jnp.maximum(counts, 1.0)


# ---- parameters (deterministic synthetic init, pre-concatenated GRU layout) ----
def init_params(key):
    ks = jax.random.split(key, 8)
    s = 0.1
    emb = s * jax.random.normal(ks[0], (V, D), jnp.float32)
    emb = emb.at[0].set(0.0)                      # padding_idx = 0
    w1 = s * jax.random.normal(ks[1], (D, D), jnp.float32)
    w2 = s * jax.random.normal(ks[2], (D, D), jnp.float32)
    w_ih = s * jax.random.normal(ks[4], (3, D, D), jnp.float32)   # (r, z, n)
    w_hh = s * jax.random.normal(ks[5], (3, D, D), jnp.float32)
    b_ih = s * jax.random.normal(ks[6], (3, 1, D), jnp.float32)
    b_hh = s * jax.random.normal(ks[7], (3, 1, D), jnp.float32)
    return dict(
        orient_emb=emb,
        proj_w=jnp.concatenate([w1, w2], axis=0),                 # [2D, D]
        proj_b=s * jax.random.normal(ks[3], (1, D), jnp.float32),  # [1, D]
        gru_w_ih=jnp.concatenate([w_ih[0], w_ih[1], w_ih[2]], axis=1),  # [D, 3D]
        gru_w_hh=jnp.concatenate([w_hh[0], w_hh[1], w_hh[2]], axis=1),  # [D, 3D]
        gru_b_x=jnp.concatenate(
            [b_ih[0] + b_hh[0], b_ih[1] + b_hh[1], b_ih[2]], axis=1),   # [1, 3D]
        gru_b_hn=b_hh[2],                                         # [1, D]
    )


# ---- forward (mirrors ASTPathsEncoder.forward for the chosen config) -----------
def ast_paths_encoder_forward(params, ast_nodes_encodings, node_indices,
                              child_ids, vert_ids, lengths):
    # gathers + tiny layout prep (glue, stays in XLA); everything is l-major:
    # flattened row index = l*P + p, so the kernel's recurrence slices are static.
    idx_lp = node_indices.T.reshape(M)                            # [M] int32
    node_occ = ast_nodes_encodings[idx_lp]                        # [M, D]
    child_emb = params['orient_emb'][child_ids.T.reshape(M)]      # [M, D]
    vert_emb = params['orient_emb'][vert_ids.T.reshape(M)]        # [M, D]
    cv_emb = jnp.concatenate([child_emb, vert_emb], axis=1)       # [M, 2D]

    valid_lp = jnp.arange(L)[:, None] < lengths[None, :]          # [L, P] bool
    valid_col = valid_lp.reshape(M, 1).astype(jnp.float32)
    valid_row = valid_lp.reshape(1, M).astype(jnp.float32)
    idx_row = idx_lp.reshape(1, M).astype(jnp.int32)
    len_f = lengths.reshape(P, 1).astype(jnp.float32)

    nodes_lpd, orient_lpd, combined, ast_nodes = pl.pallas_call(
        _fused_ast_paths_kernel,
        out_shape=(
            jax.ShapeDtypeStruct((L, P, D), jnp.float32),
            jax.ShapeDtypeStruct((L, P, D), jnp.float32),
            jax.ShapeDtypeStruct((P, D), jnp.float32),
            jax.ShapeDtypeStruct((N, D), jnp.float32),
        ),
        in_specs=[VMEM_SPEC] * 12,
        out_specs=(VMEM_SPEC, VMEM_SPEC, VMEM_SPEC, VMEM_SPEC),
    )(node_occ, cv_emb, valid_col, idx_row, valid_row, len_f,
      params['proj_w'], params['proj_b'],
      params['gru_w_ih'], params['gru_w_hh'],
      params['gru_b_x'], params['gru_b_hn'])

    # back to batch-first [P, L, D] (tiny XLA transpose)
    nodes_enc = jnp.transpose(nodes_lpd, (1, 0, 2))
    orient_enc = jnp.transpose(orient_lpd, (1, 0, 2))

    # TODO(synk): norm_params / dropout omitted (norm=None, eval mode) per chosen config.
    return {
        'ast_nodes': ast_nodes,
        'ast_paths_by_type': {
            'leaf_to_leaf': {
                'nodes_occurrences': nodes_enc,
                'traversal_orientation': orient_enc,
                'combined': combined,
            }
        },
    }


if __name__ == "__main__":
    key = jax.random.PRNGKey(0)
    ks = jax.random.split(key, 6)
    params = init_params(ks[0])
    ast_nodes_encodings = jax.random.normal(ks[1], (N, D), jnp.float32)
    node_indices = jax.random.randint(ks[2], (P, L), 0, N, dtype=jnp.int32)
    lengths = jax.random.randint(ks[3], (P,), 2, L + 1, dtype=jnp.int32)
    child_ids = jax.random.randint(ks[4], (P, L), 1, V, dtype=jnp.int32)
    vert_ids = jax.random.randint(ks[5], (P, L), 1, V, dtype=jnp.int32)

    out = jax.jit(ast_paths_encoder_forward)(
        params, ast_nodes_encodings, node_indices, child_ids, vert_ids, lengths)
    jax.tree_util.tree_map(jax.block_until_ready, out)
    assert out['ast_nodes'].shape == (N, D)
    assert out['ast_paths_by_type']['leaf_to_leaf']['combined'].shape == (P, D)
    assert out['ast_paths_by_type']['leaf_to_leaf']['nodes_occurrences'].shape == (P, L, D)
    print("KERNEL_OK")
</pallas_src>

<mosaic_0001>
module attributes {stable_mosaic.version = 11 : i64} {
  func.func @_fused_ast_paths_kernel(%arg0: memref<64x32xf32, #tpu.memory_space<vmem>>, %arg1: memref<64x64xf32, #tpu.memory_space<vmem>>, %arg2: memref<64x1xf32, #tpu.memory_space<vmem>>, %arg3: memref<1x64xi32, #tpu.memory_space<vmem>>, %arg4: memref<1x64xf32, #tpu.memory_space<vmem>>, %arg5: memref<8x1xf32, #tpu.memory_space<vmem>>, %arg6: memref<64x32xf32, #tpu.memory_space<vmem>>, %arg7: memref<1x32xf32, #tpu.memory_space<vmem>>, %arg8: memref<32x96xf32, #tpu.memory_space<vmem>>, %arg9: memref<32x96xf32, #tpu.memory_space<vmem>>, %arg10: memref<1x96xf32, #tpu.memory_space<vmem>>, %arg11: memref<1x32xf32, #tpu.memory_space<vmem>>, %arg12: memref<8x8x32xf32, #tpu.memory_space<vmem>>, %arg13: memref<8x8x32xf32, #tpu.memory_space<vmem>>, %arg14: memref<8x32xf32, #tpu.memory_space<vmem>>, %arg15: memref<32x32xf32, #tpu.memory_space<vmem>>) attributes {dimension_semantics = [], scalar_prefetch = 0 : i64, scratch_operands = 0 : i64, tpu.core_type = #tpu.core_type<tc>} {
    %c0 = arith.constant 0 : index
    %c0_0 = arith.constant 0 : index
    %0 = vector.load %arg2[%c0, %c0_0] : memref<64x1xf32, #tpu.memory_space<vmem>>, vector<64x1xf32>
    %c0_1 = arith.constant 0 : index
    %c0_2 = arith.constant 0 : index
    %1 = vector.load %arg1[%c0_1, %c0_2] : memref<64x64xf32, #tpu.memory_space<vmem>>, vector<64x64xf32>
    %c0_3 = arith.constant 0 : index
    %c0_4 = arith.constant 0 : index
    %2 = vector.load %arg6[%c0_3, %c0_4] : memref<64x32xf32, #tpu.memory_space<vmem>>, vector<64x32xf32>
    %cst = arith.constant dense<0.000000e+00> : vector<64x32xf32>
    %3 = tpu.matmul %1, %2, %cst {dimension_numbers = #tpu.dot_dimension_numbers<[1], [0], [0], [1], [0, 0, 1, 1], [], []>} : vector<64x64xf32>, vector<64x32xf32>, vector<64x32xf32> -> vector<64x32xf32>
    %c0_5 = arith.constant 0 : index
    %c0_6 = arith.constant 0 : index
    %4 = vector.load %arg7[%c0_5, %c0_6] : memref<1x32xf32, #tpu.memory_space<vmem>>, vector<1x32xf32>
    %5 = vector.broadcast %4 : vector<1x32xf32> to vector<64x32xf32>
    %6 = arith.addf %3, %5 : vector<64x32xf32>
    %7 = vector.broadcast %0 : vector<64x1xf32> to vector<64x32xf32>
    %8 = arith.mulf %6, %7 : vector<64x32xf32>
    %c0_7 = arith.constant 0 : index
    %c0_8 = arith.constant 0 : index
    %9 = vector.load %arg0[%c0_7, %c0_8] : memref<64x32xf32, #tpu.memory_space<vmem>>, vector<64x32xf32>
    %10 = vector.broadcast %0 : vector<64x1xf32> to vector<64x32xf32>
    %11 = arith.mulf %9, %10 : vector<64x32xf32>
    %12 = tpu.concatenate %11, %8 in 0 : vector<64x32xf32>, vector<64x32xf32> -> vector<128x32xf32>
    %c0_9 = arith.constant 0 : index
    %c0_10 = arith.constant 0 : index
    %13 = vector.load %arg8[%c0_9, %c0_10] : memref<32x96xf32, #tpu.memory_space<vmem>>, vector<32x96xf32>
    %cst_11 = arith.constant dense<0.000000e+00> : vector<128x96xf32>
    %14 = tpu.matmul %12, %13, %cst_11 {dimension_numbers = #tpu.dot_dimension_numbers<[1], [0], [0], [1], [0, 0, 1, 1], [], []>} : vector<128x32xf32>, vector<32x96xf32>, vector<128x96xf32> -> vector<128x96xf32>
    %c0_12 = arith.constant 0 : index
    %c0_13 = arith.constant 0 : index
    %15 = vector.load %arg10[%c0_12, %c0_13] : memref<1x96xf32, #tpu.memory_space<vmem>>, vector<1x96xf32>
    %16 = vector.broadcast %15 : vector<1x96xf32> to vector<128x96xf32>
    %17 = arith.addf %14, %16 : vector<128x96xf32>
    %18 = vector.extract_strided_slice %17 {offsets = [0, 0], sizes = [64, 96], strides = [1, 1]} : vector<128x96xf32> to vector<64x96xf32>
    %19 = vector.extract_strided_slice %17 {offsets = [64, 0], sizes = [64, 96], strides = [1, 1]} : vector<128x96xf32> to vector<64x96xf32>
    %c0_14 = arith.constant 0 : index
    %c0_15 = arith.constant 0 : index
    %20 = vector.load %arg9[%c0_14, %c0_15] : memref<32x96xf32, #tpu.memory_space<vmem>>, vector<32x96xf32>
    %c0_16 = arith.constant 0 : index
    %c0_17 = arith.constant 0 : index
    %21 = vector.load %arg11[%c0_16, %c0_17] : memref<1x32xf32, #tpu.memory_space<vmem>>, vector<1x32xf32>
    %cst_18 = arith.constant 0.000000e+00 : f32
    %22 = vector.broadcast %cst_18 : f32 to vector<8x32xf32>
    %cst_19 = arith.constant 0.000000e+00 : f32
    %23 = vector.broadcast %cst_19 : f32 to vector<8x32xf32>
    %24 = vector.extract_strided_slice %0 {offsets = [0, 0], sizes = [8, 1], strides = [1, 1]} : vector<64x1xf32> to vector<8x1xf32>
    %25 = vector.extract_strided_slice %18 {offsets = [0, 0], sizes = [8, 96], strides = [1, 1]} : vector<64x96xf32> to vector<8x96xf32>
    %cst_20 = arith.constant dense<0.000000e+00> : vector<8x96xf32>
    %26 = tpu.matmul %22, %20, %cst_20 {dimension_numbers = #tpu.dot_dimension_numbers<[1], [0], [0], [1], [0, 0, 1, 1], [], []>} : vector<8x32xf32>, vector<32x96xf32>, vector<8x96xf32> -> vector<8x96xf32>
    %27 = vector.extract_strided_slice %25 {offsets = [0, 0], sizes = [8, 32], strides = [1, 1]} : vector<8x96xf32> to vector<8x32xf32>
    %28 = vector.extract_strided_slice %26 {offsets = [0, 0], sizes = [8, 32], strides = [1, 1]} : vector<8x96xf32> to vector<8x32xf32>
    %29 = arith.addf %27, %28 : vector<8x32xf32>
    %30 = arith.negf %29 : vector<8x32xf32>
    %31 = math.exp %30 : vector<8x32xf32>
    %cst_21 = arith.constant 1.000000e+00 : f32
    %32 = vector.broadcast %cst_21 : f32 to vector<8x32xf32>
    %33 = arith.addf %32, %31 : vector<8x32xf32>
    %34 = arith.divf %32, %33 : vector<8x32xf32>
    %35 = vector.extract_strided_slice %25 {offsets = [0, 32], sizes = [8, 32], strides = [1, 1]} : vector<8x96xf32> to vector<8x32xf32>
    %36 = vector.extract_strided_slice %26 {offsets = [0, 32], sizes = [8, 32], strides = [1, 1]} : vector<8x96xf32> to vector<8x32xf32>
    %37 = arith.addf %35, %36 : vector<8x32xf32>
    %38 = arith.negf %37 : vector<8x32xf32>
    %39 = math.exp %38 : vector<8x32xf32>
    %cst_22 = arith.constant 1.000000e+00 : f32
    %40 = vector.broadcast %cst_22 : f32 to vector<8x32xf32>
    %41 = arith.addf %40, %39 : vector<8x32xf32>
    %42 = arith.divf %40, %41 : vector<8x32xf32>
    %43 = vector.extract_strided_slice %25 {offsets = [0, 64], sizes = [8, 32], strides = [1, 1]} : vector<8x96xf32> to vector<8x32xf32>
    %44 = vector.extract_strided_slice %26 {offsets = [0, 64], sizes = [8, 32], strides = [1, 1]} : vector<8x96xf32> to vector<8x32xf32>
    %45 = vector.broadcast %21 : vector<1x32xf32> to vector<8x32xf32>
    %46 = arith.addf %44, %45 : vector<8x32xf32>
    %47 = arith.mulf %34, %46 : vector<8x32xf32>
    %48 = arith.addf %43, %47 : vector<8x32xf32>
    %49 = math.tanh %48 : vector<8x32xf32>
    %cst_23 = arith.constant 1.000000e+00 : f32
    %50 = vector.broadcast %cst_23 : f32 to vector<8x32xf32>
    %51 = arith.subf %50, %42 : vector<8x32xf32>
    %52 = arith.mulf %51, %49 : vector<8x32xf32>
    %53 = arith.mulf %42, %22 : vector<8x32xf32>
    %54 = arith.addf %52, %53 : vector<8x32xf32>
    %55 = vector.broadcast %24 : vector<8x1xf32> to vector<8x32xf32>
    %56 = arith.mulf %55, %54 : vector<8x32xf32>
    %cst_24 = arith.constant 1.000000e+00 : f32
    %57 = vector.broadcast %cst_24 : f32 to vector<8x1xf32>
    %58 = arith.subf %57, %24 : vector<8x1xf32>
    %59 = vector.broadcast %58 : vector<8x1xf32> to vector<8x32xf32>
    %60 = arith.mulf %59, %22 : vector<8x32xf32>
    %61 = arith.addf %56, %60 : vector<8x32xf32>
    %62 = vector.broadcast %24 : vector<8x1xf32> to vector<8x32xf32>
    %63 = arith.mulf %54, %62 : vector<8x32xf32>
    %c0_25 = arith.constant 0 : index
    %c0_26 = arith.constant 0 : index
    %c0_27 = arith.constant 0 : index
    %64 = vector.load %arg12[%c0_25, %c0_26, %c0_27] : memref<8x8x32xf32, #tpu.memory_space<vmem>>, vector<1x8x32xf32>
    %65 = vector.shape_cast %64 : vector<1x8x32xf32> to vector<8x32xf32>
    %66 = vector.shape_cast %63 : vector<8x32xf32> to vector<1x8x32xf32>
    tpu.vector_store %arg12[%c0_25, %c0_26, %c0_27], %66 {strides = array<i32>} : memref<8x8x32xf32, #tpu.memory_space<vmem>>, vector<1x8x32xf32>,
    %67 = arith.addf %23, %63 : vector<8x32xf32>
    %68 = vector.extract_strided_slice %19 {offsets = [0, 0], sizes = [8, 96], strides = [1, 1]} : vector<64x96xf32> to vector<8x96xf32>
    %cst_28 = arith.constant dense<0.000000e+00> : vector<8x96xf32>
    %69 = tpu.matmul %61, %20, %cst_28 {dimension_numbers = #tpu.dot_dimension_numbers<[1], [0], [0], [1], [0, 0, 1, 1], [], []>} : vector<8x32xf32>, vector<32x96xf32>, vector<8x96xf32> -> vector<8x96xf32>
    %70 = vector.extract_strided_slice %68 {offsets = [0, 0], sizes = [8, 32], strides = [1, 1]} : vector<8x96xf32> to vector<8x32xf32>
    %71 = vector.extract_strided_slice %69 {offsets = [0, 0], sizes = [8, 32], strides = [1, 1]} : vector<8x96xf32> to vector<8x32xf32>
    %72 = arith.addf %70, %71 : vector<8x32xf32>
    %73 = arith.negf %72 : vector<8x32xf32>
    %74 = math.exp %73 : vector<8x32xf32>
    %cst_29 = arith.constant 1.000000e+00 : f32
    %75 = vector.broadcast %cst_29 : f32 to vector<8x32xf32>
    %76 = arith.addf %75, %74 : vector<8x32xf32>
    %77 = arith.divf %75, %76 : vector<8x32xf32>
    %78 = vector.extract_strided_slice %68 {offsets = [0, 32], sizes = [8, 32], strides = [1, 1]} : vector<8x96xf32> to vector<8x32xf32>
    %79 = vector.extract_strided_slice %69 {offsets = [0, 32], sizes = [8, 32], strides = [1, 1]} : vector<8x96xf32> to vector<8x32xf32>
    %80 = arith.addf %78, %79 : vector<8x32xf32>
    %81 = arith.negf %80 : vector<8x32xf32>
    %82 = math.exp %81 : vector<8x32xf32>
    %cst_30 = arith.constant 1.000000e+00 : f32
    %83 = vector.broadcast %cst_30 : f32 to vector<8x32xf32>
    %84 = arith.addf %83, %82 : vector<8x32xf32>
    %85 = arith.divf %83, %84 : vector<8x32xf32>
    %86 = vector.extract_strided_slice %68 {offsets = [0, 64], sizes = [8, 32], strides = [1, 1]} : vector<8x96xf32> to vector<8x32xf32>
    %87 = vector.extract_strided_slice %69 {offsets = [0, 64], sizes = [8, 32], strides = [1, 1]} : vector<8x96xf32> to vector<8x32xf32>
    %88 = vector.broadcast %21 : vector<1x32xf32> to vector<8x32xf32>
    %89 = arith.addf %87, %88 : vector<8x32xf32>
    %90 = arith.mulf %77, %89 : vector<8x32xf32>
    %91 = arith.addf %86, %90 : vector<8x32xf32>
    %92 = math.tanh %91 : vector<8x32xf32>
    %cst_31 = arith.constant 1.000000e+00 : f32
    %93 = vector.broadcast %cst_31 : f32 to vector<8x32xf32>
    %94 = arith.subf %93, %85 : vector<8x32xf32>
    %95 = arith.mulf %94, %92 : vector<8x32xf32>
    %96 = arith.mulf %85, %61 : vector<8x32xf32>
    %97 = arith.addf %95, %96 : vector<8x32xf32>
    %98 = vector.broadcast %24 : vector<8x1xf32> to vector<8x32xf32>
    %99 = arith.mulf %98, %97 : vector<8x32xf32>
    %cst_32 = arith.constant 1.000000e+00 : f32
    %100 = vector.broadcast %cst_32 : f32 to vector<8x1xf32>
    %101 = arith.subf %100, %24 : vector<8x1xf32>
    %102 = vector.broadcast %101 : vector<8x1xf32> to vector<8x32xf32>
    %103 = arith.mulf %102, %61 : vector<8x32xf32>
    %104 = arith.addf %99, %103 : vector<8x32xf32>
    %105 = vector.broadcast %24 : vector<8x1xf32> to vector<8x32xf32>
    %106 = arith.mulf %97, %105 : vector<8x32xf32>
    %c0_33 = arith.constant 0 : index
    %c0_34 = arith.constant 0 : index
    %c0_35 = arith.constant 0 : index
    %107 = vector.load %arg13[%c0_33, %c0_34, %c0_35] : memref<8x8x32xf32, #tpu.memory_space<vmem>>, vector<1x8x32xf32>
    %108 = vector.shape_cast %107 : vector<1x8x32xf32> to vector<8x32xf32>
    %109 = vector.shape_cast %106 : vector<8x32xf32> to vector<1x8x32xf32>
    tpu.vector_store %arg13[%c0_33, %c0_34, %c0_35], %109 {strides = array<i32>} : memref<8x8x32xf32, #tpu.memory_space<vmem>>, vector<1x8x32xf32>,
    %110 = vector.extract_strided_slice %0 {offsets = [8, 0], sizes = [8, 1], strides = [1, 1]} : vector<64x1xf32> to vector<8x1xf32>
    %111 = vector.extract_strided_slice %18 {offsets = [8, 0], sizes = [8, 96], strides = [1, 1]} : vector<64x96xf32> to vector<8x96xf32>
    %cst_36 = arith.constant dense<0.000000e+00> : vector<8x96xf32>
    %112 = tpu.matmul %104, %20, %cst_36 {dimension_numbers = #tpu.dot_dimension_numbers<[1], [0], [0], [1], [0, 0, 1, 1], [], []>} : vector<8x32xf32>, vector<32x96xf32>, vector<8x96xf32> -> vector<8x96xf32>
    %113 = vector.extract_strided_slice %111 {offsets = [0, 0], sizes = [8, 32], strides = [1, 1]} : vector<8x96xf32> to vector<8x32xf32>
    %114 = vector.extract_strided_slice %112 {offsets = [0, 0], sizes = [8, 32], strides = [1, 1]} : vector<8x96xf32> to vector<8x32xf32>
    %115 = arith.addf %113, %114 : vector<8x32xf32>
    %116 = arith.negf %115 : vector<8x32xf32>
    %117 = math.exp %116 : vector<8x32xf32>
    %cst_37 = arith.constant 1.000000e+00 : f32
    %118 = vector.broadcast %cst_37 : f32 to vector<8x32xf32>
    %119 = arith.addf %118, %117 : vector<8x32xf32>
    %120 = arith.divf %118, %119 : vector<8x32xf32>
    %121 = vector.extract_strided_slice %111 {offsets = [0, 32], sizes = [8, 32], strides = [1, 1]} : vector<8x96xf32> to vector<8x32xf32>
    %122 = vector.extract_strided_slice %112 {offsets = [0, 32], sizes = [8, 32], strides = [1, 1]} : vector<8x96xf32> to vector<8x32xf32>
    %123 = arith.addf %121, %122 : vector<8x32xf32>
    %124 = arith.negf %123 : vector<8x32xf32>
    %125 = math.exp %124 : vector<8x32xf32>
    %cst_38 = arith.constant 1.000000e+00 : f32
    %126 = vector.broadcast %cst_38 : f32 to vector<8x32xf32>
    %127 = arith.addf %126, %125 : vector<8x32xf32>
    %128 = arith.divf %126, %127 : vector<8x32xf32>
    %129 = vector.extract_strided_slice %111 {offsets = [0, 64], sizes = [8, 32], strides = [1, 1]} : vector<8x96xf32> to vector<8x32xf32>
    %130 = vector.extract_strided_slice %112 {offsets = [0, 64], sizes = [8, 32], strides = [1, 1]} : vector<8x96xf32> to vector<8x32xf32>
    %131 = vector.broadcast %21 : vector<1x32xf32> to vector<8x32xf32>
    %132 = arith.addf %130, %131 : vector<8x32xf32>
    %133 = arith.mulf %120, %132 : vector<8x32xf32>
    %134 = arith.addf %129, %133 : vector<8x32xf32>
    %135 = math.tanh %134 : vector<8x32xf32>
    %cst_39 = arith.constant 1.000000e+00 : f32
    %136 = vector.broadcast %cst_39 : f32 to vector<8x32xf32>
    %137 = arith.subf %136, %128 : vector<8x32xf32>
    %138 = arith.mulf %137, %135 : vector<8x32xf32>
    %139 = arith.mulf %128, %104 : vector<8x32xf32>
    %140 = arith.addf %138, %139 : vector<8x32xf32>
    %141 = vector.broadcast %110 : vector<8x1xf32> to vector<8x32xf32>
    %142 = arith.mulf %141, %140 : vector<8x32xf32>
    %cst_40 = arith.constant 1.000000e+00 : f32
    %143 = vector.broadcast %cst_40 : f32 to vector<8x1xf32>
    %144 = arith.subf %143, %110 : vector<8x1xf32>
    %145 = vector.broadcast %144 : vector<8x1xf32> to vector<8x32xf32>
    %146 = arith.mulf %145, %104 : vector<8x32xf32>
    %147 = arith.addf %142, %146 : vector<8x32xf32>
    %148 = vector.broadcast %110 : vector<8x1xf32> to vector<8x32xf32>
    %149 = arith.mulf %140, %148 : vector<8x32xf32>
    %c1 = arith.constant 1 : index
    %c0_41 = arith.constant 0 : index
    %c0_42 = arith.constant 0 : index
    %150 = vector.load %arg12[%c1, %c0_41, %c0_42] : memref<8x8x32xf32, #tpu.memory_space<vmem>>, vector<1x8x32xf32>
    %151 = vector.shape_cast %150 : vector<1x8x32xf32> to vector<8x32xf32>
    %152 = vector.shape_cast %149 : vector<8x32xf32> to vector<1x8x32xf32>
    tpu.vector_store %arg12[%c1, %c0_41, %c0_42], %152 {strides = array<i32>} : memref<8x8x32xf32, #tpu.memory_space<vmem>>, vector<1x8x32xf32>,
    %153 = arith.addf %67, %149 : vector<8x32xf32>
    %154 = vector.extract_strided_slice %19 {offsets = [8, 0], sizes = [8, 96], strides = [1, 1]} : vector<64x96xf32> to vector<8x96xf32>
    %cst_43 = arith.constant dense<0.000000e+00> : vector<8x96xf32>
    %155 = tpu.matmul %147, %20, %cst_43 {dimension_numbers = #tpu.dot_dimension_numbers<[1], [0], [0], [1], [0, 0, 1, 1], [], []>} : vector<8x32xf32>, vector<32x96xf32>, vector<8x96xf32> -> vector<8x96xf32>
    %156 = vector.extract_strided_slice %154 {offsets = [0, 0], sizes = [8, 32], strides = [1, 1]} : vector<8x96xf32> to vector<8x32xf32>
    %157 = vector.extract_strided_slice %155 {offsets = [0, 0], sizes = [8, 32], strides = [1, 1]} : vector<8x96xf32> to vector<8x32xf32>
    %158 = arith.addf %156, %157 : vector<8x32xf32>
    %159 = arith.negf %158 : vector<8x32xf32>
    %160 = math.exp %159 : vector<8x32xf32>
    %cst_44 = arith.constant 1.000000e+00 : f32
    %161 = vector.broadcast %cst_44 : f32 to vector<8x32xf32>
    %162 = arith.addf %161, %160 : vector<8x32xf32>
    %163 = arith.divf %161, %162 : vector<8x32xf32>
    %164 = vector.extract_strided_slice %154 {offsets = [0, 32], sizes = [8, 32], strides = [1, 1]} : vector<8x96xf32> to vector<8x32xf32>
    %165 = vector.extract_strided_slice %155 {offsets = [0, 32], sizes = [8, 32], strides = [1, 1]} : vector<8x96xf32> to vector<8x32xf32>
    %166 = arith.addf %164, %165 : vector<8x32xf32>
    %167 = arith.negf %166 : vector<8x32xf32>
    %168 = math.exp %167 : vector<8x32xf32>
    %cst_45 = arith.constant 1.000000e+00 : f32
    %169 = vector.broadcast %cst_45 : f32 to vector<8x32xf32>
    %170 = arith.addf %169, %168 : vector<8x32xf32>
    %171 = arith.divf %169, %170 : vector<8x32xf32>
    %172 = vector.extract_strided_slice %154 {offsets = [0, 64], sizes = [8, 32], strides = [1, 1]} : vector<8x96xf32> to vector<8x32xf32>
    %173 = vector.extract_strided_slice %155 {offsets = [0, 64], sizes = [8, 32], strides = [1, 1]} : vector<8x96xf32> to vector<8x32xf32>
    %174 = vector.broadcast %21 : vector<1x32xf32> to vector<8x32xf32>
    %175 = arith.addf %173, %174 : vector<8x32xf32>
    %176 = arith.mulf %163, %175 : vector<8x32xf32>
    %177 = arith.addf %172, %176 : vector<8x32xf32>
    %178 = math.tanh %177 : vector<8x32xf32>
    %cst_46 = arith.constant 1.000000e+00 : f32
    %179 = vector.broadcast %cst_46 : f32 to vector<8x32xf32>
    %180 = arith.subf %179, %171 : vector<8x32xf32>
    %181 = arith.mulf %180, %178 : vector<8x32xf32>
    %182 = arith.mulf %171, %147 : vector<8x32xf32>
    %183 = arith.addf %181, %182 : vector<8x32xf32>
    %184 = vector.broadcast %110 : vector<8x1xf32> to vector<8x32xf32>
    %185 = arith.mulf %184, %183 : vector<8x32xf32>
    %cst_47 = arith.constant 1.000000e+00 : f32
    %186 = vector.broadcast %cst_47 : f32 to vector<8x1xf32>
    %187 = arith.subf %186, %110 : vector<8x1xf32>
    %188 = vector.broadcast %187 : vector<8x1xf32> to vector<8x32xf32>
    %189 = arith.mulf %188, %147 : vector<8x32xf32>
    %190 = arith.addf %185, %189 : vector<8x32xf32>
    %191 = vector.broadcast %110 : vector<8x1xf32> to vector<8x32xf32>
    %192 = arith.mulf %183, %191 : vector<8x32xf32>
    %c1_48 = arith.constant 1 : index
    %c0_49 = arith.constant 0 : index
    %c0_50 = arith.constant 0 : index
    %193 = vector.load %arg13[%c1_48, %c0_49, %c0_50] : memref<8x8x32xf32, #tpu.memory_space<vmem>>, vector<1x8x32xf32>
    %194 = vector.shape_cast %193 : vector<1x8x32xf32> to vector<8x32xf32>
    %195 = vector.shape_cast %192 : vector<8x32xf32> to vector<1x8x32xf32>
    tpu.vector_store %arg13[%c1_48, %c0_49, %c0_50], %195 {strides = array<i32>} : memref<8x8x32xf32, #tpu.memory_space<vmem>>, vector<1x8x32xf32>,
    %196 = vector.extract_strided_slice %0 {offsets = [16, 0], sizes = [8, 1], strides = [1, 1]} : vector<64x1xf32> to vector<8x1xf32>
    %197 = vector.extract_strided_slice %18 {offsets = [16, 0], sizes = [8, 96], strides = [1, 1]} : vector<64x96xf32> to vector<8x96xf32>
    %cst_51 = arith.constant dense<0.000000e+00> : vector<8x96xf32>
    %198 = tpu.matmul %190, %20, %cst_51 {dimension_numbers = #tpu.dot_dimension_numbers<[1], [0], [0], [1], [0, 0, 1, 1], [], []>} : vector<8x32xf32>, vector<32x96xf32>, vector<8x96xf32> -> vector<8x96xf32>
    %199 = vector.extract_strided_slice %197 {offsets = [0, 0], sizes = [8, 32], strides = [1, 1]} : vector<8x96xf32> to vector<8x32xf32>
    %200 = vector.extract_strided_slice %198 {offsets = [0, 0], sizes = [8, 32], strides = [1, 1]} : vector<8x96xf32> to vector<8x32xf32>
    %201 = arith.addf %199, %200 : vector<8x32xf32>
    %202 = arith.negf %201 : vector<8x32xf32>
    %203 = math.exp %202 : vector<8x32xf32>
    %cst_52 = arith.constant 1.000000e+00 : f32
    %204 = vector.broadcast %cst_52 : f32 to vector<8x32xf32>
    %205 = arith.addf %204, %203 : vector<8x32xf32>
    %206 = arith.divf %204, %205 : vector<8x32xf32>
    %207 = vector.extract_strided_slice %197 {offsets = [0, 32], sizes = [8, 32], strides = [1, 1]} : vector<8x96xf32> to vector<8x32xf32>
    %208 = vector.extract_strided_slice %198 {offsets = [0, 32], sizes = [8, 32], strides = [1, 1]} : vector<8x96xf32> to vector<8x32xf32>
    %209 = arith.addf %207, %208 : vector<8x32xf32>
    %210 = arith.negf %209 : vector<8x32xf32>
    %211 = math.exp %210 : vector<8x32xf32>
    %cst_53 = arith.constant 1.000000e+00 : f32
    %212 = vector.broadcast %cst_53 : f32 to vector<8x32xf32>
    %213 = arith.addf %212, %211 : vector<8x32xf32>
    %214 = arith.divf %212, %213 : vector<8x32xf32>
    %215 = vector.extract_strided_slice %197 {offsets = [0, 64], sizes = [8, 32], strides = [1, 1]} : vector<8x96xf32> to vector<8x32xf32>
    %216 = vector.extract_strided_slice %198 {offsets = [0, 64], sizes = [8, 32], strides = [1, 1]} : vector<8x96xf32> to vector<8x32xf32>
    %217 = vector.broadcast %21 : vector<1x32xf32> to vector<8x32xf32>
    %218 = arith.addf %216, %217 : vector<8x32xf32>
    %219 = arith.mulf %206, %218 : vector<8x32xf32>
    %220 = arith.addf %215, %219 : vector<8x32xf32>
    %221 = math.tanh %220 : vector<8x32xf32>
    %cst_54 = arith.constant 1.000000e+00 : f32
    %222 = vector.broadcast %cst_54 : f32 to vector<8x32xf32>
    %223 = arith.subf %222, %214 : vector<8x32xf32>
    %224 = arith.mulf %223, %221 : vector<8x32xf32>
    %225 = arith.mulf %214, %190 : vector<8x32xf32>
    %226 = arith.addf %224, %225 : vector<8x32xf32>
    %227 = vector.broadcast %196 : vector<8x1xf32> to vector<8x32xf32>
    %228 = arith.mulf %227, %226 : vector<8x32xf32>
    %cst_55 = arith.constant 1.000000e+00 : f32
    %229 = vector.broadcast %cst_55 : f32 to vector<8x1xf32>
    %230 = arith.subf %229, %196 : vector<8x1xf32>
    %231 = vector.broadcast %230 : vector<8x1xf32> to vector<8x32xf32>
    %232 = arith.mulf %231, %190 : vector<8x32xf32>
    %233 = arith.addf %228, %232 : vector<8x32xf32>
    %234 = vector.broadcast %196 : vector<8x1xf32> to vector<8x32xf32>
    %235 = arith.mulf %226, %234 : vector<8x32xf32>
    %c2 = arith.constant 2 : index
    %c0_56 = arith.constant 0 : index
    %c0_57 = arith.constant 0 : index
    %236 = vector.load %arg12[%c2, %c0_56, %c0_57] : memref<8x8x32xf32, #tpu.memory_space<vmem>>, vector<1x8x32xf32>
    %237 = vector.shape_cast %236 : vector<1x8x32xf32> to vector<8x32xf32>
    %238 = vector.shape_cast %235 : vector<8x32xf32> to vector<1x8x32xf32>
    tpu.vector_store %arg12[%c2, %c0_56, %c0_57], %238 {strides = array<i32>} : memref<8x8x32xf32, #tpu.memory_space<vmem>>, vector<1x8x32xf32>,
    %239 = arith.addf %153, %235 : vector<8x32xf32>
    %240 = vector.extract_strided_slice %19 {offsets = [16, 0], sizes = [8, 96], strides = [1, 1]} : vector<64x96xf32> to vector<8x96xf32>
    %cst_58 = arith.constant dense<0.000000e+00> : vector<8x96xf32>
    %241 = tpu.matmul %233, %20, %cst_58 {dimension_numbers = #tpu.dot_dimension_numbers<[1], [0], [0], [1], [0, 0, 1, 1], [], []>} : vector<8x32xf32>, vector<32x96xf32>, vector<8x96xf32> -> vector<8x96xf32>
    %242 = vector.extract_strided_slice %240 {offsets = [0, 0], sizes = [8, 32], strides = [1, 1]} : vector<8x96xf32> to vector<8x32xf32>
    %243 = vector.extract_strided_slice %241 {offsets = [0, 0], sizes = [8, 32], strides = [1, 1]} : vector<8x96xf32> to vector<8x32xf32>
    %244 = arith.addf %242, %243 : vector<8x32xf32>
    %245 = arith.negf %244 : vector<8x32xf32>
    %246 = math.exp %245 : vector<8x32xf32>
    %cst_59 = arith.constant 1.000000e+00 : f32
    %247 = vector.broadcast %cst_59 : f32 to vector<8x32xf32>
    %248 = arith.addf %247, %246 : vector<8x32xf32>
    %249 = arith.divf %247, %248 : vector<8x32xf32>
    %250 = vector.extract_strided_slice %240 {offsets = [0, 32], sizes = [8, 32], strides = [1, 1]} : vector<8x96xf32> to vector<8x32xf32>
    %251 = vector.extract_strided_slice %241 {offsets = [0, 32], sizes = [8, 32], strides = [1, 1]} : vector<8x96xf32> to vector<8x32xf32>
    %252 = arith.addf %250, %251 : vector<8x32xf32>
    %253 = arith.negf %252 : vector<8x32xf32>
    %254 = math.exp %253 : vector<8x32xf32>
    %cst_60 = arith.constant 1.000000e+00 : f32
    %255 = vector.broadcast %cst_60 : f32 to vector<8x32xf32>
    %256 = arith.addf %255, %254 : vector<8x32xf32>
    %257 = arith.divf %255, %256 : vector<8x32xf32>
    %258 = vector.extract_strided_slice %240 {offsets = [0, 64], sizes = [8, 32], strides = [1, 1]} : vector<8x96xf32> to vector<8x32xf32>
    %259 = vector.extract_strided_slice %241 {offsets = [0, 64], sizes = [8, 32], strides = [1, 1]} : vector<8x96xf32> to vector<8x32xf32>
    %260 = vector.broadcast %21 : vector<1x32xf32> to vector<8x32xf32>
    %261 = arith.addf %259, %260 : vector<8x32xf32>
    %262 = arith.mulf %249, %261 : vector<8x32xf32>
    %263 = arith.addf %258, %262 : vector<8x32xf32>
    %264 = math.tanh %263 : vector<8x32xf32>
    %cst_61 = arith.constant 1.000000e+00 : f32
    %265 = vector.broadcast %cst_61 : f32 to vector<8x32xf32>
    %266 = arith.subf %265, %257 : vector<8x32xf32>
    %267 = arith.mulf %266, %264 : vector<8x32xf32>
    %268 = arith.mulf %257, %233 : vector<8x32xf32>
    %269 = arith.addf %267, %268 : vector<8x32xf32>
    %270 = vector.broadcast %196 : vector<8x1xf32> to vector<8x32xf32>
    %271 = arith.mulf %270, %269 : vector<8x32xf32>
    %cst_62 = arith.constant 1.000000e+00 : f32
    %272 = vector.broadcast %cst_62 : f32 to vector<8x1xf32>
    %273 = arith.subf %272, %196 : vector<8x1xf32>
    %274 = vector.broadcast %273 : vector<8x1xf32> to vector<8x32xf32>
    %275 = arith.mulf %274, %233 : vector<8x32xf32>
    %276 = arith.addf %271, %275 : vector<8x32xf32>
    %277 = vector.broadcast %196 : vector<8x1xf32> to vector<8x32xf32>
    %278 = arith.mulf %269, %277 : vector<8x32xf32>
    %c2_63 = arith.constant 2 : index
    %c0_64 = arith.constant 0 : index
    %c0_65 = arith.constant 0 : index
    %279 = vector.load %arg13[%c2_63, %c0_64, %c0_65] : memref<8x8x32xf32, #tpu.memory_space<vmem>>, vector<1x8x32xf32>
    %280 = vector.shape_cast %279 : vector<1x8x32xf32> to vector<8x32xf32>
    %281 = vector.shape_cast %278 : vector<8x32xf32> to vector<1x8x32xf32>
    tpu.vector_store %arg13[%c2_63, %c0_64, %c0_65], %281 {strides = array<i32>} : memref<8x8x32xf32, #tpu.memory_space<vmem>>, vector<1x8x32xf32>,
    %282 = vector.extract_strided_slice %0 {offsets = [24, 0], sizes = [8, 1], strides = [1, 1]} : vector<64x1xf32> to vector<8x1xf32>
    %283 = vector.extract_strided_slice %18 {offsets = [24, 0], sizes = [8, 96], strides = [1, 1]} : vector<64x96xf32> to vector<8x96xf32>
    %cst_66 = arith.constant dense<0.000000e+00> : vector<8x96xf32>
    %284 = tpu.matmul %276, %20, %cst_66 {dimension_numbers = #tpu.dot_dimension_numbers<[1], [0], [0], [1], [0, 0, 1, 1], [], []>} : vector<8x32xf32>, vector<32x96xf32>, vector<8x96xf32> -> vector<8x96xf32>
    %285 = vector.extract_strided_slice %283 {offsets = [0, 0], sizes = [8, 32], strides = [1, 1]} : vector<8x96xf32> to vector<8x32xf32>
    %286 = vector.extract_strided_slice %284 {offsets = [0, 0], sizes = [8, 32], strides = [1, 1]} : vector<8x96xf32> to vector<8x32xf32>
    %287 = arith.addf %285, %286 : vector<8x32xf32>
    %288 = arith.negf %287 : vector<8x32xf32>
    %289 = math.exp %288 : vector<8x32xf32>
    %cst_67 = arith.constant 1.000000e+00 : f32
    %290 = vector.broadcast %cst_67 : f32 to vector<8x32xf32>
    %291 = arith.addf %290, %289 : vector<8x32xf32>
    %292 = arith.divf %290, %291 : vector<8x32xf32>
    %293 = vector.extract_strided_slice %283 {offsets = [0, 32], sizes = [8, 32], strides = [1, 1]} : vector<8x96xf32> to vector<8x32xf32>
    %294 = vector.extract_strided_slice %284 {offsets = [0, 32], sizes = [8, 32], strides = [1, 1]} : vector<8x96xf32> to vector<8x32xf32>
    %295 = arith.addf %293, %294 : vector<8x32xf32>
    %296 = arith.negf %295 : vector<8x32xf32>
    %297 = math.exp %296 : vector<8x32xf32>
    %cst_68 = arith.constant 1.000000e+00 : f32
    %298 = vector.broadcast %cst_68 : f32 to vector<8x32xf32>
    %299 = arith.addf %298, %297 : vector<8x32xf32>
    %300 = arith.divf %298, %299 : vector<8x32xf32>
    %301 = vector.extract_strided_slice %283 {offsets = [0, 64], sizes = [8, 32], strides = [1, 1]} : vector<8x96xf32> to vector<8x32xf32>
    %302 = vector.extract_strided_slice %284 {offsets = [0, 64], sizes = [8, 32], strides = [1, 1]} : vector<8x96xf32> to vector<8x32xf32>
    %303 = vector.broadcast %21 : vector<1x32xf32> to vector<8x32xf32>
    %304 = arith.addf %302, %303 : vector<8x32xf32>
    %305 = arith.mulf %292, %304 : vector<8x32xf32>
    %306 = arith.addf %301, %305 : vector<8x32xf32>
    %307 = math.tanh %306 : vector<8x32xf32>
    %cst_69 = arith.constant 1.000000e+00 : f32
    %308 = vector.broadcast %cst_69 : f32 to vector<8x32xf32>
    %309 = arith.subf %308, %300 : vector<8x32xf32>
    %310 = arith.mulf %309, %307 : vector<8x32xf32>
    %311 = arith.mulf %300, %276 : vector<8x32xf32>
    %312 = arith.addf %310, %311 : vector<8x32xf32>
    %313 = vector.broadcast %282 : vector<8x1xf32> to vector<8x32xf32>
    %314 = arith.mulf %313, %312 : vector<8x32xf32>
    %cst_70 = arith.constant 1.000000e+00 : f32
    %315 = vector.broadcast %cst_70 : f32 to vector<8x1xf32>
    %316 = arith.subf %315, %282 : vector<8x1xf32>
    %317 = vector.broadcast %316 : vector<8x1xf32> to vector<8x32xf32>
    %318 = arith.mulf %317, %276 : vector<8x32xf32>
    %319 = arith.addf %314, %318 : vector<8x32xf32>
    %320 = vector.broadcast %282 : vector<8x1xf32> to vector<8x32xf32>
    %321 = arith.mulf %312, %320 : vector<8x32xf32>
    %c3 = arith.constant 3 : index
    %c0_71 = arith.constant 0 : index
    %c0_72 = arith.constant 0 : index
    %322 = vector.load %arg12[%c3, %c0_71, %c0_72] : memref<8x8x32xf32, #tpu.memory_space<vmem>>, vector<1x8x32xf32>
    %323 = vector.shape_cast %322 : vector<1x8x32xf32> to vector<8x32xf32>
    %324 = vector.shape_cast %321 : vector<8x32xf32> to vector<1x8x32xf32>
    tpu.vector_store %arg12[%c3, %c0_71, %c0_72], %324 {strides = array<i32>} : memref<8x8x32xf32, #tpu.memory_space<vmem>>, vector<1x8x32xf32>,
    %325 = arith.addf %239, %321 : vector<8x32xf32>
    %326 = vector.extract_strided_slice %19 {offsets = [24, 0], sizes = [8, 96], strides = [1, 1]} : vector<64x96xf32> to vector<8x96xf32>
    %cst_73 = arith.constant dense<0.000000e+00> : vector<8x96xf32>
    %327 = tpu.matmul %319, %20, %cst_73 {dimension_numbers = #tpu.dot_dimension_numbers<[1], [0], [0], [1], [0, 0, 1, 1], [], []>} : vector<8x32xf32>, vector<32x96xf32>, vector<8x96xf32> -> vector<8x96xf32>
    %328 = vector.extract_strided_slice %326 {offsets = [0, 0], sizes = [8, 32], strides = [1, 1]} : vector<8x96xf32> to vector<8x32xf32>
    %329 = vector.extract_strided_slice %327 {offsets = [0, 0], sizes = [8, 32], strides = [1, 1]} : vector<8x96xf32> to vector<8x32xf32>
    %330 = arith.addf %328, %329 : vector<8x32xf32>
    %331 = arith.negf %330 : vector<8x32xf32>
    %332 = math.exp %331 : vector<8x32xf32>
    %cst_74 = arith.constant 1.000000e+00 : f32
    %333 = vector.broadcast %cst_74 : f32 to vector<8x32xf32>
    %334 = arith.addf %333, %332 : vector<8x32xf32>
    %335 = arith.divf %333, %334 : vector<8x32xf32>
    %336 = vector.extract_strided_slice %326 {offsets = [0, 32], sizes = [8, 32], strides = [1, 1]} : vector<8x96xf32> to vector<8x32xf32>
    %337 = vector.extract_strided_slice %327 {offsets = [0, 32], sizes = [8, 32], strides = [1, 1]} : vector<8x96xf32> to vector<8x32xf32>
    %338 = arith.addf %336, %337 : vector<8x32xf32>
    %339 = arith.negf %338 : vector<8x32xf32>
    %340 = math.exp %339 : vector<8x32xf32>
    %cst_75 = arith.constant 1.000000e+00 : f32
    %341 = vector.broadcast %cst_75 : f32 to vector<8x32xf32>
    %342 = arith.addf %341, %340 : vector<8x32xf32>
    %343 = arith.divf %341, %342 : vector<8x32xf32>
    %344 = vector.extract_strided_slice %326 {offsets = [0, 64], sizes = [8, 32], strides = [1, 1]} : vector<8x96xf32> to vector<8x32xf32>
    %345 = vector.extract_strided_slice %327 {offsets = [0, 64], sizes = [8, 32], strides = [1, 1]} : vector<8x96xf32> to vector<8x32xf32>
    %346 = vector.broadcast %21 : vector<1x32xf32> to vector<8x32xf32>
    %347 = arith.addf %345, %346 : vector<8x32xf32>
    %348 = arith.mulf %335, %347 : vector<8x32xf32>
    %349 = arith.addf %344, %348 : vector<8x32xf32>
    %350 = math.tanh %349 : vector<8x32xf32>
    %cst_76 = arith.constant 1.000000e+00 : f32
    %351 = vector.broadcast %cst_76 : f32 to vector<8x32xf32>
    %352 = arith.subf %351, %343 : vector<8x32xf32>
    %353 = arith.mulf %352, %350 : vector<8x32xf32>
    %354 = arith.mulf %343, %319 : vector<8x32xf32>
    %355 = arith.addf %353, %354 : vector<8x32xf32>
    %356 = vector.broadcast %282 : vector<8x1xf32> to vector<8x32xf32>
    %357 = arith.mulf %356, %355 : vector<8x32xf32>
    %cst_77 = arith.constant 1.000000e+00 : f32
    %358 = vector.broadcast %cst_77 : f32 to vector<8x1xf32>
    %359 = arith.subf %358, %282 : vector<8x1xf32>
    %360 = vector.broadcast %359 : vector<8x1xf32> to vector<8x32xf32>
    %361 = arith.mulf %360, %319 : vector<8x32xf32>
    %362 = arith.addf %357, %361 : vector<8x32xf32>
    %363 = vector.broadcast %282 : vector<8x1xf32> to vector<8x32xf32>
    %364 = arith.mulf %355, %363 : vector<8x32xf32>
    %c3_78 = arith.constant 3 : index
    %c0_79 = arith.constant 0 : index
    %c0_80 = arith.constant 0 : index
    %365 = vector.load %arg13[%c3_78, %c0_79, %c0_80] : memref<8x8x32xf32, #tpu.memory_space<vmem>>, vector<1x8x32xf32>
    %366 = vector.shape_cast %365 : vector<1x8x32xf32> to vector<8x32xf32>
    %367 = vector.shape_cast %364 : vector<8x32xf32> to vector<1x8x32xf32>
    tpu.vector_store %arg13[%c3_78, %c0_79, %c0_80], %367 {strides = array<i32>} : memref<8x8x32xf32, #tpu.memory_space<vmem>>, vector<1x8x32xf32>,
    %368 = vector.extract_strided_slice %0 {offsets = [32, 0], sizes = [8, 1], strides = [1, 1]} : vector<64x1xf32> to vector<8x1xf32>
    %369 = vector.extract_strided_slice %18 {offsets = [32, 0], sizes = [8, 96], strides = [1, 1]} : vector<64x96xf32> to vector<8x96xf32>
    %cst_81 = arith.constant dense<0.000000e+00> : vector<8x96xf32>
    %370 = tpu.matmul %362, %20, %cst_81 {dimension_numbers = #tpu.dot_dimension_numbers<[1], [0], [0], [1], [0, 0, 1, 1], [], []>} : vector<8x32xf32>, vector<32x96xf32>, vector<8x96xf32> -> vector<8x96xf32>
    %371 = vector.extract_strided_slice %369 {offsets = [0, 0], sizes = [8, 32], strides = [1, 1]} : vector<8x96xf32> to vector<8x32xf32>
    %372 = vector.extract_strided_slice %370 {offsets = [0, 0], sizes = [8, 32], strides = [1, 1]} : vector<8x96xf32> to vector<8x32xf32>
    %373 = arith.addf %371, %372 : vector<8x32xf32>
    %374 = arith.negf %373 : vector<8x32xf32>
    %375 = math.exp %374 : vector<8x32xf32>
    %cst_82 = arith.constant 1.000000e+00 : f32
    %376 = vector.broadcast %cst_82 : f32 to vector<8x32xf32>
    %377 = arith.addf %376, %375 : vector<8x32xf32>
    %378 = arith.divf %376, %377 : vector<8x32xf32>
    %379 = vector.extract_strided_slice %369 {offsets = [0, 32], sizes = [8, 32], strides = [1, 1]} : vector<8x96xf32> to vector<8x32xf32>
    %380 = vector.extract_strided_slice %370 {offsets = [0, 32], sizes = [8, 32], strides = [1, 1]} : vector<8x96xf32> to vector<8x32xf32>
    %381 = arith.addf %379, %380 : vector<8x32xf32>
    %382 = arith.negf %381 : vector<8x32xf32>
    %383 = math.exp %382 : vector<8x32xf32>
    %cst_83 = arith.constant 1.000000e+00 : f32
    %384 = vector.broadcast %cst_83 : f32 to vector<8x32xf32>
    %385 = arith.addf %384, %383 : vector<8x32xf32>
    %386 = arith.divf %384, %385 : vector<8x32xf32>
    %387 = vector.extract_strided_slice %369 {offsets = [0, 64], sizes = [8, 32], strides = [1, 1]} : vector<8x96xf32> to vector<8x32xf32>
    %388 = vector.extract_strided_slice %370 {offsets = [0, 64], sizes = [8, 32], strides = [1, 1]} : vector<8x96xf32> to vector<8x32xf32>
    %389 = vector.broadcast %21 : vector<1x32xf32> to vector<8x32xf32>
    %390 = arith.addf %388, %389 : vector<8x32xf32>
    %391 = arith.mulf %378, %390 : vector<8x32xf32>
    %392 = arith.addf %387, %391 : vector<8x32xf32>
    %393 = math.tanh %392 : vector<8x32xf32>
    %cst_84 = arith.constant 1.000000e+00 : f32
    %394 = vector.broadcast %cst_84 : f32 to vector<8x32xf32>
    %395 = arith.subf %394, %386 : vector<8x32xf32>
    %396 = arith.mulf %395, %393 : vector<8x32xf32>
    %397 = arith.mulf %386, %362 : vector<8x32xf32>
    %398 = arith.addf %396, %397 : vector<8x32xf32>
    %399 = vector.broadcast %368 : vector<8x1xf32> to vector<8x32xf32>
    %400 = arith.mulf %399, %398 : vector<8x32xf32>
    %cst_85 = arith.constant 1.000000e+00 : f32
    %401 = vector.broadcast %cst_85 : f32 to vector<8x1xf32>
    %402 = arith.subf %401, %368 : vector<8x1xf32>
    %403 = vector.broadcast %402 : vector<8x1xf32> to vector<8x32xf32>
    %404 = arith.mulf %403, %362 : vector<8x32xf32>
    %405 = arith.addf %400, %404 : vector<8x32xf32>
    %406 = vector.broadcast %368 : vector<8x1xf32> to vector<8x32xf32>
    %407 = arith.mulf %398, %406 : vector<8x32xf32>
    %c4 = arith.constant 4 : index
    %c0_86 = arith.constant 0 : index
    %c0_87 = arith.constant 0 : index
    %408 = vector.load %arg12[%c4, %c0_86, %c0_87] : memref<8x8x32xf32, #tpu.memory_space<vmem>>, vector<1x8x32xf32>
    %409 = vector.shape_cast %408 : vector<1x8x32xf32> to vector<8x32xf32>
    %410 = vector.shape_cast %407 : vector<8x32xf32> to vector<1x8x32xf32>
    tpu.vector_store %arg12[%c4, %c0_86, %c0_87], %410 {strides = array<i32>} : memref<8x8x32xf32, #tpu.memory_space<vmem>>, vector<1x8x32xf32>,
    %411 = arith.addf %325, %407 : vector<8x32xf32>
    %412 = vector.extract_strided_slice %19 {offsets = [32, 0], sizes = [8, 96], strides = [1, 1]} : vector<64x96xf32> to vector<8x96xf32>
    %cst_88 = arith.constant dense<0.000000e+00> : vector<8x96xf32>
    %413 = tpu.matmul %405, %20, %cst_88 {dimension_numbers = #tpu.dot_dimension_numbers<[1], [0], [0], [1], [0, 0, 1, 1], [], []>} : vector<8x32xf32>, vector<32x96xf32>, vector<8x96xf32> -> vector<8x96xf32>
    %414 = vector.extract_strided_slice %412 {offsets = [0, 0], sizes = [8, 32], strides = [1, 1]} : vector<8x96xf32> to vector<8x32xf32>
    %415 = vector.extract_strided_slice %413 {offsets = [0, 0], sizes = [8, 32], strides = [1, 1]} : vector<8x96xf32> to vector<8x32xf32>
    %416 = arith.addf %414, %415 : vector<8x32xf32>
    %417 = arith.negf %416 : vector<8x32xf32>
    %418 = math.exp %417 : vector<8x32xf32>
    %cst_89 = arith.constant 1.000000e+00 : f32
    %419 = vector.broadcast %cst_89 : f32 to vector<8x32xf32>
    %420 = arith.addf %419, %418 : vector<8x32xf32>
    %421 = arith.divf %419, %420 : vector<8x32xf32>
    %422 = vector.extract_strided_slice %412 {offsets = [0, 32], sizes = [8, 32], strides = [1, 1]} : vector<8x96xf32> to vector<8x32xf32>
    %423 = vector.extract_strided_slice %413 {offsets = [0, 32], sizes = [8, 32], strides = [1, 1]} : vector<8x96xf32> to vector<8x32xf32>
    %424 = arith.addf %422, %423 : vector<8x32xf32>
    %425 = arith.negf %424 : vector<8x32xf32>
    %426 = math.exp %425 : vector<8x32xf32>
    %cst_90 = arith.constant 1.000000e+00 : f32
    %427 = vector.broadcast %cst_90 : f32 to vector<8x32xf32>
    %428 = arith.addf %427, %426 : vector<8x32xf32>
    %429 = arith.divf %427, %428 : vector<8x32xf32>
    %430 = vector.extract_strided_slice %412 {offsets = [0, 64], sizes = [8, 32], strides = [1, 1]} : vector<8x96xf32> to vector<8x32xf32>
    %431 = vector.extract_strided_slice %413 {offsets = [0, 64], sizes = [8, 32], strides = [1, 1]} : vector<8x96xf32> to vector<8x32xf32>
    %432 = vector.broadcast %21 : vector<1x32xf32> to vector<8x32xf32>
    %433 = arith.addf %431, %432 : vector<8x32xf32>
    %434 = arith.mulf %421, %433 : vector<8x32xf32>
    %435 = arith.addf %430, %434 : vector<8x32xf32>
    %436 = math.tanh %435 : vector<8x32xf32>
    %cst_91 = arith.constant 1.000000e+00 : f32
    %437 = vector.broadcast %cst_91 : f32 to vector<8x32xf32>
    %438 = arith.subf %437, %429 : vector<8x32xf32>
    %439 = arith.mulf %438, %436 : vector<8x32xf32>
    %440 = arith.mulf %429, %405 : vector<8x32xf32>
    %441 = arith.addf %439, %440 : vector<8x32xf32>
    %442 = vector.broadcast %368 : vector<8x1xf32> to vector<8x32xf32>
    %443 = arith.mulf %442, %441 : vector<8x32xf32>
    %cst_92 = arith.constant 1.000000e+00 : f32
    %444 = vector.broadcast %cst_92 : f32 to vector<8x1xf32>
    %445 = arith.subf %444, %368 : vector<8x1xf32>
    %446 = vector.broadcast %445 : vector<8x1xf32> to vector<8x32xf32>
    %447 = arith.mulf %446, %405 : vector<8x32xf32>
    %448 = arith.addf %443, %447 : vector<8x32xf32>
    %449 = vector.broadcast %368 : vector<8x1xf32> to vector<8x32xf32>
    %450 = arith.mulf %441, %449 : vector<8x32xf32>
    %c4_93 = arith.constant 4 : index
    %c0_94 = arith.constant 0 : index
    %c0_95 = arith.constant 0 : index
    %451 = vector.load %arg13[%c4_93, %c0_94, %c0_95] : memref<8x8x32xf32, #tpu.memory_space<vmem>>, vector<1x8x32xf32>
    %452 = vector.shape_cast %451 : vector<1x8x32xf32> to vector<8x32xf32>
    %453 = vector.shape_cast %450 : vector<8x32xf32> to vector<1x8x32xf32>
    tpu.vector_store %arg13[%c4_93, %c0_94, %c0_95], %453 {strides = array<i32>} : memref<8x8x32xf32, #tpu.memory_space<vmem>>, vector<1x8x32xf32>,
    %454 = vector.extract_strided_slice %0 {offsets = [40, 0], sizes = [8, 1], strides = [1, 1]} : vector<64x1xf32> to vector<8x1xf32>
    %455 = vector.extract_strided_slice %18 {offsets = [40, 0], sizes = [8, 96], strides = [1, 1]} : vector<64x96xf32> to vector<8x96xf32>
    %cst_96 = arith.constant dense<0.000000e+00> : vector<8x96xf32>
    %456 = tpu.matmul %448, %20, %cst_96 {dimension_numbers = #tpu.dot_dimension_numbers<[1], [0], [0], [1], [0, 0, 1, 1], [], []>} : vector<8x32xf32>, vector<32x96xf32>, vector<8x96xf32> -> vector<8x96xf32>
    %457 = vector.extract_strided_slice %455 {offsets = [0, 0], sizes = [8, 32], strides = [1, 1]} : vector<8x96xf32> to vector<8x32xf32>
    %458 = vector.extract_strided_slice %456 {offsets = [0, 0], sizes = [8, 32], strides = [1, 1]} : vector<8x96xf32> to vector<8x32xf32>
    %459 = arith.addf %457, %458 : vector<8x32xf32>
    %460 = arith.negf %459 : vector<8x32xf32>
    %461 = math.exp %460 : vector<8x32xf32>
    %cst_97 = arith.constant 1.000000e+00 : f32
    %462 = vector.broadcast %cst_97 : f32 to vector<8x32xf32>
    %463 = arith.addf %462, %461 : vector<8x32xf32>
    %464 = arith.divf %462, %463 : vector<8x32xf32>
    %465 = vector.extract_strided_slice %455 {offsets = [0, 32], sizes = [8, 32], strides = [1, 1]} : vector<8x96xf32> to vector<8x32xf32>
    %466 = vector.extract_strided_slice %456 {offsets = [0, 32], sizes = [8, 32], strides = [1, 1]} : vector<8x96xf32> to vector<8x32xf32>
    %467 = arith.addf %465, %466 : vector<8x32xf32>
    %468 = arith.negf %467 : vector<8x32xf32>
    %469 = math.exp %468 : vector<8x32xf32>
    %cst_98 = arith.constant 1.000000e+00 : f32
    %470 = vector.broadcast %cst_98 : f32 to vector<8x32xf32>
    %471 = arith.addf %470, %469 : vector<8x32xf32>
    %472 = arith.divf %470, %471 : vector<8x32xf32>
    %473 = vector.extract_strided_slice %455 {offsets = [0, 64], sizes = [8, 32], strides = [1, 1]} : vector<8x96xf32> to vector<8x32xf32>
    %474 = vector.extract_strided_slice %456 {offsets = [0, 64], sizes = [8, 32], strides = [1, 1]} : vector<8x96xf32> to vector<8x32xf32>
    %475 = vector.broadcast %21 : vector<1x32xf32> to vector<8x32xf32>
    %476 = arith.addf %474, %475 : vector<8x32xf32>
    %477 = arith.mulf %464, %476 : vector<8x32xf32>
    %478 = arith.addf %473, %477 : vector<8x32xf32>
    %479 = math.tanh %478 : vector<8x32xf32>
    %cst_99 = arith.constant 1.000000e+00 : f32
    %480 = vector.broadcast %cst_99 : f32 to vector<8x32xf32>
    %481 = arith.subf %480, %472 : vector<8x32xf32>
    %482 = arith.mulf %481, %479 : vector<8x32xf32>
    %483 = arith.mulf %472, %448 : vector<8x32xf32>
    %484 = arith.addf %482, %483 : vector<8x32xf32>
    %485 = vector.broadcast %454 : vector<8x1xf32> to vector<8x32xf32>
    %486 = arith.mulf %485, %484 : vector<8x32xf32>
    %cst_100 = arith.constant 1.000000e+00 : f32
    %487 = vector.broadcast %cst_100 : f32 to vector<8x1xf32>
    %488 = arith.subf %487, %454 : vector<8x1xf32>
    %489 = vector.broadcast %488 : vector<8x1xf32> to vector<8x32xf32>
    %490 = arith.mulf %489, %448 : vector<8x32xf32>
    %491 = arith.addf %486, %490 : vector<8x32xf32>
    %492 = vector.broadcast %454 : vector<8x1xf32> to vector<8x32xf32>
    %493 = arith.mulf %484, %492 : vector<8x32xf32>
    %c5 = arith.constant 5 : index
    %c0_101 = arith.constant 0 : index
    %c0_102 = arith.constant 0 : index
    %494 = vector.load %arg12[%c5, %c0_101, %c0_102] : memref<8x8x32xf32, #tpu.memory_space<vmem>>, vector<1x8x32xf32>
    %495 = vector.shape_cast %494 : vector<1x8x32xf32> to vector<8x32xf32>
    %496 = vector.shape_cast %493 : vector<8x32xf32> to vector<1x8x32xf32>
    tpu.vector_store %arg12[%c5, %c0_101, %c0_102], %496 {strides = array<i32>} : memref<8x8x32xf32, #tpu.memory_space<vmem>>, vector<1x8x32xf32>,
    %497 = arith.addf %411, %493 : vector<8x32xf32>
    %498 = vector.extract_strided_slice %19 {offsets = [40, 0], sizes = [8, 96], strides = [1, 1]} : vector<64x96xf32> to vector<8x96xf32>
    %cst_103 = arith.constant dense<0.000000e+00> : vector<8x96xf32>
    %499 = tpu.matmul %491, %20, %cst_103 {dimension_numbers = #tpu.dot_dimension_numbers<[1], [0], [0], [1], [0, 0, 1, 1], [], []>} : vector<8x32xf32>, vector<32x96xf32>, vector<8x96xf32> -> vector<8x96xf32>
    %500 = vector.extract_strided_slice %498 {offsets = [0, 0], sizes = [8, 32], strides = [1, 1]} : vector<8x96xf32> to vector<8x32xf32>
    %501 = vector.extract_strided_slice %499 {offsets = [0, 0], sizes = [8, 32], strides = [1, 1]} : vector<8x96xf32> to vector<8x32xf32>
    %502 = arith.addf %500, %501 : vector<8x32xf32>
    %503 = arith.negf %502 : vector<8x32xf32>
    %504 = math.exp %503 : vector<8x32xf32>
    %cst_104 = arith.constant 1.000000e+00 : f32
    %505 = vector.broadcast %cst_104 : f32 to vector<8x32xf32>
    %506 = arith.addf %505, %504 : vector<8x32xf32>
    %507 = arith.divf %505, %506 : vector<8x32xf32>
    %508 = vector.extract_strided_slice %498 {offsets = [0, 32], sizes = [8, 32], strides = [1, 1]} : vector<8x96xf32> to vector<8x32xf32>
    %509 = vector.extract_strided_slice %499 {offsets = [0, 32], sizes = [8, 32], strides = [1, 1]} : vector<8x96xf32> to vector<8x32xf32>
    %510 = arith.addf %508, %509 : vector<8x32xf32>
    %511 = arith.negf %510 : vector<8x32xf32>
    %512 = math.exp %511 : vector<8x32xf32>
    %cst_105 = arith.constant 1.000000e+00 : f32
    %513 = vector.broadcast %cst_105 : f32 to vector<8x32xf32>
    %514 = arith.addf %513, %512 : vector<8x32xf32>
    %515 = arith.divf %513, %514 : vector<8x32xf32>
    %516 = vector.extract_strided_slice %498 {offsets = [0, 64], sizes = [8, 32], strides = [1, 1]} : vector<8x96xf32> to vector<8x32xf32>
    %517 = vector.extract_strided_slice %499 {offsets = [0, 64], sizes = [8, 32], strides = [1, 1]} : vector<8x96xf32> to vector<8x32xf32>
    %518 = vector.broadcast %21 : vector<1x32xf32> to vector<8x32xf32>
    %519 = arith.addf %517, %518 : vector<8x32xf32>
    %520 = arith.mulf %507, %519 : vector<8x32xf32>
    %521 = arith.addf %516, %520 : vector<8x32xf32>
    %522 = math.tanh %521 : vector<8x32xf32>
    %cst_106 = arith.constant 1.000000e+00 : f32
    %523 = vector.broadcast %cst_106 : f32 to vector<8x32xf32>
    %524 = arith.subf %523, %515 : vector<8x32xf32>
    %525 = arith.mulf %524, %522 : vector<8x32xf32>
    %526 = arith.mulf %515, %491 : vector<8x32xf32>
    %527 = arith.addf %525, %526 : vector<8x32xf32>
    %528 = vector.broadcast %454 : vector<8x1xf32> to vector<8x32xf32>
    %529 = arith.mulf %528, %527 : vector<8x32xf32>
    %cst_107 = arith.constant 1.000000e+00 : f32
    %530 = vector.broadcast %cst_107 : f32 to vector<8x1xf32>
    %531 = arith.subf %530, %454 : vector<8x1xf32>
    %532 = vector.broadcast %531 : vector<8x1xf32> to vector<8x32xf32>
    %533 = arith.mulf %532, %491 : vector<8x32xf32>
    %534 = arith.addf %529, %533 : vector<8x32xf32>
    %535 = vector.broadcast %454 : vector<8x1xf32> to vector<8x32xf32>
    %536 = arith.mulf %527, %535 : vector<8x32xf32>
    %c5_108 = arith.constant 5 : index
    %c0_109 = arith.constant 0 : index
    %c0_110 = arith.constant 0 : index
    %537 = vector.load %arg13[%c5_108, %c0_109, %c0_110] : memref<8x8x32xf32, #tpu.memory_space<vmem>>, vector<1x8x32xf32>
    %538 = vector.shape_cast %537 : vector<1x8x32xf32> to vector<8x32xf32>
    %539 = vector.shape_cast %536 : vector<8x32xf32> to vector<1x8x32xf32>
    tpu.vector_store %arg13[%c5_108, %c0_109, %c0_110], %539 {strides = array<i32>} : memref<8x8x32xf32, #tpu.memory_space<vmem>>, vector<1x8x32xf32>,
    %540 = vector.extract_strided_slice %0 {offsets = [48, 0], sizes = [8, 1], strides = [1, 1]} : vector<64x1xf32> to vector<8x1xf32>
    %541 = vector.extract_strided_slice %18 {offsets = [48, 0], sizes = [8, 96], strides = [1, 1]} : vector<64x96xf32> to vector<8x96xf32>
    %cst_111 = arith.constant dense<0.000000e+00> : vector<8x96xf32>
    %542 = tpu.matmul %534, %20, %cst_111 {dimension_numbers = #tpu.dot_dimension_numbers<[1], [0], [0], [1], [0, 0, 1, 1], [], []>} : vector<8x32xf32>, vector<32x96xf32>, vector<8x96xf32> -> vector<8x96xf32>
    %543 = vector.extract_strided_slice %541 {offsets = [0, 0], sizes = [8, 32], strides = [1, 1]} : vector<8x96xf32> to vector<8x32xf32>
    %544 = vector.extract_strided_slice %542 {offsets = [0, 0], sizes = [8, 32], strides = [1, 1]} : vector<8x96xf32> to vector<8x32xf32>
    %545 = arith.addf %543, %544 : vector<8x32xf32>
    %546 = arith.negf %545 : vector<8x32xf32>
    %547 = math.exp %546 : vector<8x32xf32>
    %cst_112 = arith.constant 1.000000e+00 : f32
    %548 = vector.broadcast %cst_112 : f32 to vector<8x32xf32>
    %549 = arith.addf %548, %547 : vector<8x32xf32>
    %550 = arith.divf %548, %549 : vector<8x32xf32>
    %551 = vector.extract_strided_slice %541 {offsets = [0, 32], sizes = [8, 32], strides = [1, 1]} : vector<8x96xf32> to vector<8x32xf32>
    %552 = vector.extract_strided_slice %542 {offsets = [0, 32], sizes = [8, 32], strides = [1, 1]} : vector<8x96xf32> to vector<8x32xf32>
    %553 = arith.addf %551, %552 : vector<8x32xf32>
    %554 = arith.negf %553 : vector<8x32xf32>
    %555 = math.exp %554 : vector<8x32xf32>
    %cst_113 = arith.constant 1.000000e+00 : f32
    %556 = vector.broadcast %cst_113 : f32 to vector<8x32xf32>
    %557 = arith.addf %556, %555 : vector<8x32xf32>
    %558 = arith.divf %556, %557 : vector<8x32xf32>
    %559 = vector.extract_strided_slice %541 {offsets = [0, 64], sizes = [8, 32], strides = [1, 1]} : vector<8x96xf32> to vector<8x32xf32>
    %560 = vector.extract_strided_slice %542 {offsets = [0, 64], sizes = [8, 32], strides = [1, 1]} : vector<8x96xf32> to vector<8x32xf32>
    %561 = vector.broadcast %21 : vector<1x32xf32> to vector<8x32xf32>
    %562 = arith.addf %560, %561 : vector<8x32xf32>
    %563 = arith.mulf %550, %562 : vector<8x32xf32>
    %564 = arith.addf %559, %563 : vector<8x32xf32>
    %565 = math.tanh %564 : vector<8x32xf32>
    %cst_114 = arith.constant 1.000000e+00 : f32
    %566 = vector.broadcast %cst_114 : f32 to vector<8x32xf32>
    %567 = arith.subf %566, %558 : vector<8x32xf32>
    %568 = arith.mulf %567, %565 : vector<8x32xf32>
    %569 = arith.mulf %558, %534 : vector<8x32xf32>
    %570 = arith.addf %568, %569 : vector<8x32xf32>
    %571 = vector.broadcast %540 : vector<8x1xf32> to vector<8x32xf32>
    %572 = arith.mulf %571, %570 : vector<8x32xf32>
    %cst_115 = arith.constant 1.000000e+00 : f32
    %573 = vector.broadcast %cst_115 : f32 to vector<8x1xf32>
    %574 = arith.subf %573, %540 : vector<8x1xf32>
    %575 = vector.broadcast %574 : vector<8x1xf32> to vector<8x32xf32>
    %576 = arith.mulf %575, %534 : vector<8x32xf32>
    %577 = arith.addf %572, %576 : vector<8x32xf32>
    %578 = vector.broadcast %540 : vector<8x1xf32> to vector<8x32xf32>
    %579 = arith.mulf %570, %578 : vector<8x32xf32>
    %c6 = arith.constant 6 : index
    %c0_116 = arith.constant 0 : index
    %c0_117 = arith.constant 0 : index
    %580 = vector.load %arg12[%c6, %c0_116, %c0_117] : memref<8x8x32xf32, #tpu.memory_space<vmem>>, vector<1x8x32xf32>
    %581 = vector.shape_cast %580 : vector<1x8x32xf32> to vector<8x32xf32>
    %582 = vector.shape_cast %579 : vector<8x32xf32> to vector<1x8x32xf32>
    tpu.vector_store %arg12[%c6, %c0_116, %c0_117], %582 {strides = array<i32>} : memref<8x8x32xf32, #tpu.memory_space<vmem>>, vector<1x8x32xf32>,
    %583 = arith.addf %497, %579 : vector<8x32xf32>
    %584 = vector.extract_strided_slice %19 {offsets = [48, 0], sizes = [8, 96], strides = [1, 1]} : vector<64x96xf32> to vector<8x96xf32>
    %cst_118 = arith.constant dense<0.000000e+00> : vector<8x96xf32>
    %585 = tpu.matmul %577, %20, %cst_118 {dimension_numbers = #tpu.dot_dimension_numbers<[1], [0], [0], [1], [0, 0, 1, 1], [], []>} : vector<8x32xf32>, vector<32x96xf32>, vector<8x96xf32> -> vector<8x96xf32>
    %586 = vector.extract_strided_slice %584 {offsets = [0, 0], sizes = [8, 32], strides = [1, 1]} : vector<8x96xf32> to vector<8x32xf32>
    %587 = vector.extract_strided_slice %585 {offsets = [0, 0], sizes = [8, 32], strides = [1, 1]} : vector<8x96xf32> to vector<8x32xf32>
    %588 = arith.addf %586, %587 : vector<8x32xf32>
    %589 = arith.negf %588 : vector<8x32xf32>
    %590 = math.exp %589 : vector<8x32xf32>
    %cst_119 = arith.constant 1.000000e+00 : f32
    %591 = vector.broadcast %cst_119 : f32 to vector<8x32xf32>
    %592 = arith.addf %591, %590 : vector<8x32xf32>
    %593 = arith.divf %591, %592 : vector<8x32xf32>
    %594 = vector.extract_strided_slice %584 {offsets = [0, 32], sizes = [8, 32], strides = [1, 1]} : vector<8x96xf32> to vector<8x32xf32>
    %595 = vector.extract_strided_slice %585 {offsets = [0, 32], sizes = [8, 32], strides = [1, 1]} : vector<8x96xf32> to vector<8x32xf32>
    %596 = arith.addf %594, %595 : vector<8x32xf32>
    %597 = arith.negf %596 : vector<8x32xf32>
    %598 = math.exp %597 : vector<8x32xf32>
    %cst_120 = arith.constant 1.000000e+00 : f32
    %599 = vector.broadcast %cst_120 : f32 to vector<8x32xf32>
    %600 = arith.addf %599, %598 : vector<8x32xf32>
    %601 = arith.divf %599, %600 : vector<8x32xf32>
    %602 = vector.extract_strided_slice %584 {offsets = [0, 64], sizes = [8, 32], strides = [1, 1]} : vector<8x96xf32> to vector<8x32xf32>
    %603 = vector.extract_strided_slice %585 {offsets = [0, 64], sizes = [8, 32], strides = [1, 1]} : vector<8x96xf32> to vector<8x32xf32>
    %604 = vector.broadcast %21 : vector<1x32xf32> to vector<8x32xf32>
    %605 = arith.addf %603, %604 : vector<8x32xf32>
    %606 = arith.mulf %593, %605 : vector<8x32xf32>
    %607 = arith.addf %602, %606 : vector<8x32xf32>
    %608 = math.tanh %607 : vector<8x32xf32>
    %cst_121 = arith.constant 1.000000e+00 : f32
    %609 = vector.broadcast %cst_121 : f32 to vector<8x32xf32>
    %610 = arith.subf %609, %601 : vector<8x32xf32>
    %611 = arith.mulf %610, %608 : vector<8x32xf32>
    %612 = arith.mulf %601, %577 : vector<8x32xf32>
    %613 = arith.addf %611, %612 : vector<8x32xf32>
    %614 = vector.broadcast %540 : vector<8x1xf32> to vector<8x32xf32>
    %615 = arith.mulf %614, %613 : vector<8x32xf32>
    %cst_122 = arith.constant 1.000000e+00 : f32
    %616 = vector.broadcast %cst_122 : f32 to vector<8x1xf32>
    %617 = arith.subf %616, %540 : vector<8x1xf32>
    %618 = vector.broadcast %617 : vector<8x1xf32> to vector<8x32xf32>
    %619 = arith.mulf %618, %577 : vector<8x32xf32>
    %620 = arith.addf %615, %619 : vector<8x32xf32>
    %621 = vector.broadcast %540 : vector<8x1xf32> to vector<8x32xf32>
    %622 = arith.mulf %613, %621 : vector<8x32xf32>
    %c6_123 = arith.constant 6 : index
    %c0_124 = arith.constant 0 : index
    %c0_125 = arith.constant 0 : index
    %623 = vector.load %arg13[%c6_123, %c0_124, %c0_125] : memref<8x8x32xf32, #tpu.memory_space<vmem>>, vector<1x8x32xf32>
    %624 = vector.shape_cast %623 : vector<1x8x32xf32> to vector<8x32xf32>
    %625 = vector.shape_cast %622 : vector<8x32xf32> to vector<1x8x32xf32>
    tpu.vector_store %arg13[%c6_123, %c0_124, %c0_125], %625 {strides = array<i32>} : memref<8x8x32xf32, #tpu.memory_space<vmem>>, vector<1x8x32xf32>,
    %626 = vector.extract_strided_slice %0 {offsets = [56, 0], sizes = [8, 1], strides = [1, 1]} : vector<64x1xf32> to vector<8x1xf32>
    %627 = vector.extract_strided_slice %18 {offsets = [56, 0], sizes = [8, 96], strides = [1, 1]} : vector<64x96xf32> to vector<8x96xf32>
    %cst_126 = arith.constant dense<0.000000e+00> : vector<8x96xf32>
    %628 = tpu.matmul %620, %20, %cst_126 {dimension_numbers = #tpu.dot_dimension_numbers<[1], [0], [0], [1], [0, 0, 1, 1], [], []>} : vector<8x32xf32>, vector<32x96xf32>, vector<8x96xf32> -> vector<8x96xf32>
    %629 = vector.extract_strided_slice %627 {offsets = [0, 0], sizes = [8, 32], strides = [1, 1]} : vector<8x96xf32> to vector<8x32xf32>
    %630 = vector.extract_strided_slice %628 {offsets = [0, 0], sizes = [8, 32], strides = [1, 1]} : vector<8x96xf32> to vector<8x32xf32>
    %631 = arith.addf %629, %630 : vector<8x32xf32>
    %632 = arith.negf %631 : vector<8x32xf32>
    %633 = math.exp %632 : vector<8x32xf32>
    %cst_127 = arith.constant 1.000000e+00 : f32
    %634 = vector.broadcast %cst_127 : f32 to vector<8x32xf32>
    %635 = arith.addf %634, %633 : vector<8x32xf32>
    %636 = arith.divf %634, %635 : vector<8x32xf32>
    %637 = vector.extract_strided_slice %627 {offsets = [0, 32], sizes = [8, 32], strides = [1, 1]} : vector<8x96xf32> to vector<8x32xf32>
    %638 = vector.extract_strided_slice %628 {offsets = [0, 32], sizes = [8, 32], strides = [1, 1]} : vector<8x96xf32> to vector<8x32xf32>
    %639 = arith.addf %637, %638 : vector<8x32xf32>
    %640 = arith.negf %639 : vector<8x32xf32>
    %641 = math.exp %640 : vector<8x32xf32>
    %cst_128 = arith.constant 1.000000e+00 : f32
    %642 = vector.broadcast %cst_128 : f32 to vector<8x32xf32>
    %643 = arith.addf %642, %641 : vector<8x32xf32>
    %644 = arith.divf %642, %643 : vector<8x32xf32>
    %645 = vector.extract_strided_slice %627 {offsets = [0, 64], sizes = [8, 32], strides = [1, 1]} : vector<8x96xf32> to vector<8x32xf32>
    %646 = vector.extract_strided_slice %628 {offsets = [0, 64], sizes = [8, 32], strides = [1, 1]} : vector<8x96xf32> to vector<8x32xf32>
    %647 = vector.broadcast %21 : vector<1x32xf32> to vector<8x32xf32>
    %648 = arith.addf %646, %647 : vector<8x32xf32>
    %649 = arith.mulf %636, %648 : vector<8x32xf32>
    %650 = arith.addf %645, %649 : vector<8x32xf32>
    %651 = math.tanh %650 : vector<8x32xf32>
    %cst_129 = arith.constant 1.000000e+00 : f32
    %652 = vector.broadcast %cst_129 : f32 to vector<8x32xf32>
    %653 = arith.subf %652, %644 : vector<8x32xf32>
    %654 = arith.mulf %653, %651 : vector<8x32xf32>
    %655 = arith.mulf %644, %620 : vector<8x32xf32>
    %656 = arith.addf %654, %655 : vector<8x32xf32>
    %657 = vector.broadcast %626 : vector<8x1xf32> to vector<8x32xf32>
    %658 = arith.mulf %657, %656 : vector<8x32xf32>
    %cst_130 = arith.constant 1.000000e+00 : f32
    %659 = vector.broadcast %cst_130 : f32 to vector<8x1xf32>
    %660 = arith.subf %659, %626 : vector<8x1xf32>
    %661 = vector.broadcast %660 : vector<8x1xf32> to vector<8x32xf32>
    %662 = arith.mulf %661, %620 : vector<8x32xf32>
    %663 = arith.addf %658, %662 : vector<8x32xf32>
    %664 = vector.broadcast %626 : vector<8x1xf32> to vector<8x32xf32>
    %665 = arith.mulf %656, %664 : vector<8x32xf32>
    %c7 = arith.constant 7 : index
    %c0_131 = arith.constant 0 : index
    %c0_132 = arith.constant 0 : index
    %666 = vector.load %arg12[%c7, %c0_131, %c0_132] : memref<8x8x32xf32, #tpu.memory_space<vmem>>, vector<1x8x32xf32>
    %667 = vector.shape_cast %666 : vector<1x8x32xf32> to vector<8x32xf32>
    %668 = vector.shape_cast %665 : vector<8x32xf32> to vector<1x8x32xf32>
    tpu.vector_store %arg12[%c7, %c0_131, %c0_132], %668 {strides = array<i32>} : memref<8x8x32xf32, #tpu.memory_space<vmem>>, vector<1x8x32xf32>,
    %669 = arith.addf %583, %665 : vector<8x32xf32>
    %670 = vector.extract_strided_slice %19 {offsets = [56, 0], sizes = [8, 96], strides = [1, 1]} : vector<64x96xf32> to vector<8x96xf32>
    %cst_133 = arith.constant dense<0.000000e+00> : vector<8x96xf32>
    %671 = tpu.matmul %663, %20, %cst_133 {dimension_numbers = #tpu.dot_dimension_numbers<[1], [0], [0], [1], [0, 0, 1, 1], [], []>} : vector<8x32xf32>, vector<32x96xf32>, vector<8x96xf32> -> vector<8x96xf32>
    %672 = vector.extract_strided_slice %670 {offsets = [0, 0], sizes = [8, 32], strides = [1, 1]} : vector<8x96xf32> to vector<8x32xf32>
    %673 = vector.extract_strided_slice %671 {offsets = [0, 0], sizes = [8, 32], strides = [1, 1]} : vector<8x96xf32> to vector<8x32xf32>
    %674 = arith.addf %672, %673 : vector<8x32xf32>
    %675 = arith.negf %674 : vector<8x32xf32>
    %676 = math.exp %675 : vector<8x32xf32>
    %cst_134 = arith.constant 1.000000e+00 : f32
    %677 = vector.broadcast %cst_134 : f32 to vector<8x32xf32>
    %678 = arith.addf %677, %676 : vector<8x32xf32>
    %679 = arith.divf %677, %678 : vector<8x32xf32>
    %680 = vector.extract_strided_slice %670 {offsets = [0, 32], sizes = [8, 32], strides = [1, 1]} : vector<8x96xf32> to vector<8x32xf32>
    %681 = vector.extract_strided_slice %671 {offsets = [0, 32], sizes = [8, 32], strides = [1, 1]} : vector<8x96xf32> to vector<8x32xf32>
    %682 = arith.addf %680, %681 : vector<8x32xf32>
    %683 = arith.negf %682 : vector<8x32xf32>
    %684 = math.exp %683 : vector<8x32xf32>
    %cst_135 = arith.constant 1.000000e+00 : f32
    %685 = vector.broadcast %cst_135 : f32 to vector<8x32xf32>
    %686 = arith.addf %685, %684 : vector<8x32xf32>
    %687 = arith.divf %685, %686 : vector<8x32xf32>
    %688 = vector.extract_strided_slice %670 {offsets = [0, 64], sizes = [8, 32], strides = [1, 1]} : vector<8x96xf32> to vector<8x32xf32>
    %689 = vector.extract_strided_slice %671 {offsets = [0, 64], sizes = [8, 32], strides = [1, 1]} : vector<8x96xf32> to vector<8x32xf32>
    %690 = vector.broadcast %21 : vector<1x32xf32> to vector<8x32xf32>
    %691 = arith.addf %689, %690 : vector<8x32xf32>
    %692 = arith.mulf %679, %691 : vector<8x32xf32>
    %693 = arith.addf %688, %692 : vector<8x32xf32>
    %694 = math.tanh %693 : vector<8x32xf32>
    %cst_136 = arith.constant 1.000000e+00 : f32
    %695 = vector.broadcast %cst_136 : f32 to vector<8x32xf32>
    %696 = arith.subf %695, %687 : vector<8x32xf32>
    %697 = arith.mulf %696, %694 : vector<8x32xf32>
    %698 = arith.mulf %687, %663 : vector<8x32xf32>
    %699 = arith.addf %697, %698 : vector<8x32xf32>
    %700 = vector.broadcast %626 : vector<8x1xf32> to vector<8x32xf32>
    %701 = arith.mulf %699, %700 : vector<8x32xf32>
    %c7_137 = arith.constant 7 : index
    %c0_138 = arith.constant 0 : index
    %c0_139 = arith.constant 0 : index
    %702 = vector.load %arg13[%c7_137, %c0_138, %c0_139] : memref<8x8x32xf32, #tpu.memory_space<vmem>>, vector<1x8x32xf32>
    %703 = vector.shape_cast %702 : vector<1x8x32xf32> to vector<8x32xf32>
    %704 = vector.shape_cast %701 : vector<8x32xf32> to vector<1x8x32xf32>
    tpu.vector_store %arg13[%c7_137, %c0_138, %c0_139], %704 {strides = array<i32>} : memref<8x8x32xf32, #tpu.memory_space<vmem>>, vector<1x8x32xf32>,
    %c0_140 = arith.constant 0 : index
    %c0_141 = arith.constant 0 : index
    %705 = vector.load %arg5[%c0_140, %c0_141] : memref<8x1xf32, #tpu.memory_space<vmem>>, vector<8x1xf32>
    %cst_142 = arith.constant 1.000000e+00 : f32
    %706 = vector.broadcast %cst_142 : f32 to vector<8x1xf32>
    %707 = arith.maximumf %705, %706 : vector<8x1xf32>
    %708 = vector.broadcast %707 : vector<8x1xf32> to vector<8x32xf32>
    %709 = arith.divf %669, %708 : vector<8x32xf32>
    %c0_143 = arith.constant 0 : index
    %c0_144 = arith.constant 0 : index
    %710 = vector.load %arg14[%c0_143, %c0_144] : memref<8x32xf32, #tpu.memory_space<vmem>>, vector<8x32xf32>
    tpu.vector_store %arg14[%c0_143, %c0_144], %709 {strides = array<i32>} : memref<8x32xf32, #tpu.memory_space<vmem>>, vector<8x32xf32>,
    %c0_145 = arith.constant 0 : index
    %c0_146 = arith.constant 0 : index
    %711 = vector.load %arg3[%c0_145, %c0_146] : memref<1x64xi32, #tpu.memory_space<vmem>>, vector<1x64xi32>
    %712 = tpu.iota {dimensions = array<i32: 0>} : vector<32x64xi32>
    %713 = vector.broadcast %711 : vector<1x64xi32> to vector<32x64xi32>
    %714 = arith.cmpi eq, %712, %713 : vector<32x64xi32>
    %715 = arith.extui %714 : vector<32x64xi1> to vector<32x64xi32>
    %716 = arith.sitofp %715 : vector<32x64xi32> to vector<32x64xf32>
    %c0_147 = arith.constant 0 : index
    %c0_148 = arith.constant 0 : index
    %717 = vector.load %arg4[%c0_147, %c0_148] : memref<1x64xf32, #tpu.memory_space<vmem>>, vector<1x64xf32>
    %718 = vector.broadcast %717 : vector<1x64xf32> to vector<32x64xf32>
    %719 = arith.mulf %716, %718 : vector<32x64xf32>
    %720 = tpu.concatenate %63, %149, %235, %321, %407, %493, %579, %665 in 0 : vector<8x32xf32>, vector<8x32xf32>, vector<8x32xf32>, vector<8x32xf32>, vector<8x32xf32>, vector<8x32xf32>, vector<8x32xf32>, vector<8x32xf32> -> vector<64x32xf32>
    %cst_149 = arith.constant dense<0.000000e+00> : vector<32x32xf32>
    %721 = tpu.matmul %719, %720, %cst_149 {dimension_numbers = #tpu.dot_dimension_numbers<[1], [0], [0], [1], [0, 0, 1, 1], [], []>} : vector<32x64xf32>, vector<64x32xf32>, vector<32x32xf32> -> vector<32x32xf32>
    %cst_150 = arith.constant dense<0.000000e+00> : vector<32xf32>
    %722 = vector.multi_reduction <add>, %719, %cst_150 [1] : vector<32x64xf32> to vector<32xf32>
    %723 = vector.shape_cast %722 : vector<32xf32> to vector<32x1xf32>
    %cst_151 = arith.constant 1.000000e+00 : f32
    %724 = vector.broadcast %cst_151 : f32 to vector<32x1xf32>
    %725 = arith.maximumf %723, %724 : vector<32x1xf32>
    %726 = vector.broadcast %725 : vector<32x1xf32> to vector<32x32xf32>
    %727 = arith.divf %721, %726 : vector<32x32xf32>
    %c0_152 = arith.constant 0 : index
    %c0_153 = arith.constant 0 : index
    %728 = vector.load %arg15[%c0_152, %c0_153] : memref<32x32xf32, #tpu.memory_space<vmem>>, vector<32x32xf32>
    tpu.vector_store %arg15[%c0_152, %c0_153], %727 {strides = array<i32>} : memref<32x32xf32, #tpu.memory_space<vmem>>, vector<32x32xf32>,
    return
  }
}

</mosaic_0001>

<llo_original>
// kernel: ast_paths_encoder_forward.1
$region0: #{ast_paths_encoder_forward.1}
  #allocation0 [shape = 'u32[]', space=smem, size = 0x4, offset = 0x4, fixed_abs, tag = 'smem constant byte address 0x4 - core index']
  #allocation1 [shape = 'u32[144,128]{1,0:T(1,128)}', space=vmem, size = 0x12000, scoped, tag = 'internal scratch']
  %s0 = inlined_call_operand.vmem [shape: f32[64,32], index: 0, kind: input, shape index: {}]
  %s1 = inlined_call_operand.vmem [shape: f32[64,64], index: 1, kind: input, shape index: {}]
  %s2 = inlined_call_operand.vmem [shape: f32[64,1], index: 2, kind: input, shape index: {}]
  %s3 = inlined_call_operand.vmem [shape: s32[1,64], index: 3, kind: input, shape index: {}]
  %s4 = inlined_call_operand.vmem [shape: f32[1,64], index: 4, kind: input, shape index: {}]
  %s5 = inlined_call_operand.vmem [shape: f32[8,1], index: 5, kind: input, shape index: {}]
  %s6 = inlined_call_operand.vmem [shape: f32[64,32], index: 6, kind: input, shape index: {}]
  %s7 = inlined_call_operand.vmem [shape: f32[1,32], index: 7, kind: input, shape index: {}]
  %s8 = inlined_call_operand.vmem [shape: f32[32,96], index: 8, kind: input, shape index: {}]
  %s9 = inlined_call_operand.vmem [shape: f32[32,96], index: 9, kind: input, shape index: {}]
  %s10 = inlined_call_operand.vmem [shape: f32[1,96], index: 10, kind: input, shape index: {}]
  %s11 = inlined_call_operand.vmem [shape: f32[1,32], index: 11, kind: input, shape index: {}]
  %s12 = inlined_call_operand.vmem [shape: f32[8,8,32], index: 12, kind: output, shape index: {0}]
  %s13 = inlined_call_operand.vmem [shape: f32[8,8,32], index: 13, kind: output, shape index: {1}]
  %s14 = inlined_call_operand.hbm [shape: f32[8,32], index: 14, kind: output, shape index: {2}]
  %s15 = inlined_call_operand.hbm [shape: f32[32,32], index: 15, kind: output, shape index: {3}]
  %16 = xla_tuple %s12, %s13, %s14, %s15
  %s17 = sld [smem:[#allocation0]]
  $region82: #{ast_paths_encoder_forward.1} parent=0
    _
  %s19 = ssub.s32 1, %s17
  %s20 = scalar_select 0, %s19, %s17
  $region1: #{ast_paths_encoder_forward.1} parent=0
    #allocation2 [shape = 'u8[4096]{0}', space=vmem, size = 0x1000, scoped, tag = 'output window, operand 2, single buffered']
    #allocation3 [shape = 's32[1]{0}', space=sflag, size = 0x4, scoped, tag = 'scoped memory for ast_paths_encoder_forward.1']
    #allocation4 [shape = 'u8[16384]{0}', space=vmem, size = 0x4000, scoped, tag = 'output window, operand 3, single buffered']
    #allocation5 [shape = 's32[1]{0}', space=sflag, size = 0x4, scoped, tag = 'scoped memory for ast_paths_encoder_forward.1']
    %21 = vsyncpa [#allocation3], 0
    %22 = vsyncpa [#allocation5], 0
    // Predicated region
    $region2: #{ast_paths_encoder_forward.1} parent=1 // pred_check
      _
    $region3: #{ast_paths_encoder_forward.1} parent=1 // pred_check_branch
      %24 = sbr.rel (0) target = $region5
    $region4: #{ast_paths_encoder_forward.1} parent=1 // pred_region
      _
    $region5: #{ast_paths_encoder_forward.1} parent=1 // pred_fallthru
      _
    // Predicated region
    $region6: #{ast_paths_encoder_forward.1} parent=1 // pred_check
      _
    $region7: #{ast_paths_encoder_forward.1} parent=1 // pred_check_branch
      %26 = sbr.rel (0) target = $region9
    $region8: #{ast_paths_encoder_forward.1} parent=1 // pred_region
      _
    $region9: #{ast_paths_encoder_forward.1} parent=1 // pred_fallthru
      _
    // Predicated region
    $region10: #{ast_paths_encoder_forward.1} parent=1 // pred_check
      _
    $region11: #{ast_paths_encoder_forward.1} parent=1 // pred_check_branch
      %28 = sbr.rel (0) target = $region13
    $region12: #{ast_paths_encoder_forward.1} parent=1 // pred_region
      _
    $region13: #{ast_paths_encoder_forward.1} parent=1 // pred_fallthru
      _
    // Predicated region
    $region14: #{ast_paths_encoder_forward.1} parent=1 // pred_check
      _
    $region15: #{ast_paths_encoder_forward.1} parent=1 // pred_check_branch
      %30 = sbr.rel (0) target = $region17
    $region16: #{ast_paths_encoder_forward.1} parent=1 // pred_region
      _
    $region17: #{ast_paths_encoder_forward.1} parent=1 // pred_fallthru
      _
    // Predicated region
    $region18: #{ast_paths_encoder_forward.1} parent=1 // pred_check
      _
    $region19: #{ast_paths_encoder_forward.1} parent=1 // pred_check_branch
      %32 = sbr.rel (0) target = $region21
    $region20: #{ast_paths_encoder_forward.1} parent=1 // pred_region
      _
    $region21: #{ast_paths_encoder_forward.1} parent=1 // pred_fallthru
      _
    // Predicated region
    $region22: #{ast_paths_encoder_forward.1} parent=1 // pred_check
      _
    $region23: #{ast_paths_encoder_forward.1} parent=1 // pred_check_branch
      %34 = sbr.rel (0) target = $region25
    $region24: #{ast_paths_encoder_forward.1} parent=1 // pred_region
      _
    $region25: #{ast_paths_encoder_forward.1} parent=1 // pred_fallthru
      _
    // Predicated region
    $region26: #{ast_paths_encoder_forward.1} parent=1 // pred_check
      _
    $region27: #{ast_paths_encoder_forward.1} parent=1 // pred_check_branch
      %36 = sbr.rel (0) target = $region29
    $region28: #{ast_paths_encoder_forward.1} parent=1 // pred_region
      _
    $region29: #{ast_paths_encoder_forward.1} parent=1 // pred_fallthru
      _
    // Predicated region
    $region30: #{ast_paths_encoder_forward.1} parent=1 // pred_check
      _
    $region31: #{ast_paths_encoder_forward.1} parent=1 // pred_check_branch
      %38 = sbr.rel (0) target = $region33
    $region32: #{ast_paths_encoder_forward.1} parent=1 // pred_region
      _
    $region33: #{ast_paths_encoder_forward.1} parent=1 // pred_fallthru
      _
    // Predicated region
    $region34: #{ast_paths_encoder_forward.1} parent=1 // pred_check
      _
    $region35: #{ast_paths_encoder_forward.1} parent=1 // pred_check_branch
      %40 = sbr.rel (0) target = $region37
    $region36: #{ast_paths_encoder_forward.1} parent=1 // pred_region
      _
    $region37: #{ast_paths_encoder_forward.1} parent=1 // pred_fallthru
      _
    // Predicated region
    $region38: #{ast_paths_encoder_forward.1} parent=1 // pred_check
      _
    $region39: #{ast_paths_encoder_forward.1} parent=1 // pred_check_branch
      %42 = sbr.rel (0) target = $region41
    $region40: #{ast_paths_encoder_forward.1} parent=1 // pred_region
      _
    $region41: #{ast_paths_encoder_forward.1} parent=1 // pred_fallthru
      _
    // Predicated region
    $region42: #{ast_paths_encoder_forward.1} parent=1 // pred_check
      _
    $region43: #{ast_paths_encoder_forward.1} parent=1 // pred_check_branch
      %44 = sbr.rel (0) target = $region45
    $region44: #{ast_paths_encoder_forward.1} parent=1 // pred_region
      _
    $region45: #{ast_paths_encoder_forward.1} parent=1 // pred_fallthru
      _
    // Predicated region
    $region46: #{ast_paths_encoder_forward.1} parent=1 // pred_check
      _
    $region47: #{ast_paths_encoder_forward.1} parent=1 // pred_check_branch
      %46 = sbr.rel (0) target = $region49
    $region48: #{ast_paths_encoder_forward.1} parent=1 // pred_region
      _
    $region49: #{ast_paths_encoder_forward.1} parent=1 // pred_fallthru
      _
    %v47 = vld [vmem:[%s2] sm:$0xff]
    %v48 = vld [vmem:[%s2 + $0x8] sm:$0xff]
    %v49 = vld [vmem:[%s2 + $0x10] sm:$0xff]
    %v50 = vld [vmem:[%s2 + $0x18] sm:$0xff]
    %v51 = vld [vmem:[%s2 + $0x20] sm:$0xff]
    %v52 = vld [vmem:[%s2 + $0x28] sm:$0xff]
    %v53 = vld [vmem:[%s2 + $0x30] sm:$0xff]
    %v54 = vld [vmem:[%s2 + $0x38] sm:$0xff]
    %v55 = vld [vmem:[%s1] sm:$0xff]
    %v56 = vld [vmem:[%s1 + $0x8] sm:$0xff]
    %v57 = vld [vmem:[%s1 + $0x10] sm:$0xff]
    %v58 = vld [vmem:[%s1 + $0x18] sm:$0xff]
    %v59 = vld [vmem:[%s1 + $0x20] sm:$0xff]
    %v60 = vld [vmem:[%s1 + $0x28] sm:$0xff]
    %v61 = vld [vmem:[%s1 + $0x30] sm:$0xff]
    %v62 = vld [vmem:[%s1 + $0x38] sm:$0xff]
    %v63 = vld [vmem:[%s6] sm:$0xff]
    %v64 = vld [vmem:[%s6 + $0x8] sm:$0xff]
    %v65 = vld [vmem:[%s6 + $0x10] sm:$0xff]
    %v66 = vld [vmem:[%s6 + $0x18] sm:$0xff]
    %v67 = vld [vmem:[%s6 + $0x20] sm:$0xff]
    %v68 = vld [vmem:[%s6 + $0x28] sm:$0xff]
    %v69 = vld [vmem:[%s6 + $0x30] sm:$0xff]
    %v70 = vld [vmem:[%s6 + $0x38] sm:$0xff]
    %v71 = vld [vmem:[%s7] sm:$0x1]
    %v73 = vlaneseq
    %v74 = vshrl.u32 %v73, 7
    %v75 = vsub.s32 0, %v74
    %v76 = vrot.slane %v71, %v75
    %vm78 = vcmask 523264
    %v80 = vsel %vm78, %v55, 0
    %v83 = vsel %vm78, %v56, 0
    %v86 = vsel %vm78, %v57, 0
    %v89 = vsel %vm78, %v58, 0
    %v92 = vsel %vm78, %v59, 0
    %v95 = vsel %vm78, %v60, 0
    %v98 = vsel %vm78, %v61, 0
    %v101 = vsel %vm78, %v62, 0
    %103 = vmatprep.subr.mxu0 0.0
    %104 = vmatpush1.msra.mxu0 %v63
    %105 = vmatprep.subr.mxu0 0.0
    %106 = vmatpush1.msra.mxu0 %v64
    %107 = vmatprep.subr.mxu0 0.0
    %108 = vmatpush1.msra.mxu0 %v65
    %109 = vmatprep.subr.mxu0 0.0
    %110 = vmatpush1.msra.mxu0 %v66
    %111 = vmatprep.subr.mxu0 0.0
    %112 = vmatpush1.msra.mxu0 %v67
    %113 = vmatprep.subr.mxu0 0.0
    %114 = vmatpush1.msra.mxu0 %v68
    %115 = vmatprep.subr.mxu0 0.0
    %116 = vmatpush1.msra.mxu0 %v69
    %117 = vmatprep.subr.mxu0 0.0
    %118 = vmatpush1.msra.mxu0 %v70
    %119 = vmatprep.subr.mxu0 0.0
    %120 = vmatpush1.msra.mxu0 0.0
    %121 = vmatprep.subr.mxu0 0.0
    %122 = vmatpush1.msra.mxu0 0.0
    %123 = vmatprep.subr.mxu0 0.0
    %124 = vmatpush1.msra.mxu0 0.0
    %125 = vmatprep.subr.mxu0 0.0
    %126 = vmatpush1.msra.mxu0 0.0
    %127 = vmatprep.subr.mxu0 0.0
    %128 = vmatpush1.msra.mxu0 0.0
    %129 = vmatprep.subr.mxu0 0.0
    %130 = vmatpush1.msra.mxu0 0.0
    %131 = vmatprep.subr.mxu0 0.0
    %132 = vmatpush1.msra.mxu0 0.0
    %133 = vmatprep.subr.mxu0 0.0
    %134 = vmatpush1.msra.mxu0 0.0
    %135 = vmatprep.subr.mxu0 0.0
    %136 = vmatpush1.msra.mxu0 0.0
    %137 = vmatprep.subr.mxu0 0.0
    %138 = vmatpush1.msra.mxu0 0.0
    %139 = vmatprep.subr.mxu0 0.0
    %140 = vmatpush1.msra.mxu0 0.0
    %141 = vmatprep.subr.mxu0 0.0
    %142 = vmatpush1.msra.mxu0 0.0
    %143 = vmatprep.subr.mxu0 0.0
    %144 = vmatpush1.msra.mxu0 0.0
    %145 = vmatprep.subr.mxu0 0.0
    %146 = vmatpush1.msra.mxu0 0.0
    %147 = vmatprep.subr.mxu0 0.0
    %148 = vmatpush1.msra.mxu0 0.0
    %149 = vmatprep.subr.mxu0 0.0
    %150 = vmatpush1.msra.mxu0 0.0
    %151 = vmatprep.subr.mxu0 0.0
    %152 = vmatpush1.msra.mxu0 0.0
    %153 = vmatprep.subr.mxu0 0.0
    %154 = vmatpush1.msra.mxu0 0.0
    %155 = vmatprep.subr.mxu0 0.0
    %156 = vmatpush1.msra.mxu0 0.0
    %157 = vmatprep.subr.mxu0 0.0
    %158 = vmatpush1.msra.mxu0 0.0
    %159 = vmatprep.subr.mxu0 0.0
    %160 = vmatpush1.msra.mxu0 0.0
    %161 = vmatprep.subr.mxu0 0.0
    %162 = vmatpush1.msra.mxu0 0.0
    %163 = vmatprep.subr.mxu0 0.0
    %164 = vmatpush1.msra.mxu0 0.0
    %165 = vmatprep.subr.mxu0 0.0
    %166 = vmatpush1.msra.mxu0 0.0
    %167 = vmatprep.mubr.f32.mxu0 0.0
    %168 = vmatmul.mubr.f32.gmra.mrb[0].mxu0 %v80
    %v169 = vpop.f32.mrb[0].mxu0
    %v170 = vadd.f32 %v76, %v169
    %v171 = vpop.f32.mrb[0].mxu0
    %172 = vmatprep.mubr.f32.mxu0 0.0
    %173 = vmatmul.mubr.f32.gmra.mrb[0].mxu0 %v83
    %v174 = vpop.f32.mrb[0].mxu0
    %v175 = vadd.f32 %v76, %v174
    %v176 = vpop.f32.mrb[0].mxu0
    %177 = vmatprep.mubr.f32.mxu0 0.0
    %178 = vmatmul.mubr.f32.gmra.mrb[0].mxu0 %v86
    %v179 = vpop.f32.mrb[0].mxu0
    %v180 = vadd.f32 %v76, %v179
    %v181 = vpop.f32.mrb[0].mxu0
    %182 = vmatprep.mubr.f32.mxu0 0.0
    %183 = vmatmul.mubr.f32.gmra.mrb[0].mxu0 %v89
    %v184 = vpop.f32.mrb[0].mxu0
    %v185 = vadd.f32 %v76, %v184
    %v186 = vpop.f32.mrb[0].mxu0
    %187 = vmatprep.mubr.f32.mxu0 0.0
    %188 = vmatmul.mubr.f32.gmra.mrb[0].mxu0 %v92
    %v189 = vpop.f32.mrb[0].mxu0
    %v190 = vadd.f32 %v76, %v189
    %v191 = vpop.f32.mrb[0].mxu0
    %192 = vmatprep.mubr.f32.mxu0 0.0
    %193 = vmatmul.mubr.f32.gmra.mrb[0].mxu0 %v95
    %v194 = vpop.f32.mrb[0].mxu0
    %v195 = vadd.f32 %v76, %v194
    %v196 = vpop.f32.mrb[0].mxu0
    %197 = vmatprep.mubr.f32.mxu0 0.0
    %198 = vmatmul.mubr.f32.gmra.mrb[0].mxu0 %v98
    %v199 = vpop.f32.mrb[0].mxu0
    %v200 = vadd.f32 %v76, %v199
    %v201 = vpop.f32.mrb[0].mxu0
    %202 = vmatprep.mubr.f32.mxu0 0.0
    %203 = vmatmul.mubr.f32.gmra.mrb[0].mxu0 %v101
    %v204 = vpop.f32.mrb[0].mxu0
    %v205 = vadd.f32 %v76, %v204
    %v206 = vpop.f32.mrb[0].mxu0
    %207 = vdwg.mxu0
    %209 = vset.pattern.permute.xlu0 0
    %210 = vperm.xlu0 %209, %v47
    %v211 = vpop.permute.xlu0 %210
    %214 = vset.pattern.permute.xlu0 0
    %215 = vperm.xlu0 %214, %v48
    %v216 = vpop.permute.xlu0 %215
    %219 = vset.pattern.permute.xlu0 0
    %220 = vperm.xlu0 %219, %v49
    %v221 = vpop.permute.xlu0 %220
    %224 = vset.pattern.permute.xlu0 0
    %225 = vperm.xlu0 %224, %v50
    %v226 = vpop.permute.xlu0 %225
    %229 = vset.pattern.permute.xlu0 0
    %230 = vperm.xlu0 %229, %v51
    %v231 = vpop.permute.xlu0 %230
    %234 = vset.pattern.permute.xlu0 0
    %235 = vperm.xlu0 %234, %v52
    %v236 = vpop.permute.xlu0 %235
    %239 = vset.pattern.permute.xlu0 0
    %240 = vperm.xlu0 %239, %v53
    %v241 = vpop.permute.xlu0 %240
    %244 = vset.pattern.permute.xlu0 0
    %245 = vperm.xlu0 %244, %v54
    %v246 = vpop.permute.xlu0 %245
    %v248 = vmul.f32 %v170, %v211
    %v249 = vmul.f32 %v175, %v216
    %v250 = vmul.f32 %v180, %v221
    %v251 = vmul.f32 %v185, %v226
    %v252 = vmul.f32 %v190, %v231
    %v253 = vmul.f32 %v195, %v236
    %v254 = vmul.f32 %v200, %v241
    %v255 = vmul.f32 %v205, %v246
    %v256 = vld [vmem:[%s0] sm:$0xff]
    %v257 = vld [vmem:[%s0 + $0x8] sm:$0xff]
    %v258 = vld [vmem:[%s0 + $0x10] sm:$0xff]
    %v259 = vld [vmem:[%s0 + $0x18] sm:$0xff]
    %v260 = vld [vmem:[%s0 + $0x20] sm:$0xff]
    %v261 = vld [vmem:[%s0 + $0x28] sm:$0xff]
    %v262 = vld [vmem:[%s0 + $0x30] sm:$0xff]
    %v263 = vld [vmem:[%s0 + $0x38] sm:$0xff]
    %v264 = vmul.f32 %v256, %v211
    %v265 = vmul.f32 %v257, %v216
    %v266 = vmul.f32 %v258, %v221
    %v267 = vmul.f32 %v259, %v226
    %v268 = vmul.f32 %v260, %v231
    %v269 = vmul.f32 %v261, %v236
    %v270 = vmul.f32 %v262, %v241
    %v271 = vmul.f32 %v263, %v246
    %v272 = vld [vmem:[%s8] sm:$0xff]
    %v273 = vld [vmem:[%s8 + $0x8] sm:$0xff]
    %v274 = vld [vmem:[%s8 + $0x10] sm:$0xff]
    %v275 = vld [vmem:[%s8 + $0x18] sm:$0xff]
    %v276 = vld [vmem:[%s10] sm:$0x1]
    %v278 = vlaneseq
    %v279 = vshrl.u32 %v278, 7
    %v280 = vsub.s32 0, %v279
    %v281 = vrot.slane %v276, %v280
    %vm283 = vcmask 261120
    %v285 = vsel %vm283, %v264, 0
    %v288 = vsel %vm283, %v265, 0
    %v291 = vsel %vm283, %v266, 0
    %v294 = vsel %vm283, %v267, 0
    %v297 = vsel %vm283, %v268, 0
    %v300 = vsel %vm283, %v269, 0
    %v303 = vsel %vm283, %v270, 0
    %v306 = vsel %vm283, %v271, 0
    %v309 = vsel %vm283, %v248, 0
    %v312 = vsel %vm283, %v249, 0
    %v315 = vsel %vm283, %v250, 0
    %v318 = vsel %vm283, %v251, 0
    %v321 = vsel %vm283, %v252, 0
    %v324 = vsel %vm283, %v253, 0
    %v327 = vsel %vm283, %v254, 0
    %v330 = vsel %vm283, %v255, 0
    %332 = vmatprep.subr.mxu0 0.0
    %333 = vmatpush1.msra.mxu0 %v272
    %334 = vmatprep.subr.mxu0 0.0
    %335 = vmatpush1.msra.mxu0 %v273
    %336 = vmatprep.subr.mxu0 0.0
    %337 = vmatpush1.msra.mxu0 %v274
    %338 = vmatprep.subr.mxu0 0.0
    %339 = vmatpush1.msra.mxu0 %v275
    %340 = vmatprep.subr.mxu0 0.0
    %341 = vmatpush1.msra.mxu0 0.0
    %342 = vmatprep.subr.mxu0 0.0
    %343 = vmatpush1.msra.mxu0 0.0
    %344 = vmatprep.subr.mxu0 0.0
    %345 = vmatpush1.msra.mxu0 0.0
    %346 = vmatprep.subr.mxu0 0.0
    %347 = vmatpush1.msra.mxu0 0.0
    %348 = vmatprep.subr.mxu0 0.0
    %349 = vmatpush1.msra.mxu0 0.0
    %350 = vmatprep.subr.mxu0 0.0
    %351 = vmatpush1.msra.mxu0 0.0
    %352 = vmatprep.subr.mxu0 0.0
    %353 = vmatpush1.msra.mxu0 0.0
    %354 = vmatprep.subr.mxu0 0.0
    %355 = vmatpush1.msra.mxu0 0.0
    %356 = vmatprep.subr.mxu0 0.0
    %357 = vmatpush1.msra.mxu0 0.0
    %358 = vmatprep.subr.mxu0 0.0
    %359 = vmatpush1.msra.mxu0 0.0
    %360 = vmatprep.subr.mxu0 0.0
    %361 = vmatpush1.msra.mxu0 0.0
    %362 = vmatprep.subr.mxu0 0.0
    %363 = vmatpush1.msra.mxu0 0.0
    %364 = vmatprep.subr.mxu0 0.0
    %365 = vmatpush1.msra.mxu0 0.0
    %366 = vmatprep.subr.mxu0 0.0
    %367 = vmatpush1.msra.mxu0 0.0
    %368 = vmatprep.subr.mxu0 0.0
    %369 = vmatpush1.msra.mxu0 0.0
    %370 = vmatprep.subr.mxu0 0.0
    %371 = vmatpush1.msra.mxu0 0.0
    %372 = vmatprep.subr.mxu0 0.0
    %373 = vmatpush1.msra.mxu0 0.0
    %374 = vmatprep.subr.mxu0 0.0
    %375 = vmatpush1.msra.mxu0 0.0
    %376 = vmatprep.subr.mxu0 0.0
    %377 = vmatpush1.msra.mxu0 0.0
    %378 = vmatprep.subr.mxu0 0.0
    %379 = vmatpush1.msra.mxu0 0.0
    %380 = vmatprep.subr.mxu0 0.0
    %381 = vmatpush1.msra.mxu0 0.0
    %382 = vmatprep.subr.mxu0 0.0
    %383 = vmatpush1.msra.mxu0 0.0
    %384 = vmatprep.subr.mxu0 0.0
    %385 = vmatpush1.msra.mxu0 0.0
    %386 = vmatprep.subr.mxu0 0.0
    %387 = vmatpush1.msra.mxu0 0.0
    %388 = vmatprep.subr.mxu0 0.0
    %389 = vmatpush1.msra.mxu0 0.0
    %390 = vmatprep.subr.mxu0 0.0
    %391 = vmatpush1.msra.mxu0 0.0
    %392 = vmatprep.subr.mxu0 0.0
    %393 = vmatpush1.msra.mxu0 0.0
    %394 = vmatprep.subr.mxu0 0.0
    %395 = vmatpush1.msra.mxu0 0.0
    %396 = vmatprep.mubr.f32.mxu0 0.0
    %397 = vmatmul.mubr.f32.gmra.mrb[0].mxu0 %v285
    %v398 = vpop.f32.mrb[0].mxu0
    %v399 = vadd.f32 %v281, %v398
    %v400 = vpop.f32.mrb[0].mxu0
    %401 = vmatprep.mubr.f32.mxu0 0.0
    %402 = vmatmul.mubr.f32.gmra.mrb[0].mxu0 %v288
    %v403 = vpop.f32.mrb[0].mxu0
    %v404 = vadd.f32 %v281, %v403
    %v405 = vpop.f32.mrb[0].mxu0
    %406 = vmatprep.mubr.f32.mxu0 0.0
    %407 = vmatmul.mubr.f32.gmra.mrb[0].mxu0 %v291
    %v408 = vpop.f32.mrb[0].mxu0
    %v409 = vadd.f32 %v281, %v408
    %v410 = vpop.f32.mrb[0].mxu0
    %411 = vmatprep.mubr.f32.mxu0 0.0
    %412 = vmatmul.mubr.f32.gmra.mrb[0].mxu0 %v294
    %v413 = vpop.f32.mrb[0].mxu0
    %v414 = vadd.f32 %v281, %v413
    %v415 = vpop.f32.mrb[0].mxu0
    %416 = vmatprep.mubr.f32.mxu0 0.0
    %417 = vmatmul.mubr.f32.gmra.mrb[0].mxu0 %v297
    %v418 = vpop.f32.mrb[0].mxu0
    %v419 = vadd.f32 %v281, %v418
    %v420 = vpop.f32.mrb[0].mxu0
    %421 = vmatprep.mubr.f32.mxu0 0.0
    %422 = vmatmul.mubr.f32.gmra.mrb[0].mxu0 %v300
    %v423 = vpop.f32.mrb[0].mxu0
    %v424 = vadd.f32 %v281, %v423
    %v425 = vpop.f32.mrb[0].mxu0
    %426 = vmatprep.mubr.f32.mxu0 0.0
    %427 = vmatmul.mubr.f32.gmra.mrb[0].mxu0 %v303
    %v428 = vpop.f32.mrb[0].mxu0
    %v429 = vadd.f32 %v281, %v428
    %v430 = vpop.f32.mrb[0].mxu0
    %431 = vmatprep.mubr.f32.mxu0 0.0
    %432 = vmatmul.mubr.f32.gmra.mrb[0].mxu0 %v306
    %v433 = vpop.f32.mrb[0].mxu0
    %v434 = vadd.f32 %v281, %v433
    %v435 = vpop.f32.mrb[0].mxu0
    %436 = vmatprep.mubr.f32.mxu0 0.0
    %437 = vmatmul.mubr.f32.gmra.mrb[0].mxu0 %v309
    %v438 = vpop.f32.mrb[0].mxu0
    %v439 = vadd.f32 %v281, %v438
    %v440 = vpop.f32.mrb[0].mxu0
    %441 = vmatprep.mubr.f32.mxu0 0.0
    %442 = vmatmul.mubr.f32.gmra.mrb[0].mxu0 %v312
    %v443 = vpop.f32.mrb[0].mxu0
    %v444 = vadd.f32 %v281, %v443
    %v445 = vpop.f32.mrb[0].mxu0
    %446 = vmatprep.mubr.f32.mxu0 0.0
    %447 = vmatmul.mubr.f32.gmra.mrb[0].mxu0 %v315
    %v448 = vpop.f32.mrb[0].mxu0
    %v449 = vadd.f32 %v281, %v448
    %v450 = vpop.f32.mrb[0].mxu0
    %451 = vmatprep.mubr.f32.mxu0 0.0
    %452 = vmatmul.mubr.f32.gmra.mrb[0].mxu0 %v318
    %v453 = vpop.f32.mrb[0].mxu0
    %v454 = vadd.f32 %v281, %v453
    %v455 = vpop.f32.mrb[0].mxu0
    %456 = vmatprep.mubr.f32.mxu0 0.0
    %457 = vmatmul.mubr.f32.gmra.mrb[0].mxu0 %v321
    %v458 = vpop.f32.mrb[0].mxu0
    %v459 = vadd.f32 %v281, %v458
    %v460 = vpop.f32.mrb[0].mxu0
    %461 = vmatprep.mubr.f32.mxu0 0.0
    %462 = vmatmul.mubr.f32.gmra.mrb[0].mxu0 %v324
    %v463 = vpop.f32.mrb[0].mxu0
    %v464 = vadd.f32 %v281, %v463
    %v465 = vpop.f32.mrb[0].mxu0
    %466 = vmatprep.mubr.f32.mxu0 0.0
    %467 = vmatmul.mubr.f32.gmra.mrb[0].mxu0 %v327
    %v468 = vpop.f32.mrb[0].mxu0
    %v469 = vadd.f32 %v281, %v468
    %v470 = vpop.f32.mrb[0].mxu0
    %471 = vmatprep.mubr.f32.mxu0 0.0
    %472 = vmatmul.mubr.f32.gmra.mrb[0].mxu0 %v330
    %v473 = vpop.f32.mrb[0].mxu0
    %v474 = vadd.f32 %v281, %v473
    %v475 = vpop.f32.mrb[0].mxu0
    %476 = vdwg.mxu0
    %v477 = vld [vmem:[%s9] sm:$0xff]
    %v478 = vld [vmem:[%s9 + $0x8] sm:$0xff]
    %v479 = vld [vmem:[%s9 + $0x10] sm:$0xff]
    %v480 = vld [vmem:[%s9 + $0x18] sm:$0xff]
    %v481 = vld [vmem:[%s11] sm:$0x1]
    %v483 = vsel %vm283, 0.0, 0
    %485 = vmatprep.subr.mxu0 0.0
    %486 = vmatpush1.msra.mxu0 %v477
    %487 = vmatprep.subr.mxu0 0.0
    %488 = vmatpush1.msra.mxu0 %v478
    %489 = vmatprep.subr.mxu0 0.0
    %490 = vmatpush1.msra.mxu0 %v479
    %491 = vmatprep.subr.mxu0 0.0
    %492 = vmatpush1.msra.mxu0 %v480
    %493 = vmatprep.subr.mxu0 0.0
    %494 = vmatpush1.msra.mxu0 0.0
    %495 = vmatprep.subr.mxu0 0.0
    %496 = vmatpush1.msra.mxu0 0.0
    %497 = vmatprep.subr.mxu0 0.0
    %498 = vmatpush1.msra.mxu0 0.0
    %499 = vmatprep.subr.mxu0 0.0
    %500 = vmatpush1.msra.mxu0 0.0
    %501 = vmatprep.subr.mxu0 0.0
    %502 = vmatpush1.msra.mxu0 0.0
    %503 = vmatprep.subr.mxu0 0.0
    %504 = vmatpush1.msra.mxu0 0.0
    %505 = vmatprep.subr.mxu0 0.0
    %506 = vmatpush1.msra.mxu0 0.0
    %507 = vmatprep.subr.mxu0 0.0
    %508 = vmatpush1.msra.mxu0 0.0
    %509 = vmatprep.subr.mxu0 0.0
    %510 = vmatpush1.msra.mxu0 0.0
    %511 = vmatprep.subr.mxu0 0.0
    %512 = vmatpush1.msra.mxu0 0.0
    %513 = vmatprep.subr.mxu0 0.0
    %514 = vmatpush1.msra.mxu0 0.0
    %515 = vmatprep.subr.mxu0 0.0
    %516 = vmatpush1.msra.mxu0 0.0
    %517 = vmatprep.subr.mxu0 0.0
    %518 = vmatpush1.msra.mxu0 0.0
    %519 = vmatprep.subr.mxu0 0.0
    %520 = vmatpush1.msra.mxu0 0.0
    %521 = vmatprep.subr.mxu0 0.0
    %522 = vmatpush1.msra.mxu0 0.0
    %523 = vmatprep.subr.mxu0 0.0
    %524 = vmatpush1.msra.mxu0 0.0
    %525 = vmatprep.subr.mxu0 0.0
    %526 = vmatpush1.msra.mxu0 0.0
    %527 = vmatprep.subr.mxu0 0.0
    %528 = vmatpush1.msra.mxu0 0.0
    %529 = vmatprep.subr.mxu0 0.0
    %530 = vmatpush1.msra.mxu0 0.0
    %531 = vmatprep.subr.mxu0 0.0
    %532 = vmatpush1.msra.mxu0 0.0
    %533 = vmatprep.subr.mxu0 0.0
    %534 = vmatpush1.msra.mxu0 0.0
    %535 = vmatprep.subr.mxu0 0.0
    %536 = vmatpush1.msra.mxu0 0.0
    %537 = vmatprep.subr.mxu0 0.0
    %538 = vmatpush1.msra.mxu0 0.0
    %539 = vmatprep.subr.mxu0 0.0
    %540 = vmatpush1.msra.mxu0 0.0
    %541 = vmatprep.subr.mxu0 0.0
    %542 = vmatpush1.msra.mxu0 0.0
    %543 = vmatprep.subr.mxu0 0.0
    %544 = vmatpush1.msra.mxu0 0.0
    %545 = vmatprep.subr.mxu0 0.0
    %546 = vmatpush1.msra.mxu0 0.0
    %547 = vmatprep.subr.mxu0 0.0
    %548 = vmatpush1.msra.mxu0 0.0
    %549 = vmatprep.mubr.f32.mxu0 0.0
    %550 = vmatmul.mubr.f32.gmra.mrb[0].mxu0 %v483
    %v551 = vpop.f32.mrb[0].mxu0
    %v552 = vadd.f32 0.0, %v551
    %v553 = vpop.f32.mrb[0].mxu0
    %554 = vdwg.mxu0
    %v555 = vadd.f32 %v399, %v552
    %v556 = vxor.u32 %v555, 2147483648
    %v557 = vmul.f32 %v556, 1.442695
    %v558 = vpow.pop %v557
    %v559 = vadd.f32 %v558, 1.0
    %v560 = vrcp.pop %v559
    %v561 = vmul.f32 1.0, %v560
    %v563 = vlaneseq
    %v564 = vshrl.u32 %v563, 7
    %v565 = vsub.s32 0, %v564
    %v566 = vrot.slane %v481, %v565
    %567 = vrot.lane.b32.xlu0 %v566, 64
    %v568 = vpop.permute.xlu0 %567
    %v570 = vadd.f32 %v552, %v568
    %572 = vrot.lane.b32.xlu0 %v570, 64
    %v573 = vpop.permute.xlu0 %572
    %v575 = vmul.f32 %v561, %v573
    %577 = vrot.lane.b32.xlu0 %v575, 64
    %v578 = vpop.permute.xlu0 %577
    %v580 = vadd.f32 %v399, %v578
    %v581 = vtanh.pop %v580
    %v582 = vsub.f32 1.0, %v561
    %584 = vrot.lane.b32.xlu0 %v581, 96
    %v585 = vpop.permute.xlu0 %584
    %v587 = vmul.f32 %v582, %v585
    %v588 = vmul.f32 %v561, 0.0
    %v589 = vadd.f32 %v587, %v588
    %v590 = vmul.f32 %v211, %v589
    %v591 = vsub.f32 1.0, %v47
    %593 = vset.pattern.permute.xlu0 0
    %594 = vperm.xlu0 %593, %v591
    %v595 = vpop.permute.xlu0 %594
    %v597 = vmul.f32 %v595, 0.0
    %v598 = vadd.f32 %v590, %v597
    %600 = vrot.lane.b32.xlu0 %v590, 96
    %v601 = vpop.permute.xlu0 %600
    %603 = vst.msk [vmem:[%s12] sm:$0xff] %vm283, %v601
    %v604 = vadd.f32 %v590, 0.0
    %606 = vrot.lane.b32.xlu0 %v598, 96
    %v607 = vpop.permute.xlu0 %606
    %v608 = vsel %vm283, %v607, 0
    %610 = vmatprep.subr.mxu0 0.0
    %611 = vmatpush1.msra.mxu0 %v477
    %612 = vmatprep.subr.mxu0 0.0
    %613 = vmatpush1.msra.mxu0 %v478
    %614 = vmatprep.subr.mxu0 0.0
    %615 = vmatpush1.msra.mxu0 %v479
    %616 = vmatprep.subr.mxu0 0.0
    %617 = vmatpush1.msra.mxu0 %v480
    %618 = vmatprep.subr.mxu0 0.0
    %619 = vmatpush1.msra.mxu0 0.0
    %620 = vmatprep.subr.mxu0 0.0
    %621 = vmatpush1.msra.mxu0 0.0
    %622 = vmatprep.subr.mxu0 0.0
    %623 = vmatpush1.msra.mxu0 0.0
    %624 = vmatprep.subr.mxu0 0.0
    %625 = vmatpush1.msra.mxu0 0.0
    %626 = vmatprep.subr.mxu0 0.0
    %627 = vmatpush1.msra.mxu0 0.0
    %628 = vmatprep.subr.mxu0 0.0
    %629 = vmatpush1.msra.mxu0 0.0
    %630 = vmatprep.subr.mxu0 0.0
    %631 = vmatpush1.msra.mxu0 0.0
    %632 = vmatprep.subr.mxu0 0.0
    %633 = vmatpush1.msra.mxu0 0.0
    %634 = vmatprep.subr.mxu0 0.0
    %635 = vmatpush1.msra.mxu0 0.0
    %636 = vmatprep.subr.mxu0 0.0
    %637 = vmatpush1.msra.mxu0 0.0
    %638 = vmatprep.subr.mxu0 0.0
    %639 = vmatpush1.msra.mxu0 0.0
    %640 = vmatprep.subr.mxu0 0.0
    %641 = vmatpush1.msra.mxu0 0.0
    %642 = vmatprep.subr.mxu0 0.0
    %643 = vmatpush1.msra.mxu0 0.0
    %644 = vmatprep.subr.mxu0 0.0
    %645 = vmatpush1.msra.mxu0 0.0
    %646 = vmatprep.subr.mxu0 0.0
    %647 = vmatpush1.msra.mxu0 0.0
    %648 = vmatprep.subr.mxu0 0.0
    %649 = vmatpush1.msra.mxu0 0.0
    %650 = vmatprep.subr.mxu0 0.0
    %651 = vmatpush1.msra.mxu0 0.0
    %652 = vmatprep.subr.mxu0 0.0
    %653 = vmatpush1.msra.mxu0 0.0
    %654 = vmatprep.subr.mxu0 0.0
    %655 = vmatpush1.msra.mxu0 0.0
    %656 = vmatprep.subr.mxu0 0.0
    %657 = vmatpush1.msra.mxu0 0.0
    %658 = vmatprep.subr.mxu0 0.0
    %659 = vmatpush1.msra.mxu0 0.0
    %660 = vmatprep.subr.mxu0 0.0
    %661 = vmatpush1.msra.mxu0 0.0
    %662 = vmatprep.subr.mxu0 0.0
    %663 = vmatpush1.msra.mxu0 0.0
    %664 = vmatprep.subr.mxu0 0.0
    %665 = vmatpush1.msra.mxu0 0.0
    %666 = vmatprep.subr.mxu0 0.0
    %667 = vmatpush1.msra.mxu0 0.0
    %668 = vmatprep.subr.mxu0 0.0
    %669 = vmatpush1.msra.mxu0 0.0
    %670 = vmatprep.subr.mxu0 0.0
    %671 = vmatpush1.msra.mxu0 0.0
    %672 = vmatprep.subr.mxu0 0.0
    %673 = vmatpush1.msra.mxu0 0.0
    %674 = vmatprep.mubr.f32.mxu0 0.0
    %675 = vmatmul.mubr.f32.gmra.mrb[0].mxu0 %v608
    %v676 = vpop.f32.mrb[0].mxu0
    %v677 = vadd.f32 0.0, %v676
    %v678 = vpop.f32.mrb[0].mxu0
    %679 = vdwg.mxu0
    %v680 = vadd.f32 %v439, %v677
    %v681 = vxor.u32 %v680, 2147483648
    %v682 = vmul.f32 %v681, 1.442695
    %v683 = vpow.pop %v682
    %v684 = vadd.f32 %v683, 1.0
    %v685 = vrcp.pop %v684
    %v686 = vmul.f32 1.0, %v685
    %v687 = vadd.f32 %v677, %v568
    %689 = vrot.lane.b32.xlu0 %v687, 64
    %v690 = vpop.permute.xlu0 %689
    %v692 = vmul.f32 %v686, %v690
    %694 = vrot.lane.b32.xlu0 %v692, 64
    %v695 = vpop.permute.xlu0 %694
    %v697 = vadd.f32 %v439, %v695
    %v698 = vtanh.pop %v697
    %v699 = vsub.f32 1.0, %v686
    %701 = vrot.lane.b32.xlu0 %v698, 96
    %v702 = vpop.permute.xlu0 %701
    %v704 = vmul.f32 %v699, %v702
    %v705 = vmul.f32 %v686, %v598
    %v706 = vadd.f32 %v704, %v705
    %v707 = vmul.f32 %v211, %v706
    %v708 = vmul.f32 %v595, %v598
    %v709 = vadd.f32 %v707, %v708
    %711 = vrot.lane.b32.xlu0 %v707, 96
    %v712 = vpop.permute.xlu0 %711
    %714 = vst.msk [vmem:[%s13] sm:$0xff] %vm283, %v712
    %716 = vrot.lane.b32.xlu0 %v709, 96
    %v717 = vpop.permute.xlu0 %716
    %v718 = vsel %vm283, %v717, 0
    %720 = vmatprep.subr.mxu0 0.0
    %721 = vmatpush1.msra.mxu0 %v477
    %722 = vmatprep.subr.mxu0 0.0
    %723 = vmatpush1.msra.mxu0 %v478
    %724 = vmatprep.subr.mxu0 0.0
    %725 = vmatpush1.msra.mxu0 %v479
    %726 = vmatprep.subr.mxu0 0.0
    %727 = vmatpush1.msra.mxu0 %v480
    %728 = vmatprep.subr.mxu0 0.0
    %729 = vmatpush1.msra.mxu0 0.0
    %730 = vmatprep.subr.mxu0 0.0
    %731 = vmatpush1.msra.mxu0 0.0
    %732 = vmatprep.subr.mxu0 0.0
    %733 = vmatpush1.msra.mxu0 0.0
    %734 = vmatprep.subr.mxu0 0.0
    %735 = vmatpush1.msra.mxu0 0.0
    %736 = vmatprep.subr.mxu0 0.0
    %737 = vmatpush1.msra.mxu0 0.0
    %738 = vmatprep.subr.mxu0 0.0
    %739 = vmatpush1.msra.mxu0 0.0
    %740 = vmatprep.subr.mxu0 0.0
    %741 = vmatpush1.msra.mxu0 0.0
    %742 = vmatprep.subr.mxu0 0.0
    %743 = vmatpush1.msra.mxu0 0.0
    %744 = vmatprep.subr.mxu0 0.0
    %745 = vmatpush1.msra.mxu0 0.0
    %746 = vmatprep.subr.mxu0 0.0
    %747 = vmatpush1.msra.mxu0 0.0
    %748 = vmatprep.subr.mxu0 0.0
    %749 = vmatpush1.msra.mxu0 0.0
    %750 = vmatprep.subr.mxu0 0.0
    %751 = vmatpush1.msra.mxu0 0.0
    %752 = vmatprep.subr.mxu0 0.0
    %753 = vmatpush1.msra.mxu0 0.0
    %754 = vmatprep.subr.mxu0 0.0
    %755 = vmatpush1.msra.mxu0 0.0
    %756 = vmatprep.subr.mxu0 0.0
    %757 = vmatpush1.msra.mxu0 0.0
    %758 = vmatprep.subr.mxu0 0.0
    %759 = vmatpush1.msra.mxu0 0.0
    %760 = vmatprep.subr.mxu0 0.0
    %761 = vmatpush1.msra.mxu0 0.0
    %762 = vmatprep.subr.mxu0 0.0
    %763 = vmatpush1.msra.mxu0 0.0
    %764 = vmatprep.subr.mxu0 0.0
    %765 = vmatpush1.msra.mxu0 0.0
    %766 = vmatprep.subr.mxu0 0.0
    %767 = vmatpush1.msra.mxu0 0.0
    %768 = vmatprep.subr.mxu0 0.0
    %769 = vmatpush1.msra.mxu0 0.0
    %770 = vmatprep.subr.mxu0 0.0
    %771 = vmatpush1.msra.mxu0 0.0
    %772 = vmatprep.subr.mxu0 0.0
    %773 = vmatpush1.msra.mxu0 0.0
    %774 = vmatprep.subr.mxu0 0.0
    %775 = vmatpush1.msra.mxu0 0.0
    %776 = vmatprep.subr.mxu0 0.0
    %777 = vmatpush1.msra.mxu0 0.0
    %778 = vmatprep.subr.mxu0 0.0
    %779 = vmatpush1.msra.mxu0 0.0
    %780 = vmatprep.subr.mxu0 0.0
    %781 = vmatpush1.msra.mxu0 0.0
    %782 = vmatprep.subr.mxu0 0.0
    %783 = vmatpush1.msra.mxu0 0.0
    %784 = vmatprep.mubr.f32.mxu0 0.0
    %785 = vmatmul.mubr.f32.gmra.mrb[0].mxu0 %v718
    %v786 = vpop.f32.mrb[0].mxu0
    %v787 = vadd.f32 0.0, %v786
    %v788 = vpop.f32.mrb[0].mxu0
    %789 = vdwg.mxu0
    %v790 = vadd.f32 %v404, %v787
    %v791 = vxor.u32 %v790, 2147483648
    %v792 = vmul.f32 %v791, 1.442695
    %v793 = vpow.pop %v792
    %v794 = vadd.f32 %v793, 1.0
    %v795 = vrcp.pop %v794
    %v796 = vmul.f32 1.0, %v795
    %v797 = vadd.f32 %v787, %v568
    %799 = vrot.lane.b32.xlu0 %v797, 64
    %v800 = vpop.permute.xlu0 %799
    %v802 = vmul.f32 %v796, %v800
    %804 = vrot.lane.b32.xlu0 %v802, 64
    %v805 = vpop.permute.xlu0 %804
    %v807 = vadd.f32 %v404, %v805
    %v808 = vtanh.pop %v807
    %v809 = vsub.f32 1.0, %v796
    %811 = vrot.lane.b32.xlu0 %v808, 96
    %v812 = vpop.permute.xlu0 %811
    %v814 = vmul.f32 %v809, %v812
    %v815 = vmul.f32 %v796, %v709
    %v816 = vadd.f32 %v814, %v815
    %v817 = vmul.f32 %v216, %v816
    %v818 = vsub.f32 1.0, %v48
    %820 = vset.pattern.permute.xlu0 0
    %821 = vperm.xlu0 %820, %v818
    %v822 = vpop.permute.xlu0 %821
    %v824 = vmul.f32 %v822, %v709
    %v825 = vadd.f32 %v817, %v824
    %827 = vrot.lane.b32.xlu0 %v817, 96
    %v828 = vpop.permute.xlu0 %827
    %s830 = scalar_lea.vmem %s12, 8
    %831 = vst.msk [vmem:[%s830] sm:$0xff] %vm283, %v828
    %v832 = vadd.f32 %v604, %v817
    %834 = vrot.lane.b32.xlu0 %v825, 96
    %v835 = vpop.permute.xlu0 %834
    %v836 = vsel %vm283, %v835, 0
    %838 = vmatprep.subr.mxu0 0.0
    %839 = vmatpush1.msra.mxu0 %v477
    %840 = vmatprep.subr.mxu0 0.0
    %841 = vmatpush1.msra.mxu0 %v478
    %842 = vmatprep.subr.mxu0 0.0
    %843 = vmatpush1.msra.mxu0 %v479
    %844 = vmatprep.subr.mxu0 0.0
    %845 = vmatpush1.msra.mxu0 %v480
    %846 = vmatprep.subr.mxu0 0.0
    %847 = vmatpush1.msra.mxu0 0.0
    %848 = vmatprep.subr.mxu0 0.0
    %849 = vmatpush1.msra.mxu0 0.0
    %850 = vmatprep.subr.mxu0 0.0
    %851 = vmatpush1.msra.mxu0 0.0
    %852 = vmatprep.subr.mxu0 0.0
    %853 = vmatpush1.msra.mxu0 0.0
    %854 = vmatprep.subr.mxu0 0.0
    %855 = vmatpush1.msra.mxu0 0.0
    %856 = vmatprep.subr.mxu0 0.0
    %857 = vmatpush1.msra.mxu0 0.0
    %858 = vmatprep.subr.mxu0 0.0
    %859 = vmatpush1.msra.mxu0 0.0
    %860 = vmatprep.subr.mxu0 0.0
    %861 = vmatpush1.msra.mxu0 0.0
    %862 = vmatprep.subr.mxu0 0.0
    %863 = vmatpush1.msra.mxu0 0.0
    %864 = vmatprep.subr.mxu0 0.0
    %865 = vmatpush1.msra.mxu0 0.0
    %866 = vmatprep.subr.mxu0 0.0
    %867 = vmatpush1.msra.mxu0 0.0
    %868 = vmatprep.subr.mxu0 0.0
    %869 = vmatpush1.msra.mxu0 0.0
    %870 = vmatprep.subr.mxu0 0.0
    %871 = vmatpush1.msra.mxu0 0.0
    %872 = vmatprep.subr.mxu0 0.0
    %873 = vmatpush1.msra.mxu0 0.0
    %874 = vmatprep.subr.mxu0 0.0
    %875 = vmatpush1.msra.mxu0 0.0
    %876 = vmatprep.subr.mxu0 0.0
    %877 = vmatpush1.msra.mxu0 0.0
    %878 = vmatprep.subr.mxu0 0.0
    %879 = vmatpush1.msra.mxu0 0.0
    %880 = vmatprep.subr.mxu0 0.0
    %881 = vmatpush1.msra.mxu0 0.0
    %882 = vmatprep.subr.mxu0 0.0
    %883 = vmatpush1.msra.mxu0 0.0
    %884 = vmatprep.subr.mxu0 0.0
    %885 = vmatpush1.msra.mxu0 0.0
    %886 = vmatprep.subr.mxu0 0.0
    %887 = vmatpush1.msra.mxu0 0.0
    %888 = vmatprep.subr.mxu0 0.0
    %889 = vmatpush1.msra.mxu0 0.0
    %890 = vmatprep.subr.mxu0 0.0
    %891 = vmatpush1.msra.mxu0 0.0
    %892 = vmatprep.subr.mxu0 0.0
    %893 = vmatpush1.msra.mxu0 0.0
    %894 = vmatprep.subr.mxu0 0.0
    %895 = vmatpush1.msra.mxu0 0.0
    %896 = vmatprep.subr.mxu0 0.0
    %897 = vmatpush1.msra.mxu0 0.0
    %898 = vmatprep.subr.mxu0 0.0
    %899 = vmatpush1.msra.mxu0 0.0
    %900 = vmatprep.subr.mxu0 0.0
    %901 = vmatpush1.msra.mxu0 0.0
    %902 = vmatprep.mubr.f32.mxu0 0.0
    %903 = vmatmul.mubr.f32.gmra.mrb[0].mxu0 %v836
    %v904 = vpop.f32.mrb[0].mxu0
    %v905 = vadd.f32 0.0, %v904
    %v906 = vpop.f32.mrb[0].mxu0
    %907 = vdwg.mxu0
    %v908 = vadd.f32 %v444, %v905
    %v909 = vxor.u32 %v908, 2147483648
    %v910 = vmul.f32 %v909, 1.442695
    %v911 = vpow.pop %v910
    %v912 = vadd.f32 %v911, 1.0
    %v913 = vrcp.pop %v912
    %v914 = vmul.f32 1.0, %v913
    %v915 = vadd.f32 %v905, %v568
    %917 = vrot.lane.b32.xlu0 %v915, 64
    %v918 = vpop.permute.xlu0 %917
    %v920 = vmul.f32 %v914, %v918
    %922 = vrot.lane.b32.xlu0 %v920, 64
    %v923 = vpop.permute.xlu0 %922
    %v925 = vadd.f32 %v444, %v923
    %v926 = vtanh.pop %v925
    %v927 = vsub.f32 1.0, %v914
    %929 = vrot.lane.b32.xlu0 %v926, 96
    %v930 = vpop.permute.xlu0 %929
    %v932 = vmul.f32 %v927, %v930
    %v933 = vmul.f32 %v914, %v825
    %v934 = vadd.f32 %v932, %v933
    %v935 = vmul.f32 %v216, %v934
    %v936 = vmul.f32 %v822, %v825
    %v937 = vadd.f32 %v935, %v936
    %939 = vrot.lane.b32.xlu0 %v935, 96
    %v940 = vpop.permute.xlu0 %939
    %s942 = scalar_lea.vmem %s13, 8
    %943 = vst.msk [vmem:[%s942] sm:$0xff] %vm283, %v940
    %945 = vrot.lane.b32.xlu0 %v937, 96
    %v946 = vpop.permute.xlu0 %945
    %v947 = vsel %vm283, %v946, 0
    %949 = vmatprep.subr.mxu0 0.0
    %950 = vmatpush1.msra.mxu0 %v477
    %951 = vmatprep.subr.mxu0 0.0
    %952 = vmatpush1.msra.mxu0 %v478
    %953 = vmatprep.subr.mxu0 0.0
    %954 = vmatpush1.msra.mxu0 %v479
    %955 = vmatprep.subr.mxu0 0.0
    %956 = vmatpush1.msra.mxu0 %v480
    %957 = vmatprep.subr.mxu0 0.0
    %958 = vmatpush1.msra.mxu0 0.0
    %959 = vmatprep.subr.mxu0 0.0
    %960 = vmatpush1.msra.mxu0 0.0
    %961 = vmatprep.subr.mxu0 0.0
    %962 = vmatpush1.msra.mxu0 0.0
    %963 = vmatprep.subr.mxu0 0.0
    %964 = vmatpush1.msra.mxu0 0.0
    %965 = vmatprep.subr.mxu0 0.0
    %966 = vmatpush1.msra.mxu0 0.0
    %967 = vmatprep.subr.mxu0 0.0
    %968 = vmatpush1.msra.mxu0 0.0
    %969 = vmatprep.subr.mxu0 0.0
    %970 = vmatpush1.msra.mxu0 0.0
    %971 = vmatprep.subr.mxu0 0.0
    %972 = vmatpush1.msra.mxu0 0.0
    %973 = vmatprep.subr.mxu0 0.0
    %974 = vmatpush1.msra.mxu0 0.0
    %975 = vmatprep.subr.mxu0 0.0
    %976 = vmatpush1.msra.mxu0 0.0
    %977 = vmatprep.subr.mxu0 0.0
    %978 = vmatpush1.msra.mxu0 0.0
    %979 = vmatprep.subr.mxu0 0.0
    %980 = vmatpush1.msra.mxu0 0.0
    %981 = vmatprep.subr.mxu0 0.0
    %982 = vmatpush1.msra.mxu0 0.0
    %983 = vmatprep.subr.mxu0 0.0
    %984 = vmatpush1.msra.mxu0 0.0
    %985 = vmatprep.subr.mxu0 0.0
    %986 = vmatpush1.msra.mxu0 0.0
    %987 = vmatprep.subr.mxu0 0.0
    %988 = vmatpush1.msra.mxu0 0.0
    %989 = vmatprep.subr.mxu0 0.0
    %990 = vmatpush1.msra.mxu0 0.0
    %991 = vmatprep.subr.mxu0 0.0
    %992 = vmatpush1.msra.mxu0 0.0
    %993 = vmatprep.subr.mxu0 0.0
    %994 = vmatpush1.msra.mxu0 0.0
    %995 = vmatprep.subr.mxu0 0.0
    %996 = vmatpush1.msra.mxu0 0.0
    %997 = vmatprep.subr.mxu0 0.0
    %998 = vmatpush1.msra.mxu0 0.0
    %999 = vmatprep.subr.mxu0 0.0
    %1000 = vmatpush1.msra.mxu0 0.0
    %1001 = vmatprep.subr.mxu0 0.0
    %1002 = vmatpush1.msra.mxu0 0.0
    %1003 = vmatprep.subr.mxu0 0.0
    %1004 = vmatpush1.msra.mxu0 0.0
    %1005 = vmatprep.subr.mxu0 0.0
    %1006 = vmatpush1.msra.mxu0 0.0
    %1007 = vmatprep.subr.mxu0 0.0
    %1008 = vmatpush1.msra.mxu0 0.0
    %1009 = vmatprep.subr.mxu0 0.0
    %1010 = vmatpush1.msra.mxu0 0.0
    %1011 = vmatprep.subr.mxu0 0.0
    %1012 = vmatpush1.msra.mxu0 0.0
    %1013 = vmatprep.mubr.f32.mxu0 0.0
    %1014 = vmatmul.mubr.f32.gmra.mrb[0].mxu0 %v947
    %v1015 = vpop.f32.mrb[0].mxu0
    %v1016 = vadd.f32 0.0, %v1015
    %v1017 = vpop.f32.mrb[0].mxu0
    %1018 = vdwg.mxu0
    %v1019 = vadd.f32 %v409, %v1016
    %v1020 = vxor.u32 %v1019, 2147483648
    %v1021 = vmul.f32 %v1020, 1.442695
    %v1022 = vpow.pop %v1021
    %v1023 = vadd.f32 %v1022, 1.0
    %v1024 = vrcp.pop %v1023
    %v1025 = vmul.f32 1.0, %v1024
    %v1026 = vadd.f32 %v1016, %v568
    %1028 = vrot.lane.b32.xlu0 %v1026, 64
    %v1029 = vpop.permute.xlu0 %1028
    %v1031 = vmul.f32 %v1025, %v1029
    %1033 = vrot.lane.b32.xlu0 %v1031, 64
    %v1034 = vpop.permute.xlu0 %1033
    %v1036 = vadd.f32 %v409, %v1034
    %v1037 = vtanh.pop %v1036
    %v1038 = vsub.f32 1.0, %v1025
    %1040 = vrot.lane.b32.xlu0 %v1037, 96
    %v1041 = vpop.permute.xlu0 %1040
    %v1043 = vmul.f32 %v1038, %v1041
    %v1044 = vmul.f32 %v1025, %v937
    %v1045 = vadd.f32 %v1043, %v1044
    %v1046 = vmul.f32 %v221, %v1045
    %v1047 = vsub.f32 1.0, %v49
    %1049 = vset.pattern.permute.xlu0 0
    %1050 = vperm.xlu0 %1049, %v1047
    %v1051 = vpop.permute.xlu0 %1050
    %v1053 = vmul.f32 %v1051, %v937
    %v1054 = vadd.f32 %v1046, %v1053
    %1056 = vrot.lane.b32.xlu0 %v1046, 96
    %v1057 = vpop.permute.xlu0 %1056
    %s1059 = scalar_lea.vmem %s12, 16
    %1060 = vst.msk [vmem:[%s1059] sm:$0xff] %vm283, %v1057
    %v1061 = vadd.f32 %v832, %v1046
    %1063 = vrot.lane.b32.xlu0 %v1054, 96
    %v1064 = vpop.permute.xlu0 %1063
    %v1065 = vsel %vm283, %v1064, 0
    %1067 = vmatprep.subr.mxu0 0.0
    %1068 = vmatpush1.msra.mxu0 %v477
    %1069 = vmatprep.subr.mxu0 0.0
    %1070 = vmatpush1.msra.mxu0 %v478
    %1071 = vmatprep.subr.mxu0 0.0
    %1072 = vmatpush1.msra.mxu0 %v479
    %1073 = vmatprep.subr.mxu0 0.0
    %1074 = vmatpush1.msra.mxu0 %v480
    %1075 = vmatprep.subr.mxu0 0.0
    %1076 = vmatpush1.msra.mxu0 0.0
    %1077 = vmatprep.subr.mxu0 0.0
    %1078 = vmatpush1.msra.mxu0 0.0
    %1079 = vmatprep.subr.mxu0 0.0
    %1080 = vmatpush1.msra.mxu0 0.0
    %1081 = vmatprep.subr.mxu0 0.0
    %1082 = vmatpush1.msra.mxu0 0.0
    %1083 = vmatprep.subr.mxu0 0.0
    %1084 = vmatpush1.msra.mxu0 0.0
    %1085 = vmatprep.subr.mxu0 0.0
    %1086 = vmatpush1.msra.mxu0 0.0
    %1087 = vmatprep.subr.mxu0 0.0
    %1088 = vmatpush1.msra.mxu0 0.0
    %1089 = vmatprep.subr.mxu0 0.0
    %1090 = vmatpush1.msra.mxu0 0.0
    %1091 = vmatprep.subr.mxu0 0.0
    %1092 = vmatpush1.msra.mxu0 0.0
    %1093 = vmatprep.subr.mxu0 0.0
    %1094 = vmatpush1.msra.mxu0 0.0
    %1095 = vmatprep.subr.mxu0 0.0
    %1096 = vmatpush1.msra.mxu0 0.0
    %1097 = vmatprep.subr.mxu0 0.0
    %1098 = vmatpush1.msra.mxu0 0.0
    %1099 = vmatprep.subr.mxu0 0.0
    %1100 = vmatpush1.msra.mxu0 0.0
    %1101 = vmatprep.subr.mxu0 0.0
    %1102 = vmatpush1.msra.mxu0 0.0
    %1103 = vmatprep.subr.mxu0 0.0
    %1104 = vmatpush1.msra.mxu0 0.0
    %1105 = vmatprep.subr.mxu0 0.0
    %1106 = vmatpush1.msra.mxu0 0.0
    %1107 = vmatprep.subr.mxu0 0.0
    %1108 = vmatpush1.msra.mxu0 0.0
    %1109 = vmatprep.subr.mxu0 0.0
    %1110 = vmatpush1.msra.mxu0 0.0
    %1111 = vmatprep.subr.mxu0 0.0
    %1112 = vmatpush1.msra.mxu0 0.0
    %1113 = vmatprep.subr.mxu0 0.0
    %1114 = vmatpush1.msra.mxu0 0.0
    %1115 = vmatprep.subr.mxu0 0.0
    %1116 = vmatpush1.msra.mxu0 0.0
    %1117 = vmatprep.subr.mxu0 0.0
    %1118 = vmatpush1.msra.mxu0 0.0
    %1119 = vmatprep.subr.mxu0 0.0
    %1120 = vmatpush1.msra.mxu0 0.0
    %1121 = vmatprep.subr.mxu0 0.0
    %1122 = vmatpush1.msra.mxu0 0.0
    %1123 = vmatprep.subr.mxu0 0.0
    %1124 = vmatpush1.msra.mxu0 0.0
    %1125 = vmatprep.subr.mxu0 0.0
    %1126 = vmatpush1.msra.mxu0 0.0
    %1127 = vmatprep.subr.mxu0 0.0
    %1128 = vmatpush1.msra.mxu0 0.0
    %1129 = vmatprep.subr.mxu0 0.0
    %1130 = vmatpush1.msra.mxu0 0.0
    %1131 = vmatprep.mubr.f32.mxu0 0.0
    %1132 = vmatmul.mubr.f32.gmra.mrb[0].mxu0 %v1065
    %v1133 = vpop.f32.mrb[0].mxu0
    %v1134 = vadd.f32 0.0, %v1133
    %v1135 = vpop.f32.mrb[0].mxu0
    %1136 = vdwg.mxu0
    %v1137 = vadd.f32 %v449, %v1134
    %v1138 = vxor.u32 %v1137, 2147483648
    %v1139 = vmul.f32 %v1138, 1.442695
    %v1140 = vpow.pop %v1139
    %v1141 = vadd.f32 %v1140, 1.0
    %v1142 = vrcp.pop %v1141
    %v1143 = vmul.f32 1.0, %v1142
    %v1144 = vadd.f32 %v1134, %v568
    %1146 = vrot.lane.b32.xlu0 %v1144, 64
    %v1147 = vpop.permute.xlu0 %1146
    %v1149 = vmul.f32 %v1143, %v1147
    %1151 = vrot.lane.b32.xlu0 %v1149, 64
    %v1152 = vpop.permute.xlu0 %1151
    %v1154 = vadd.f32 %v449, %v1152
    %v1155 = vtanh.pop %v1154
    %v1156 = vsub.f32 1.0, %v1143
    %1158 = vrot.lane.b32.xlu0 %v1155, 96
    %v1159 = vpop.permute.xlu0 %1158
    %v1161 = vmul.f32 %v1156, %v1159
    %v1162 = vmul.f32 %v1143, %v1054
    %v1163 = vadd.f32 %v1161, %v1162
    %v1164 = vmul.f32 %v221, %v1163
    %v1165 = vmul.f32 %v1051, %v1054
    %v1166 = vadd.f32 %v1164, %v1165
    %1168 = vrot.lane.b32.xlu0 %v1164, 96
    %v1169 = vpop.permute.xlu0 %1168
    %s1171 = scalar_lea.vmem %s13, 16
    %1172 = vst.msk [vmem:[%s1171] sm:$0xff] %vm283, %v1169
    %1174 = vrot.lane.b32.xlu0 %v1166, 96
    %v1175 = vpop.permute.xlu0 %1174
    %v1176 = vsel %vm283, %v1175, 0
    %1178 = vmatprep.subr.mxu0 0.0
    %1179 = vmatpush1.msra.mxu0 %v477
    %1180 = vmatprep.subr.mxu0 0.0
    %1181 = vmatpush1.msra.mxu0 %v478
    %1182 = vmatprep.subr.mxu0 0.0
    %1183 = vmatpush1.msra.mxu0 %v479
    %1184 = vmatprep.subr.mxu0 0.0
    %1185 = vmatpush1.msra.mxu0 %v480
    %1186 = vmatprep.subr.mxu0 0.0
    %1187 = vmatpush1.msra.mxu0 0.0
    %1188 = vmatprep.subr.mxu0 0.0
    %1189 = vmatpush1.msra.mxu0 0.0
    %1190 = vmatprep.subr.mxu0 0.0
    %1191 = vmatpush1.msra.mxu0 0.0
    %1192 = vmatprep.subr.mxu0 0.0
    %1193 = vmatpush1.msra.mxu0 0.0
    %1194 = vmatprep.subr.mxu0 0.0
    %1195 = vmatpush1.msra.mxu0 0.0
    %1196 = vmatprep.subr.mxu0 0.0
    %1197 = vmatpush1.msra.mxu0 0.0
    %1198 = vmatprep.subr.mxu0 0.0
    %1199 = vmatpush1.msra.mxu0 0.0
    %1200 = vmatprep.subr.mxu0 0.0
    %1201 = vmatpush1.msra.mxu0 0.0
    %1202 = vmatprep.subr.mxu0 0.0
    %1203 = vmatpush1.msra.mxu0 0.0
    %1204 = vmatprep.subr.mxu0 0.0
    %1205 = vmatpush1.msra.mxu0 0.0
    %1206 = vmatprep.subr.mxu0 0.0
    %1207 = vmatpush1.msra.mxu0 0.0
    %1208 = vmatprep.subr.mxu0 0.0
    %1209 = vmatpush1.msra.mxu0 0.0
    %1210 = vmatprep.subr.mxu0 0.0
    %1211 = vmatpush1.msra.mxu0 0.0
    %1212 = vmatprep.subr.mxu0 0.0
    %1213 = vmatpush1.msra.mxu0 0.0
    %1214 = vmatprep.subr.mxu0 0.0
    %1215 = vmatpush1.msra.mxu0 0.0
    %1216 = vmatprep.subr.mxu0 0.0
    %1217 = vmatpush1.msra.mxu0 0.0
    %1218 = vmatprep.subr.mxu0 0.0
    %1219 = vmatpush1.msra.mxu0 0.0
    %1220 = vmatprep.subr.mxu0 0.0
    %1221 = vmatpush1.msra.mxu0 0.0
    %1222 = vmatprep.subr.mxu0 0.0
    %1223 = vmatpush1.msra.mxu0 0.0
    %1224 = vmatprep.subr.mxu0 0.0
    %1225 = vmatpush1.msra.mxu0 0.0
    %1226 = vmatprep.subr.mxu0 0.0
    %1227 = vmatpush1.msra.mxu0 0.0
    %1228 = vmatprep.subr.mxu0 0.0
    %1229 = vmatpush1.msra.mxu0 0.0
    %1230 = vmatprep.subr.mxu0 0.0
    %1231 = vmatpush1.msra.mxu0 0.0
    %1232 = vmatprep.subr.mxu0 0.0
    %1233 = vmatpush1.msra.mxu0 0.0
    %1234 = vmatprep.subr.mxu0 0.0
    %1235 = vmatpush1.msra.mxu0 0.0
    %1236 = vmatprep.subr.mxu0 0.0
    %1237 = vmatpush1.msra.mxu0 0.0
    %1238 = vmatprep.subr.mxu0 0.0
    %1239 = vmatpush1.msra.mxu0 0.0
    %1240 = vmatprep.subr.mxu0 0.0
    %1241 = vmatpush1.msra.mxu0 0.0
    %1242 = vmatprep.mubr.f32.mxu0 0.0
    %1243 = vmatmul.mubr.f32.gmra.mrb[0].mxu0 %v1176
    %v1244 = vpop.f32.mrb[0].mxu0
    %v1245 = vadd.f32 0.0, %v1244
    %v1246 = vpop.f32.mrb[0].mxu0
    %1247 = vdwg.mxu0
    %v1248 = vadd.f32 %v414, %v1245
    %v1249 = vxor.u32 %v1248, 2147483648
    %v1250 = vmul.f32 %v1249, 1.442695
    %v1251 = vpow.pop %v1250
    %v1252 = vadd.f32 %v1251, 1.0
    %v1253 = vrcp.pop %v1252
    %v1254 = vmul.f32 1.0, %v1253
    %v1255 = vadd.f32 %v1245, %v568
    %1257 = vrot.lane.b32.xlu0 %v1255, 64
    %v1258 = vpop.permute.xlu0 %1257
    %v1260 = vmul.f32 %v1254, %v1258
    %1262 = vrot.lane.b32.xlu0 %v1260, 64
    %v1263 = vpop.permute.xlu0 %1262
    %v1265 = vadd.f32 %v414, %v1263
    %v1266 = vtanh.pop %v1265
    %v1267 = vsub.f32 1.0, %v1254
    %1269 = vrot.lane.b32.xlu0 %v1266, 96
    %v1270 = vpop.permute.xlu0 %1269
    %v1272 = vmul.f32 %v1267, %v1270
    %v1273 = vmul.f32 %v1254, %v1166
    %v1274 = vadd.f32 %v1272, %v1273
    %v1275 = vmul.f32 %v226, %v1274
    %v1276 = vsub.f32 1.0, %v50
    %1278 = vset.pattern.permute.xlu0 0
    %1279 = vperm.xlu0 %1278, %v1276
    %v1280 = vpop.permute.xlu0 %1279
    %v1282 = vmul.f32 %v1280, %v1166
    %v1283 = vadd.f32 %v1275, %v1282
    %1285 = vrot.lane.b32.xlu0 %v1275, 96
    %v1286 = vpop.permute.xlu0 %1285
    %s1288 = scalar_lea.vmem %s12, 24
    %1289 = vst.msk [vmem:[%s1288] sm:$0xff] %vm283, %v1286
    %v1290 = vadd.f32 %v1061, %v1275
    %1292 = vrot.lane.b32.xlu0 %v1283, 96
    %v1293 = vpop.permute.xlu0 %1292
    %v1294 = vsel %vm283, %v1293, 0
    %1296 = vmatprep.subr.mxu0 0.0
    %1297 = vmatpush1.msra.mxu0 %v477
    %1298 = vmatprep.subr.mxu0 0.0
    %1299 = vmatpush1.msra.mxu0 %v478
    %1300 = vmatprep.subr.mxu0 0.0
    %1301 = vmatpush1.msra.mxu0 %v479
    %1302 = vmatprep.subr.mxu0 0.0
    %1303 = vmatpush1.msra.mxu0 %v480
    %1304 = vmatprep.subr.mxu0 0.0
    %1305 = vmatpush1.msra.mxu0 0.0
    %1306 = vmatprep.subr.mxu0 0.0
    %1307 = vmatpush1.msra.mxu0 0.0
    %1308 = vmatprep.subr.mxu0 0.0
    %1309 = vmatpush1.msra.mxu0 0.0
    %1310 = vmatprep.subr.mxu0 0.0
    %1311 = vmatpush1.msra.mxu0 0.0
    %1312 = vmatprep.subr.mxu0 0.0
    %1313 = vmatpush1.msra.mxu0 0.0
    %1314 = vmatprep.subr.mxu0 0.0
    %1315 = vmatpush1.msra.mxu0 0.0
    %1316 = vmatprep.subr.mxu0 0.0
    %1317 = vmatpush1.msra.mxu0 0.0
    %1318 = vmatprep.subr.mxu0 0.0
    %1319 = vmatpush1.msra.mxu0 0.0
    %1320 = vmatprep.subr.mxu0 0.0
    %1321 = vmatpush1.msra.mxu0 0.0
    %1322 = vmatprep.subr.mxu0 0.0
    %1323 = vmatpush1.msra.mxu0 0.0
    %1324 = vmatprep.subr.mxu0 0.0
    %1325 = vmatpush1.msra.mxu0 0.0
    %1326 = vmatprep.subr.mxu0 0.0
    %1327 = vmatpush1.msra.mxu0 0.0
    %1328 = vmatprep.subr.mxu0 0.0
    %1329 = vmatpush1.msra.mxu0 0.0
    %1330 = vmatprep.subr.mxu0 0.0
    %1331 = vmatpush1.msra.mxu0 0.0
    %1332 = vmatprep.subr.mxu0 0.0
    %1333 = vmatpush1.msra.mxu0 0.0
    %1334 = vmatprep.subr.mxu0 0.0
    %1335 = vmatpush1.msra.mxu0 0.0
    %1336 = vmatprep.subr.mxu0 0.0
    %1337 = vmatpush1.msra.mxu0 0.0
    %1338 = vmatprep.subr.mxu0 0.0
    %1339 = vmatpush1.msra.mxu0 0.0
    %1340 = vmatprep.subr.mxu0 0.0
    %1341 = vmatpush1.msra.mxu0 0.0
    %1342 = vmatprep.subr.mxu0 0.0
    %1343 = vmatpush1.msra.mxu0 0.0
    %1344 = vmatprep.subr.mxu0 0.0
    %1345 = vmatpush1.msra.mxu0 0.0
    %1346 = vmatprep.subr.mxu0 0.0
    %1347 = vmatpush1.msra.mxu0 0.0
    %1348 = vmatprep.subr.mxu0 0.0
    %1349 = vmatpush1.msra.mxu0 0.0
    %1350 = vmatprep.subr.mxu0 0.0
    %1351 = vmatpush1.msra.mxu0 0.0
    %1352 = vmatprep.subr.mxu0 0.0
    %1353 = vmatpush1.msra.mxu0 0.0
    %1354 = vmatprep.subr.mxu0 0.0
    %1355 = vmatpush1.msra.mxu0 0.0
    %1356 = vmatprep.subr.mxu0 0.0
    %1357 = vmatpush1.msra.mxu0 0.0
    %1358 = vmatprep.subr.mxu0 0.0
    %1359 = vmatpush1.msra.mxu0 0.0
    %1360 = vmatprep.mubr.f32.mxu0 0.0
    %1361 = vmatmul.mubr.f32.gmra.mrb[0].mxu0 %v1294
    %v1362 = vpop.f32.mrb[0].mxu0
    %v1363 = vadd.f32 0.0, %v1362
    %v1364 = vpop.f32.mrb[0].mxu0
    %1365 = vdwg.mxu0
    %v1366 = vadd.f32 %v454, %v1363
    %v1367 = vxor.u32 %v1366, 2147483648
    %v1368 = vmul.f32 %v1367, 1.442695
    %v1369 = vpow.pop %v1368
    %v1370 = vadd.f32 %v1369, 1.0
    %v1371 = vrcp.pop %v1370
    %v1372 = vmul.f32 1.0, %v1371
    %v1373 = vadd.f32 %v1363, %v568
    %1375 = vrot.lane.b32.xlu0 %v1373, 64
    %v1376 = vpop.permute.xlu0 %1375
    %v1378 = vmul.f32 %v1372, %v1376
    %1380 = vrot.lane.b32.xlu0 %v1378, 64
    %v1381 = vpop.permute.xlu0 %1380
    %v1383 = vadd.f32 %v454, %v1381
    %v1384 = vtanh.pop %v1383
    %v1385 = vsub.f32 1.0, %v1372
    %1387 = vrot.lane.b32.xlu0 %v1384, 96
    %v1388 = vpop.permute.xlu0 %1387
    %v1390 = vmul.f32 %v1385, %v1388
    %v1391 = vmul.f32 %v1372, %v1283
    %v1392 = vadd.f32 %v1390, %v1391
    %v1393 = vmul.f32 %v226, %v1392
    %v1394 = vmul.f32 %v1280, %v1283
    %v1395 = vadd.f32 %v1393, %v1394
    %1397 = vrot.lane.b32.xlu0 %v1393, 96
    %v1398 = vpop.permute.xlu0 %1397
    %s1400 = scalar_lea.vmem %s13, 24
    %1401 = vst.msk [vmem:[%s1400] sm:$0xff] %vm283, %v1398
    %1403 = vrot.lane.b32.xlu0 %v1395, 96
    %v1404 = vpop.permute.xlu0 %1403
    %v1405 = vsel %vm283, %v1404, 0
    %1407 = vmatprep.subr.mxu0 0.0
    %1408 = vmatpush1.msra.mxu0 %v477
    %1409 = vmatprep.subr.mxu0 0.0
    %1410 = vmatpush1.msra.mxu0 %v478
    %1411 = vmatprep.subr.mxu0 0.0
    %1412 = vmatpush1.msra.mxu0 %v479
    %1413 = vmatprep.subr.mxu0 0.0
    %1414 = vmatpush1.msra.mxu0 %v480
    %1415 = vmatprep.subr.mxu0 0.0
    %1416 = vmatpush1.msra.mxu0 0.0
    %1417 = vmatprep.subr.mxu0 0.0
    %1418 = vmatpush1.msra.mxu0 0.0
    %1419 = vmatprep.subr.mxu0 0.0
    %1420 = vmatpush1.msra.mxu0 0.0
    %1421 = vmatprep.subr.mxu0 0.0
    %1422 = vmatpush1.msra.mxu0 0.0
    %1423 = vmatprep.subr.mxu0 0.0
    %1424 = vmatpush1.msra.mxu0 0.0
    %1425 = vmatprep.subr.mxu0 0.0
    %1426 = vmatpush1.msra.mxu0 0.0
    %1427 = vmatprep.subr.mxu0 0.0
    %1428 = vmatpush1.msra.mxu0 0.0
    %1429 = vmatprep.subr.mxu0 0.0
    %1430 = vmatpush1.msra.mxu0 0.0
    %1431 = vmatprep.subr.mxu0 0.0
    %1432 = vmatpush1.msra.mxu0 0.0
    %1433 = vmatprep.subr.mxu0 0.0
    %1434 = vmatpush1.msra.mxu0 0.0
    %1435 = vmatprep.subr.mxu0 0.0
    %1436 = vmatpush1.msra.mxu0 0.0
    %1437 = vmatprep.subr.mxu0 0.0
    %1438 = vmatpush1.msra.mxu0 0.0
    %1439 = vmatprep.subr.mxu0 0.0
    %1440 = vmatpush1.msra.mxu0 0.0
    %1441 = vmatprep.subr.mxu0 0.0
    %1442 = vmatpush1.msra.mxu0 0.0
    %1443 = vmatprep.subr.mxu0 0.0
    %1444 = vmatpush1.msra.mxu0 0.0
    %1445 = vmatprep.subr.mxu0 0.0
    %1446 = vmatpush1.msra.mxu0 0.0
    %1447 = vmatprep.subr.mxu0 0.0
    %1448 = vmatpush1.msra.mxu0 0.0
    %1449 = vmatprep.subr.mxu0 0.0
    %1450 = vmatpush1.msra.mxu0 0.0
    %1451 = vmatprep.subr.mxu0 0.0
    %1452 = vmatpush1.msra.mxu0 0.0
    %1453 = vmatprep.subr.mxu0 0.0
    %1454 = vmatpush1.msra.mxu0 0.0
    %1455 = vmatprep.subr.mxu0 0.0
    %1456 = vmatpush1.msra.mxu0 0.0
    %1457 = vmatprep.subr.mxu0 0.0
    %1458 = vmatpush1.msra.mxu0 0.0
    %1459 = vmatprep.subr.mxu0 0.0
    %1460 = vmatpush1.msra.mxu0 0.0
    %1461 = vmatprep.subr.mxu0 0.0
    %1462 = vmatpush1.msra.mxu0 0.0
    %1463 = vmatprep.subr.mxu0 0.0
    %1464 = vmatpush1.msra.mxu0 0.0
    %1465 = vmatprep.subr.mxu0 0.0
    %1466 = vmatpush1.msra.mxu0 0.0
    %1467 = vmatprep.subr.mxu0 0.0
    %1468 = vmatpush1.msra.mxu0 0.0
    %1469 = vmatprep.subr.mxu0 0.0
    %1470 = vmatpush1.msra.mxu0 0.0
    %1471 = vmatprep.mubr.f32.mxu0 0.0
    %1472 = vmatmul.mubr.f32.gmra.mrb[0].mxu0 %v1405
    %v1473 = vpop.f32.mrb[0].mxu0
    %v1474 = vadd.f32 0.0, %v1473
    %v1475 = vpop.f32.mrb[0].mxu0
    %1476 = vdwg.mxu0
    %v1477 = vadd.f32 %v419, %v1474
    %v1478 = vxor.u32 %v1477, 2147483648
    %v1479 = vmul.f32 %v1478, 1.442695
    %v1480 = vpow.pop %v1479
    %v1481 = vadd.f32 %v1480, 1.0
    %v1482 = vrcp.pop %v1481
    %v1483 = vmul.f32 1.0, %v1482
    %v1484 = vadd.f32 %v1474, %v568
    %1486 = vrot.lane.b32.xlu0 %v1484, 64
    %v1487 = vpop.permute.xlu0 %1486
    %v1489 = vmul.f32 %v1483, %v1487
    %1491 = vrot.lane.b32.xlu0 %v1489, 64
    %v1492 = vpop.permute.xlu0 %1491
    %v1494 = vadd.f32 %v419, %v1492
    %v1495 = vtanh.pop %v1494
    %v1496 = vsub.f32 1.0, %v1483
    %1498 = vrot.lane.b32.xlu0 %v1495, 96
    %v1499 = vpop.permute.xlu0 %1498
    %v1501 = vmul.f32 %v1496, %v1499
    %v1502 = vmul.f32 %v1483, %v1395
    %v1503 = vadd.f32 %v1501, %v1502
    %v1504 = vmul.f32 %v231, %v1503
    %v1505 = vsub.f32 1.0, %v51
    %1507 = vset.pattern.permute.xlu0 0
    %1508 = vperm.xlu0 %1507, %v1505
    %v1509 = vpop.permute.xlu0 %1508
    %v1511 = vmul.f32 %v1509, %v1395
    %v1512 = vadd.f32 %v1504, %v1511
    %1514 = vrot.lane.b32.xlu0 %v1504, 96
    %v1515 = vpop.permute.xlu0 %1514
    %s1517 = scalar_lea.vmem %s12, 32
    %1518 = vst.msk [vmem:[%s1517] sm:$0xff] %vm283, %v1515
    %v1519 = vadd.f32 %v1290, %v1504
    %1521 = vrot.lane.b32.xlu0 %v1512, 96
    %v1522 = vpop.permute.xlu0 %1521
    %v1523 = vsel %vm283, %v1522, 0
    %1525 = vmatprep.subr.mxu0 0.0
    %1526 = vmatpush1.msra.mxu0 %v477
    %1527 = vmatprep.subr.mxu0 0.0
    %1528 = vmatpush1.msra.mxu0 %v478
    %1529 = vmatprep.subr.mxu0 0.0
    %1530 = vmatpush1.msra.mxu0 %v479
    %1531 = vmatprep.subr.mxu0 0.0
    %1532 = vmatpush1.msra.mxu0 %v480
    %1533 = vmatprep.subr.mxu0 0.0
    %1534 = vmatpush1.msra.mxu0 0.0
    %1535 = vmatprep.subr.mxu0 0.0
    %1536 = vmatpush1.msra.mxu0 0.0
    %1537 = vmatprep.subr.mxu0 0.0
    %1538 = vmatpush1.msra.mxu0 0.0
    %1539 = vmatprep.subr.mxu0 0.0
    %1540 = vmatpush1.msra.mxu0 0.0
    %1541 = vmatprep.subr.mxu0 0.0
    %1542 = vmatpush1.msra.mxu0 0.0
    %1543 = vmatprep.subr.mxu0 0.0
    %1544 = vmatpush1.msra.mxu0 0.0
    %1545 = vmatprep.subr.mxu0 0.0
    %1546 = vmatpush1.msra.mxu0 0.0
    %1547 = vmatprep.subr.mxu0 0.0
    %1548 = vmatpush1.msra.mxu0 0.0
    %1549 = vmatprep.subr.mxu0 0.0
    %1550 = vmatpush1.msra.mxu0 0.0
    %1551 = vmatprep.subr.mxu0 0.0
    %1552 = vmatpush1.msra.mxu0 0.0
    %1553 = vmatprep.subr.mxu0 0.0
    %1554 = vmatpush1.msra.mxu0 0.0
    %1555 = vmatprep.subr.mxu0 0.0
    %1556 = vmatpush1.msra.mxu0 0.0
    %1557 = vmatprep.subr.mxu0 0.0
    %1558 = vmatpush1.msra.mxu0 0.0
    %1559 = vmatprep.subr.mxu0 0.0
    %1560 = vmatpush1.msra.mxu0 0.0
    %1561 = vmatprep.subr.mxu0 0.0
    %1562 = vmatpush1.msra.mxu0 0.0
    %1563 = vmatprep.subr.mxu0 0.0
    %1564 = vmatpush1.msra.mxu0 0.0
    %1565 = vmatprep.subr.mxu0 0.0
    %1566 = vmatpush1.msra.mxu0 0.0
    %1567 = vmatprep.subr.mxu0 0.0
    %1568 = vmatpush1.msra.mxu0 0.0
    %1569 = vmatprep.subr.mxu0 0.0
    %1570 = vmatpush1.msra.mxu0 0.0
    %1571 = vmatprep.subr.mxu0 0.0
    %1572 = vmatpush1.msra.mxu0 0.0
    %1573 = vmatprep.subr.mxu0 0.0
    %1574 = vmatpush1.msra.mxu0 0.0
    %1575 = vmatprep.subr.mxu0 0.0
    %1576 = vmatpush1.msra.mxu0 0.0
    %1577 = vmatprep.subr.mxu0 0.0
    %1578 = vmatpush1.msra.mxu0 0.0
    %1579 = vmatprep.subr.mxu0 0.0
    %1580 = vmatpush1.msra.mxu0 0.0
    %1581 = vmatprep.subr.mxu0 0.0
    %1582 = vmatpush1.msra.mxu0 0.0
    %1583 = vmatprep.subr.mxu0 0.0
    %1584 = vmatpush1.msra.mxu0 0.0
    %1585 = vmatprep.subr.mxu0 0.0
    %1586 = vmatpush1.msra.mxu0 0.0
    %1587 = vmatprep.subr.mxu0 0.0
    %1588 = vmatpush1.msra.mxu0 0.0
    %1589 = vmatprep.mubr.f32.mxu0 0.0
    %1590 = vmatmul.mubr.f32.gmra.mrb[0].mxu0 %v1523
    %v1591 = vpop.f32.mrb[0].mxu0
    %v1592 = vadd.f32 0.0, %v1591
    %v1593 = vpop.f32.mrb[0].mxu0
    %1594 = vdwg.mxu0
    %v1595 = vadd.f32 %v459, %v1592
    %v1596 = vxor.u32 %v1595, 2147483648
    %v1597 = vmul.f32 %v1596, 1.442695
    %v1598 = vpow.pop %v1597
    %v1599 = vadd.f32 %v1598, 1.0
    %v1600 = vrcp.pop %v1599
    %v1601 = vmul.f32 1.0, %v1600
    %v1602 = vadd.f32 %v1592, %v568
    %1604 = vrot.lane.b32.xlu0 %v1602, 64
    %v1605 = vpop.permute.xlu0 %1604
    %v1607 = vmul.f32 %v1601, %v1605
    %1609 = vrot.lane.b32.xlu0 %v1607, 64
    %v1610 = vpop.permute.xlu0 %1609
    %v1612 = vadd.f32 %v459, %v1610
    %v1613 = vtanh.pop %v1612
    %v1614 = vsub.f32 1.0, %v1601
    %1616 = vrot.lane.b32.xlu0 %v1613, 96
    %v1617 = vpop.permute.xlu0 %1616
    %v1619 = vmul.f32 %v1614, %v1617
    %v1620 = vmul.f32 %v1601, %v1512
    %v1621 = vadd.f32 %v1619, %v1620
    %v1622 = vmul.f32 %v231, %v1621
    %v1623 = vmul.f32 %v1509, %v1512
    %v1624 = vadd.f32 %v1622, %v1623
    %1626 = vrot.lane.b32.xlu0 %v1622, 96
    %v1627 = vpop.permute.xlu0 %1626
    %s1629 = scalar_lea.vmem %s13, 32
    %1630 = vst.msk [vmem:[%s1629] sm:$0xff] %vm283, %v1627
    %1632 = vrot.lane.b32.xlu0 %v1624, 96
    %v1633 = vpop.permute.xlu0 %1632
    %v1634 = vsel %vm283, %v1633, 0
    %1636 = vmatprep.subr.mxu0 0.0
    %1637 = vmatpush1.msra.mxu0 %v477
    %1638 = vmatprep.subr.mxu0 0.0
    %1639 = vmatpush1.msra.mxu0 %v478
    %1640 = vmatprep.subr.mxu0 0.0
    %1641 = vmatpush1.msra.mxu0 %v479
    %1642 = vmatprep.subr.mxu0 0.0
    %1643 = vmatpush1.msra.mxu0 %v480
    %1644 = vmatprep.subr.mxu0 0.0
    %1645 = vmatpush1.msra.mxu0 0.0
    %1646 = vmatprep.subr.mxu0 0.0
    %1647 = vmatpush1.msra.mxu0 0.0
    %1648 = vmatprep.subr.mxu0 0.0
    %1649 = vmatpush1.msra.mxu0 0.0
    %1650 = vmatprep.subr.mxu0 0.0
    %1651 = vmatpush1.msra.mxu0 0.0
    %1652 = vmatprep.subr.mxu0 0.0
    %1653 = vmatpush1.msra.mxu0 0.0
    %1654 = vmatprep.subr.mxu0 0.0
    %1655 = vmatpush1.msra.mxu0 0.0
    %1656 = vmatprep.subr.mxu0 0.0
    %1657 = vmatpush1.msra.mxu0 0.0
    %1658 = vmatprep.subr.mxu0 0.0
    %1659 = vmatpush1.msra.mxu0 0.0
    %1660 = vmatprep.subr.mxu0 0.0
    %1661 = vmatpush1.msra.mxu0 0.0
    %1662 = vmatprep.subr.mxu0 0.0
    %1663 = vmatpush1.msra.mxu0 0.0
    %1664 = vmatprep.subr.mxu0 0.0
    %1665 = vmatpush1.msra.mxu0 0.0
    %1666 = vmatprep.subr.mxu0 0.0
    %1667 = vmatpush1.msra.mxu0 0.0
    %1668 = vmatprep.subr.mxu0 0.0
    %1669 = vmatpush1.msra.mxu0 0.0
    %1670 = vmatprep.subr.mxu0 0.0
    %1671 = vmatpush1.msra.mxu0 0.0
    %1672 = vmatprep.subr.mxu0 0.0
    %1673 = vmatpush1.msra.mxu0 0.0
    %1674 = vmatprep.subr.mxu0 0.0
    %1675 = vmatpush1.msra.mxu0 0.0
    %1676 = vmatprep.subr.mxu0 0.0
    %1677 = vmatpush1.msra.mxu0 0.0
    %1678 = vmatprep.subr.mxu0 0.0
    %1679 = vmatpush1.msra.mxu0 0.0
    %1680 = vmatprep.subr.mxu0 0.0
    %1681 = vmatpush1.msra.mxu0 0.0
    %1682 = vmatprep.subr.mxu0 0.0
    %1683 = vmatpush1.msra.mxu0 0.0
    %1684 = vmatprep.subr.mxu0 0.0
    %1685 = vmatpush1.msra.mxu0 0.0
    %1686 = vmatprep.subr.mxu0 0.0
    %1687 = vmatpush1.msra.mxu0 0.0
    %1688 = vmatprep.subr.mxu0 0.0
    %1689 = vmatpush1.msra.mxu0 0.0
    %1690 = vmatprep.subr.mxu0 0.0
    %1691 = vmatpush1.msra.mxu0 0.0
    %1692 = vmatprep.subr.mxu0 0.0
    %1693 = vmatpush1.msra.mxu0 0.0
    %1694 = vmatprep.subr.mxu0 0.0
    %1695 = vmatpush1.msra.mxu0 0.0
    %1696 = vmatprep.subr.mxu0 0.0
    %1697 = vmatpush1.msra.mxu0 0.0
    %1698 = vmatprep.subr.mxu0 0.0
    %1699 = vmatpush1.msra.mxu0 0.0
    %1700 = vmatprep.mubr.f32.mxu0 0.0
    %1701 = vmatmul.mubr.f32.gmra.mrb[0].mxu0 %v1634
    %v1702 = vpop.f32.mrb[0].mxu0
    %v1703 = vadd.f32 0.0, %v1702
    %v1704 = vpop.f32.mrb[0].mxu0
    %1705 = vdwg.mxu0
    %v1706 = vadd.f32 %v424, %v1703
    %v1707 = vxor.u32 %v1706, 2147483648
    %v1708 = vmul.f32 %v1707, 1.442695
    %v1709 = vpow.pop %v1708
    %v1710 = vadd.f32 %v1709, 1.0
    %v1711 = vrcp.pop %v1710
    %v1712 = vmul.f32 1.0, %v1711
    %v1713 = vadd.f32 %v1703, %v568
    %1715 = vrot.lane.b32.xlu0 %v1713, 64
    %v1716 = vpop.permute.xlu0 %1715
    %v1718 = vmul.f32 %v1712, %v1716
    %1720 = vrot.lane.b32.xlu0 %v1718, 64
    %v1721 = vpop.permute.xlu0 %1720
    %v1723 = vadd.f32 %v424, %v1721
    %v1724 = vtanh.pop %v1723
    %v1725 = vsub.f32 1.0, %v1712
    %1727 = vrot.lane.b32.xlu0 %v1724, 96
    %v1728 = vpop.permute.xlu0 %1727
    %v1730 = vmul.f32 %v1725, %v1728
    %v1731 = vmul.f32 %v1712, %v1624
    %v1732 = vadd.f32 %v1730, %v1731
    %v1733 = vmul.f32 %v236, %v1732
    %v1734 = vsub.f32 1.0, %v52
    %1736 = vset.pattern.permute.xlu0 0
    %1737 = vperm.xlu0 %1736, %v1734
    %v1738 = vpop.permute.xlu0 %1737
    %v1740 = vmul.f32 %v1738, %v1624
    %v1741 = vadd.f32 %v1733, %v1740
    %1743 = vrot.lane.b32.xlu0 %v1733, 96
    %v1744 = vpop.permute.xlu0 %1743
    %s1746 = scalar_lea.vmem %s12, 40
    %1747 = vst.msk [vmem:[%s1746] sm:$0xff] %vm283, %v1744
    %v1748 = vadd.f32 %v1519, %v1733
    %1750 = vrot.lane.b32.xlu0 %v1741, 96
    %v1751 = vpop.permute.xlu0 %1750
    %v1752 = vsel %vm283, %v1751, 0
    %1754 = vmatprep.subr.mxu0 0.0
    %1755 = vmatpush1.msra.mxu0 %v477
    %1756 = vmatprep.subr.mxu0 0.0
    %1757 = vmatpush1.msra.mxu0 %v478
    %1758 = vmatprep.subr.mxu0 0.0
    %1759 = vmatpush1.msra.mxu0 %v479
    %1760 = vmatprep.subr.mxu0 0.0
    %1761 = vmatpush1.msra.mxu0 %v480
    %1762 = vmatprep.subr.mxu0 0.0
    %1763 = vmatpush1.msra.mxu0 0.0
    %1764 = vmatprep.subr.mxu0 0.0
    %1765 = vmatpush1.msra.mxu0 0.0
    %1766 = vmatprep.subr.mxu0 0.0
    %1767 = vmatpush1.msra.mxu0 0.0
    %1768 = vmatprep.subr.mxu0 0.0
    %1769 = vmatpush1.msra.mxu0 0.0
    %1770 = vmatprep.subr.mxu0 0.0
    %1771 = vmatpush1.msra.mxu0 0.0
    %1772 = vmatprep.subr.mxu0 0.0
    %1773 = vmatpush1.msra.mxu0 0.0
    %1774 = vmatprep.subr.mxu0 0.0
    %1775 = vmatpush1.msra.mxu0 0.0
    %1776 = vmatprep.subr.mxu0 0.0
    %1777 = vmatpush1.msra.mxu0 0.0
    %1778 = vmatprep.subr.mxu0 0.0
    %1779 = vmatpush1.msra.mxu0 0.0
    %1780 = vmatprep.subr.mxu0 0.0
    %1781 = vmatpush1.msra.mxu0 0.0
    %1782 = vmatprep.subr.mxu0 0.0
    %1783 = vmatpush1.msra.mxu0 0.0
    %1784 = vmatprep.subr.mxu0 0.0
    %1785 = vmatpush1.msra.mxu0 0.0
    %1786 = vmatprep.subr.mxu0 0.0
    %1787 = vmatpush1.msra.mxu0 0.0
    %1788 = vmatprep.subr.mxu0 0.0
    %1789 = vmatpush1.msra.mxu0 0.0
    %1790 = vmatprep.subr.mxu0 0.0
    %1791 = vmatpush1.msra.mxu0 0.0
    %1792 = vmatprep.subr.mxu0 0.0
    %1793 = vmatpush1.msra.mxu0 0.0
    %1794 = vmatprep.subr.mxu0 0.0
    %1795 = vmatpush1.msra.mxu0 0.0
    %1796 = vmatprep.subr.mxu0 0.0
    %1797 = vmatpush1.msra.mxu0 0.0
    %1798 = vmatprep.subr.mxu0 0.0
    %1799 = vmatpush1.msra.mxu0 0.0
    %1800 = vmatprep.subr.mxu0 0.0
    %1801 = vmatpush1.msra.mxu0 0.0
    %1802 = vmatprep.subr.mxu0 0.0
    %1803 = vmatpush1.msra.mxu0 0.0
    %1804 = vmatprep.subr.mxu0 0.0
    %1805 = vmatpush1.msra.mxu0 0.0
    %1806 = vmatprep.subr.mxu0 0.0
    %1807 = vmatpush1.msra.mxu0 0.0
    %1808 = vmatprep.subr.mxu0 0.0
    %1809 = vmatpush1.msra.mxu0 0.0
    %1810 = vmatprep.subr.mxu0 0.0
    %1811 = vmatpush1.msra.mxu0 0.0
    %1812 = vmatprep.subr.mxu0 0.0
    %1813 = vmatpush1.msra.mxu0 0.0
    %1814 = vmatprep.subr.mxu0 0.0
    %1815 = vmatpush1.msra.mxu0 0.0
    %1816 = vmatprep.subr.mxu0 0.0
    %1817 = vmatpush1.msra.mxu0 0.0
    %1818 = vmatprep.mubr.f32.mxu0 0.0
    %1819 = vmatmul.mubr.f32.gmra.mrb[0].mxu0 %v1752
    %v1820 = vpop.f32.mrb[0].mxu0
    %v1821 = vadd.f32 0.0, %v1820
    %v1822 = vpop.f32.mrb[0].mxu0
    %1823 = vdwg.mxu0
    %v1824 = vadd.f32 %v464, %v1821
    %v1825 = vxor.u32 %v1824, 2147483648
    %v1826 = vmul.f32 %v1825, 1.442695
    %v1827 = vpow.pop %v1826
    %v1828 = vadd.f32 %v1827, 1.0
    %v1829 = vrcp.pop %v1828
    %v1830 = vmul.f32 1.0, %v1829
    %v1831 = vadd.f32 %v1821, %v568
    %1833 = vrot.lane.b32.xlu0 %v1831, 64
    %v1834 = vpop.permute.xlu0 %1833
    %v1836 = vmul.f32 %v1830, %v1834
    %1838 = vrot.lane.b32.xlu0 %v1836, 64
    %v1839 = vpop.permute.xlu0 %1838
    %v1841 = vadd.f32 %v464, %v1839
    %v1842 = vtanh.pop %v1841
    %v1843 = vsub.f32 1.0, %v1830
    %1845 = vrot.lane.b32.xlu0 %v1842, 96
    %v1846 = vpop.permute.xlu0 %1845
    %v1848 = vmul.f32 %v1843, %v1846
    %v1849 = vmul.f32 %v1830, %v1741
    %v1850 = vadd.f32 %v1848, %v1849
    %v1851 = vmul.f32 %v236, %v1850
    %v1852 = vmul.f32 %v1738, %v1741
    %v1853 = vadd.f32 %v1851, %v1852
    %1855 = vrot.lane.b32.xlu0 %v1851, 96
    %v1856 = vpop.permute.xlu0 %1855
    %s1858 = scalar_lea.vmem %s13, 40
    %1859 = vst.msk [vmem:[%s1858] sm:$0xff] %vm283, %v1856
    %1861 = vrot.lane.b32.xlu0 %v1853, 96
    %v1862 = vpop.permute.xlu0 %1861
    %v1863 = vsel %vm283, %v1862, 0
    %1865 = vmatprep.subr.mxu0 0.0
    %1866 = vmatpush1.msra.mxu0 %v477
    %1867 = vmatprep.subr.mxu0 0.0
    %1868 = vmatpush1.msra.mxu0 %v478
    %1869 = vmatprep.subr.mxu0 0.0
    %1870 = vmatpush1.msra.mxu0 %v479
    %1871 = vmatprep.subr.mxu0 0.0
    %1872 = vmatpush1.msra.mxu0 %v480
    %1873 = vmatprep.subr.mxu0 0.0
    %1874 = vmatpush1.msra.mxu0 0.0
    %1875 = vmatprep.subr.mxu0 0.0
    %1876 = vmatpush1.msra.mxu0 0.0
    %1877 = vmatprep.subr.mxu0 0.0
    %1878 = vmatpush1.msra.mxu0 0.0
    %1879 = vmatprep.subr.mxu0 0.0
    %1880 = vmatpush1.msra.mxu0 0.0
    %1881 = vmatprep.subr.mxu0 0.0
    %1882 = vmatpush1.msra.mxu0 0.0
    %1883 = vmatprep.subr.mxu0 0.0
    %1884 = vmatpush1.msra.mxu0 0.0
    %1885 = vmatprep.subr.mxu0 0.0
    %1886 = vmatpush1.msra.mxu0 0.0
    %1887 = vmatprep.subr.mxu0 0.0
    %1888 = vmatpush1.msra.mxu0 0.0
    %1889 = vmatprep.subr.mxu0 0.0
    %1890 = vmatpush1.msra.mxu0 0.0
    %1891 = vmatprep.subr.mxu0 0.0
    %1892 = vmatpush1.msra.mxu0 0.0
    %1893 = vmatprep.subr.mxu0 0.0
    %1894 = vmatpush1.msra.mxu0 0.0
    %1895 = vmatprep.subr.mxu0 0.0
    %1896 = vmatpush1.msra.mxu0 0.0
    %1897 = vmatprep.subr.mxu0 0.0
    %1898 = vmatpush1.msra.mxu0 0.0
    %1899 = vmatprep.subr.mxu0 0.0
    %1900 = vmatpush1.msra.mxu0 0.0
    %1901 = vmatprep.subr.mxu0 0.0
    %1902 = vmatpush1.msra.mxu0 0.0
    %1903 = vmatprep.subr.mxu0 0.0
    %1904 = vmatpush1.msra.mxu0 0.0
    %1905 = vmatprep.subr.mxu0 0.0
    %1906 = vmatpush1.msra.mxu0 0.0
    %1907 = vmatprep.subr.mxu0 0.0
    %1908 = vmatpush1.msra.mxu0 0.0
    %1909 = vmatprep.subr.mxu0 0.0
    %1910 = vmatpush1.msra.mxu0 0.0
    %1911 = vmatprep.subr.mxu0 0.0
    %1912 = vmatpush1.msra.mxu0 0.0
    %1913 = vmatprep.subr.mxu0 0.0
    %1914 = vmatpush1.msra.mxu0 0.0
    %1915 = vmatprep.subr.mxu0 0.0
    %1916 = vmatpush1.msra.mxu0 0.0
    %1917 = vmatprep.subr.mxu0 0.0
    %1918 = vmatpush1.msra.mxu0 0.0
    %1919 = vmatprep.subr.mxu0 0.0
    %1920 = vmatpush1.msra.mxu0 0.0
    %1921 = vmatprep.subr.mxu0 0.0
    %1922 = vmatpush1.msra.mxu0 0.0
    %1923 = vmatprep.subr.mxu0 0.0
    %1924 = vmatpush1.msra.mxu0 0.0
    %1925 = vmatprep.subr.mxu0 0.0
    %1926 = vmatpush1.msra.mxu0 0.0
    %1927 = vmatprep.subr.mxu0 0.0
    %1928 = vmatpush1.msra.mxu0 0.0
    %1929 = vmatprep.mubr.f32.mxu0 0.0
    %1930 = vmatmul.mubr.f32.gmra.mrb[0].mxu0 %v1863
    %v1931 = vpop.f32.mrb[0].mxu0
    %v1932 = vadd.f32 0.0, %v1931
    %v1933 = vpop.f32.mrb[0].mxu0
    %1934 = vdwg.mxu0
    %v1935 = vadd.f32 %v429, %v1932
    %v1936 = vxor.u32 %v1935, 2147483648
    %v1937 = vmul.f32 %v1936, 1.442695
    %v1938 = vpow.pop %v1937
    %v1939 = vadd.f32 %v1938, 1.0
    %v1940 = vrcp.pop %v1939
    %v1941 = vmul.f32 1.0, %v1940
    %v1942 = vadd.f32 %v1932, %v568
    %1944 = vrot.lane.b32.xlu0 %v1942, 64
    %v1945 = vpop.permute.xlu0 %1944
    %v1947 = vmul.f32 %v1941, %v1945
    %1949 = vrot.lane.b32.xlu0 %v1947, 64
    %v1950 = vpop.permute.xlu0 %1949
    %v1952 = vadd.f32 %v429, %v1950
    %v1953 = vtanh.pop %v1952
    %v1954 = vsub.f32 1.0, %v1941
    %1956 = vrot.lane.b32.xlu0 %v1953, 96
    %v1957 = vpop.permute.xlu0 %1956
    %v1959 = vmul.f32 %v1954, %v1957
    %v1960 = vmul.f32 %v1941, %v1853
    %v1961 = vadd.f32 %v1959, %v1960
    %v1962 = vmul.f32 %v241, %v1961
    %v1963 = vsub.f32 1.0, %v53
    %1965 = vset.pattern.permute.xlu0 0
    %1966 = vperm.xlu0 %1965, %v1963
    %v1967 = vpop.permute.xlu0 %1966
    %v1969 = vmul.f32 %v1967, %v1853
    %v1970 = vadd.f32 %v1962, %v1969
    %1972 = vrot.lane.b32.xlu0 %v1962, 96
    %v1973 = vpop.permute.xlu0 %1972
    %s1975 = scalar_lea.vmem %s12, 48
    %1976 = vst.msk [vmem:[%s1975] sm:$0xff] %vm283, %v1973
    %v1977 = vadd.f32 %v1748, %v1962
    %1979 = vrot.lane.b32.xlu0 %v1970, 96
    %v1980 = vpop.permute.xlu0 %1979
    %v1981 = vsel %vm283, %v1980, 0
    %1983 = vmatprep.subr.mxu0 0.0
    %1984 = vmatpush1.msra.mxu0 %v477
    %1985 = vmatprep.subr.mxu0 0.0
    %1986 = vmatpush1.msra.mxu0 %v478
    %1987 = vmatprep.subr.mxu0 0.0
    %1988 = vmatpush1.msra.mxu0 %v479
    %1989 = vmatprep.subr.mxu0 0.0
    %1990 = vmatpush1.msra.mxu0 %v480
    %1991 = vmatprep.subr.mxu0 0.0
    %1992 = vmatpush1.msra.mxu0 0.0
    %1993 = vmatprep.subr.mxu0 0.0
    %1994 = vmatpush1.msra.mxu0 0.0
    %1995 = vmatprep.subr.mxu0 0.0
    %1996 = vmatpush1.msra.mxu0 0.0
    %1997 = vmatprep.subr.mxu0 0.0
    %1998 = vmatpush1.msra.mxu0 0.0
    %1999 = vmatprep.subr.mxu0 0.0
    %2000 = vmatpush1.msra.mxu0 0.0
    %2001 = vmatprep.subr.mxu0 0.0
    %2002 = vmatpush1.msra.mxu0 0.0
    %2003 = vmatprep.subr.mxu0 0.0
    %2004 = vmatpush1.msra.mxu0 0.0
    %2005 = vmatprep.subr.mxu0 0.0
    %2006 = vmatpush1.msra.mxu0 0.0
    %2007 = vmatprep.subr.mxu0 0.0
    %2008 = vmatpush1.msra.mxu0 0.0
    %2009 = vmatprep.subr.mxu0 0.0
    %2010 = vmatpush1.msra.mxu0 0.0
    %2011 = vmatprep.subr.mxu0 0.0
    %2012 = vmatpush1.msra.mxu0 0.0
    %2013 = vmatprep.subr.mxu0 0.0
    %2014 = vmatpush1.msra.mxu0 0.0
    %2015 = vmatprep.subr.mxu0 0.0
    %2016 = vmatpush1.msra.mxu0 0.0
    %2017 = vmatprep.subr.mxu0 0.0
    %2018 = vmatpush1.msra.mxu0 0.0
    %2019 = vmatprep.subr.mxu0 0.0
    %2020 = vmatpush1.msra.mxu0 0.0
    %2021 = vmatprep.subr.mxu0 0.0
    %2022 = vmatpush1.msra.mxu0 0.0
    %2023 = vmatprep.subr.mxu0 0.0
    %2024 = vmatpush1.msra.mxu0 0.0
    %2025 = vmatprep.subr.mxu0 0.0
    %2026 = vmatpush1.msra.mxu0 0.0
    %2027 = vmatprep.subr.mxu0 0.0
    %2028 = vmatpush1.msra.mxu0 0.0
    %2029 = vmatprep.subr.mxu0 0.0
    %2030 = vmatpush1.msra.mxu0 0.0
    %2031 = vmatprep.subr.mxu0 0.0
    %2032 = vmatpush1.msra.mxu0 0.0
    %2033 = vmatprep.subr.mxu0 0.0
    %2034 = vmatpush1.msra.mxu0 0.0
    %2035 = vmatprep.subr.mxu0 0.0
    %2036 = vmatpush1.msra.mxu0 0.0
    %2037 = vmatprep.subr.mxu0 0.0
    %2038 = vmatpush1.msra.mxu0 0.0
    %2039 = vmatprep.subr.mxu0 0.0
    %2040 = vmatpush1.msra.mxu0 0.0
    %2041 = vmatprep.subr.mxu0 0.0
    %2042 = vmatpush1.msra.mxu0 0.0
    %2043 = vmatprep.subr.mxu0 0.0
    %2044 = vmatpush1.msra.mxu0 0.0
    %2045 = vmatprep.subr.mxu0 0.0
    %2046 = vmatpush1.msra.mxu0 0.0
    %2047 = vmatprep.mubr.f32.mxu0 0.0
    %2048 = vmatmul.mubr.f32.gmra.mrb[0].mxu0 %v1981
    %v2049 = vpop.f32.mrb[0].mxu0
    %v2050 = vadd.f32 0.0, %v2049
    %v2051 = vpop.f32.mrb[0].mxu0
    %2052 = vdwg.mxu0
    %v2053 = vadd.f32 %v469, %v2050
    %v2054 = vxor.u32 %v2053, 2147483648
    %v2055 = vmul.f32 %v2054, 1.442695
    %v2056 = vpow.pop %v2055
    %v2057 = vadd.f32 %v2056, 1.0
    %v2058 = vrcp.pop %v2057
    %v2059 = vmul.f32 1.0, %v2058
    %v2060 = vadd.f32 %v2050, %v568
    %2062 = vrot.lane.b32.xlu0 %v2060, 64
    %v2063 = vpop.permute.xlu0 %2062
    %v2065 = vmul.f32 %v2059, %v2063
    %2067 = vrot.lane.b32.xlu0 %v2065, 64
    %v2068 = vpop.permute.xlu0 %2067
    %v2070 = vadd.f32 %v469, %v2068
    %v2071 = vtanh.pop %v2070
    %v2072 = vsub.f32 1.0, %v2059
    %2074 = vrot.lane.b32.xlu0 %v2071, 96
    %v2075 = vpop.permute.xlu0 %2074
    %v2077 = vmul.f32 %v2072, %v2075
    %v2078 = vmul.f32 %v2059, %v1970
    %v2079 = vadd.f32 %v2077, %v2078
    %v2080 = vmul.f32 %v241, %v2079
    %v2081 = vmul.f32 %v1967, %v1970
    %v2082 = vadd.f32 %v2080, %v2081
    %2084 = vrot.lane.b32.xlu0 %v2080, 96
    %v2085 = vpop.permute.xlu0 %2084
    %s2087 = scalar_lea.vmem %s13, 48
    %2088 = vst.msk [vmem:[%s2087] sm:$0xff] %vm283, %v2085
    %2090 = vrot.lane.b32.xlu0 %v2082, 96
    %v2091 = vpop.permute.xlu0 %2090
    %v2092 = vsel %vm283, %v2091, 0
    %2094 = vmatprep.subr.mxu0 0.0
    %2095 = vmatpush1.msra.mxu0 %v477
    %2096 = vmatprep.subr.mxu0 0.0
    %2097 = vmatpush1.msra.mxu0 %v478
    %2098 = vmatprep.subr.mxu0 0.0
    %2099 = vmatpush1.msra.mxu0 %v479
    %2100 = vmatprep.subr.mxu0 0.0
    %2101 = vmatpush1.msra.mxu0 %v480
    %2102 = vmatprep.subr.mxu0 0.0
    %2103 = vmatpush1.msra.mxu0 0.0
    %2104 = vmatprep.subr.mxu0 0.0
    %2105 = vmatpush1.msra.mxu0 0.0
    %2106 = vmatprep.subr.mxu0 0.0
    %2107 = vmatpush1.msra.mxu0 0.0
    %2108 = vmatprep.subr.mxu0 0.0
    %2109 = vmatpush1.msra.mxu0 0.0
    %2110 = vmatprep.subr.mxu0 0.0
    %2111 = vmatpush1.msra.mxu0 0.0
    %2112 = vmatprep.subr.mxu0 0.0
    %2113 = vmatpush1.msra.mxu0 0.0
    %2114 = vmatprep.subr.mxu0 0.0
    %2115 = vmatpush1.msra.mxu0 0.0
    %2116 = vmatprep.subr.mxu0 0.0
    %2117 = vmatpush1.msra.mxu0 0.0
    %2118 = vmatprep.subr.mxu0 0.0
    %2119 = vmatpush1.msra.mxu0 0.0
    %2120 = vmatprep.subr.mxu0 0.0
    %2121 = vmatpush1.msra.mxu0 0.0
    %2122 = vmatprep.subr.mxu0 0.0
    %2123 = vmatpush1.msra.mxu0 0.0
    %2124 = vmatprep.subr.mxu0 0.0
    %2125 = vmatpush1.msra.mxu0 0.0
    %2126 = vmatprep.subr.mxu0 0.0
    %2127 = vmatpush1.msra.mxu0 0.0
    %2128 = vmatprep.subr.mxu0 0.0
    %2129 = vmatpush1.msra.mxu0 0.0
    %2130 = vmatprep.subr.mxu0 0.0
    %2131 = vmatpush1.msra.mxu0 0.0
    %2132 = vmatprep.subr.mxu0 0.0
    %2133 = vmatpush1.msra.mxu0 0.0
    %2134 = vmatprep.subr.mxu0 0.0
    %2135 = vmatpush1.msra.mxu0 0.0
    %2136 = vmatprep.subr.mxu0 0.0
    %2137 = vmatpush1.msra.mxu0 0.0
    %2138 = vmatprep.subr.mxu0 0.0
    %2139 = vmatpush1.msra.mxu0 0.0
    %2140 = vmatprep.subr.mxu0 0.0
    %2141 = vmatpush1.msra.mxu0 0.0
    %2142 = vmatprep.subr.mxu0 0.0
    %2143 = vmatpush1.msra.mxu0 0.0
    %2144 = vmatprep.subr.mxu0 0.0
    %2145 = vmatpush1.msra.mxu0 0.0
    %2146 = vmatprep.subr.mxu0 0.0
    %2147 = vmatpush1.msra.mxu0 0.0
    %2148 = vmatprep.subr.mxu0 0.0
    %2149 = vmatpush1.msra.mxu0 0.0
    %2150 = vmatprep.subr.mxu0 0.0
    %2151 = vmatpush1.msra.mxu0 0.0
    %2152 = vmatprep.subr.mxu0 0.0
    %2153 = vmatpush1.msra.mxu0 0.0
    %2154 = vmatprep.subr.mxu0 0.0
    %2155 = vmatpush1.msra.mxu0 0.0
    %2156 = vmatprep.subr.mxu0 0.0
    %2157 = vmatpush1.msra.mxu0 0.0
    %2158 = vmatprep.mubr.f32.mxu0 0.0
    %2159 = vmatmul.mubr.f32.gmra.mrb[0].mxu0 %v2092
    %v2160 = vpop.f32.mrb[0].mxu0
    %v2161 = vadd.f32 0.0, %v2160
    %v2162 = vpop.f32.mrb[0].mxu0
    %2163 = vdwg.mxu0
    %v2164 = vadd.f32 %v434, %v2161
    %v2165 = vxor.u32 %v2164, 2147483648
    %v2166 = vmul.f32 %v2165, 1.442695
    %v2167 = vpow.pop %v2166
    %v2168 = vadd.f32 %v2167, 1.0
    %v2169 = vrcp.pop %v2168
    %v2170 = vmul.f32 1.0, %v2169
    %v2171 = vadd.f32 %v2161, %v568
    %2173 = vrot.lane.b32.xlu0 %v2171, 64
    %v2174 = vpop.permute.xlu0 %2173
    %v2176 = vmul.f32 %v2170, %v2174
    %2178 = vrot.lane.b32.xlu0 %v2176, 64
    %v2179 = vpop.permute.xlu0 %2178
    %v2181 = vadd.f32 %v434, %v2179
    %v2182 = vtanh.pop %v2181
    %v2183 = vsub.f32 1.0, %v2170
    %2185 = vrot.lane.b32.xlu0 %v2182, 96
    %v2186 = vpop.permute.xlu0 %2185
    %v2188 = vmul.f32 %v2183, %v2186
    %v2189 = vmul.f32 %v2170, %v2082
    %v2190 = vadd.f32 %v2188, %v2189
    %v2191 = vmul.f32 %v246, %v2190
    %v2192 = vsub.f32 1.0, %v54
    %2194 = vset.pattern.permute.xlu0 0
    %2195 = vperm.xlu0 %2194, %v2192
    %v2196 = vpop.permute.xlu0 %2195
    %v2198 = vmul.f32 %v2196, %v2082
    %v2199 = vadd.f32 %v2191, %v2198
    %2201 = vrot.lane.b32.xlu0 %v2191, 96
    %v2202 = vpop.permute.xlu0 %2201
    %s2204 = scalar_lea.vmem %s12, 56
    %2205 = vst.msk [vmem:[%s2204] sm:$0xff] %vm283, %v2202
    %v2206 = vadd.f32 %v1977, %v2191
    %2208 = vrot.lane.b32.xlu0 %v2199, 96
    %v2209 = vpop.permute.xlu0 %2208
    %v2210 = vsel %vm283, %v2209, 0
    %2212 = vmatprep.subr.mxu0 0.0
    %2213 = vmatpush1.msra.mxu0 %v477
    %2214 = vmatprep.subr.mxu0 0.0
    %2215 = vmatpush1.msra.mxu0 %v478
    %2216 = vmatprep.subr.mxu0 0.0
    %2217 = vmatpush1.msra.mxu0 %v479
    %2218 = vmatprep.subr.mxu0 0.0
    %2219 = vmatpush1.msra.mxu0 %v480
    %2220 = vmatprep.subr.mxu0 0.0
    %2221 = vmatpush1.msra.mxu0 0.0
    %2222 = vmatprep.subr.mxu0 0.0
    %2223 = vmatpush1.msra.mxu0 0.0
    %2224 = vmatprep.subr.mxu0 0.0
    %2225 = vmatpush1.msra.mxu0 0.0
    %2226 = vmatprep.subr.mxu0 0.0
    %2227 = vmatpush1.msra.mxu0 0.0
    %2228 = vmatprep.subr.mxu0 0.0
    %2229 = vmatpush1.msra.mxu0 0.0
    %2230 = vmatprep.subr.mxu0 0.0
    %2231 = vmatpush1.msra.mxu0 0.0
    %2232 = vmatprep.subr.mxu0 0.0
    %2233 = vmatpush1.msra.mxu0 0.0
    %2234 = vmatprep.subr.mxu0 0.0
    %2235 = vmatpush1.msra.mxu0 0.0
    %2236 = vmatprep.subr.mxu0 0.0
    %2237 = vmatpush1.msra.mxu0 0.0
    %2238 = vmatprep.subr.mxu0 0.0
    %2239 = vmatpush1.msra.mxu0 0.0
    %2240 = vmatprep.subr.mxu0 0.0
    %2241 = vmatpush1.msra.mxu0 0.0
    %2242 = vmatprep.subr.mxu0 0.0
    %2243 = vmatpush1.msra.mxu0 0.0
    %2244 = vmatprep.subr.mxu0 0.0
    %2245 = vmatpush1.msra.mxu0 0.0
    %2246 = vmatprep.subr.mxu0 0.0
    %2247 = vmatpush1.msra.mxu0 0.0
    %2248 = vmatprep.subr.mxu0 0.0
    %2249 = vmatpush1.msra.mxu0 0.0
    %2250 = vmatprep.subr.mxu0 0.0
    %2251 = vmatpush1.msra.mxu0 0.0
    %2252 = vmatprep.subr.mxu0 0.0
    %2253 = vmatpush1.msra.mxu0 0.0
    %2254 = vmatprep.subr.mxu0 0.0
    %2255 = vmatpush1.msra.mxu0 0.0
    %2256 = vmatprep.subr.mxu0 0.0
    %2257 = vmatpush1.msra.mxu0 0.0
    %2258 = vmatprep.subr.mxu0 0.0
    %2259 = vmatpush1.msra.mxu0 0.0
    %2260 = vmatprep.subr.mxu0 0.0
    %2261 = vmatpush1.msra.mxu0 0.0
    %2262 = vmatprep.subr.mxu0 0.0
    %2263 = vmatpush1.msra.mxu0 0.0
    %2264 = vmatprep.subr.mxu0 0.0
    %2265 = vmatpush1.msra.mxu0 0.0
    %2266 = vmatprep.subr.mxu0 0.0
    %2267 = vmatpush1.msra.mxu0 0.0
    %2268 = vmatprep.subr.mxu0 0.0
    %2269 = vmatpush1.msra.mxu0 0.0
    %2270 = vmatprep.subr.mxu0 0.0
    %2271 = vmatpush1.msra.mxu0 0.0
    %2272 = vmatprep.subr.mxu0 0.0
    %2273 = vmatpush1.msra.mxu0 0.0
    %2274 = vmatprep.subr.mxu0 0.0
    %2275 = vmatpush1.msra.mxu0 0.0
    %2276 = vmatprep.mubr.f32.mxu0 0.0
    %2277 = vmatmul.mubr.f32.gmra.mrb[0].mxu0 %v2210
    %v2278 = vpop.f32.mrb[0].mxu0
    %v2279 = vadd.f32 0.0, %v2278
    %v2280 = vpop.f32.mrb[0].mxu0
    %2281 = vdwg.mxu0
    %v2282 = vadd.f32 %v474, %v2279
    %v2283 = vxor.u32 %v2282, 2147483648
    %v2284 = vmul.f32 %v2283, 1.442695
    %v2285 = vpow.pop %v2284
    %v2286 = vadd.f32 %v2285, 1.0
    %v2287 = vrcp.pop %v2286
    %v2288 = vmul.f32 1.0, %v2287
    %v2289 = vadd.f32 %v2279, %v568
    %2291 = vrot.lane.b32.xlu0 %v2289, 64
    %v2292 = vpop.permute.xlu0 %2291
    %v2294 = vmul.f32 %v2288, %v2292
    %2296 = vrot.lane.b32.xlu0 %v2294, 64
    %v2297 = vpop.permute.xlu0 %2296
    %v2299 = vadd.f32 %v474, %v2297
    %v2300 = vtanh.pop %v2299
    %v2301 = vsub.f32 1.0, %v2288
    %2303 = vrot.lane.b32.xlu0 %v2300, 96
    %v2304 = vpop.permute.xlu0 %2303
    %v2306 = vmul.f32 %v2301, %v2304
    %v2307 = vmul.f32 %v2288, %v2199
    %v2308 = vadd.f32 %v2306, %v2307
    %v2309 = vmul.f32 %v2308, %v246
    %2311 = vrot.lane.b32.xlu0 %v2309, 96
    %v2312 = vpop.permute.xlu0 %2311
    %s2314 = scalar_lea.vmem %s13, 56
    %2315 = vst.msk [vmem:[%s2314] sm:$0xff] %vm283, %v2312
    %v2316 = vld [vmem:[%s5] sm:$0xff]
    %v2317 = vmax.f32 %v2316, 1.0
    %2319 = vset.pattern.permute.xlu0 0
    %2320 = vperm.xlu0 %2319, %v2317
    %v2321 = vpop.permute.xlu0 %2320
    %v2323 = vrcp.pop %v2321
    %v2324 = vmul.f32 %v2206, %v2323
    %2326 = vrot.lane.b32.xlu0 %v2324, 96
    %v2327 = vpop.permute.xlu0 %2326
    %2329 = vst.msk [vmem:[#allocation2] sm:$0xff] %vm283, %v2327
    %v2330 = vld [vmem:[%s3] sm:$0x1]
    %v2331 = vlaneseq
    %v2332 = vshrl.u32 %v2331, 7
    %v2333 = vadd.s32 %v2332, 8
    %v2334 = vadd.s32 %v2332, 16
    %v2335 = vadd.s32 %v2332, 24
    %v2336 = vlaneseq
    %v2337 = vshrl.u32 %v2336, 7
    %v2338 = vsub.s32 0, %v2337
    %v2339 = vrot.slane %v2330, %v2338
    %vm2340 = vcmp.eq.s32.totalorder %v2332, %v2339
    %vm2341 = vcmp.eq.s32.totalorder %v2333, %v2339
    %vm2342 = vcmp.eq.s32.totalorder %v2334, %v2339
    %vm2343 = vcmp.eq.s32.totalorder %v2335, %v2339
    %v2344 = vsel %vm2340, 1, 0
    %v2345 = vsel %vm2341, 1, 0
    %v2346 = vsel %vm2342, 1, 0
    %v2347 = vsel %vm2343, 1, 0
    %v2348 = vcvt.s32.f32 %v2344
    %v2349 = vcvt.s32.f32 %v2345
    %v2350 = vcvt.s32.f32 %v2346
    %v2351 = vcvt.s32.f32 %v2347
    %v2352 = vld [vmem:[%s4] sm:$0x1]
    %v2354 = vlaneseq
    %v2355 = vshrl.u32 %v2354, 7
    %v2356 = vsub.s32 0, %v2355
    %v2357 = vrot.slane %v2352, %v2356
    %v2359 = vmul.f32 %v2348, %v2357
    %v2360 = vmul.f32 %v2349, %v2357
    %v2361 = vmul.f32 %v2350, %v2357
    %v2362 = vmul.f32 %v2351, %v2357
    %v2364 = vsel %vm78, %v2359, 0
    %v2367 = vsel %vm78, %v2360, 0
    %v2370 = vsel %vm78, %v2361, 0
    %v2373 = vsel %vm78, %v2362, 0
    %2375 = vmatprep.subr.mxu0 0.0
    %2376 = vmatpush1.msra.mxu0 %v601
    %2377 = vmatprep.subr.mxu0 0.0
    %2378 = vmatpush1.msra.mxu0 %v828
    %2379 = vmatprep.subr.mxu0 0.0
    %2380 = vmatpush1.msra.mxu0 %v1057
    %2381 = vmatprep.subr.mxu0 0.0
    %2382 = vmatpush1.msra.mxu0 %v1286
    %2383 = vmatprep.subr.mxu0 0.0
    %2384 = vmatpush1.msra.mxu0 %v1515
    %2385 = vmatprep.subr.mxu0 0.0
    %2386 = vmatpush1.msra.mxu0 %v1744
    %2387 = vmatprep.subr.mxu0 0.0
    %2388 = vmatpush1.msra.mxu0 %v1973
    %2389 = vmatprep.subr.mxu0 0.0
    %2390 = vmatpush1.msra.mxu0 %v2202
    %2391 = vmatprep.subr.mxu0 0.0
    %2392 = vmatpush1.msra.mxu0 0.0
    %2393 = vmatprep.subr.mxu0 0.0
    %2394 = vmatpush1.msra.mxu0 0.0
    %2395 = vmatprep.subr.mxu0 0.0
    %2396 = vmatpush1.msra.mxu0 0.0
    %2397 = vmatprep.subr.mxu0 0.0
    %2398 = vmatpush1.msra.mxu0 0.0
    %2399 = vmatprep.subr.mxu0 0.0
    %2400 = vmatpush1.msra.mxu0 0.0
    %2401 = vmatprep.subr.mxu0 0.0
    %2402 = vmatpush1.msra.mxu0 0.0
    %2403 = vmatprep.subr.mxu0 0.0
    %2404 = vmatpush1.msra.mxu0 0.0
    %2405 = vmatprep.subr.mxu0 0.0
    %2406 = vmatpush1.msra.mxu0 0.0
    %2407 = vmatprep.subr.mxu0 0.0
    %2408 = vmatpush1.msra.mxu0 0.0
    %2409 = vmatprep.subr.mxu0 0.0
    %2410 = vmatpush1.msra.mxu0 0.0
    %2411 = vmatprep.subr.mxu0 0.0
    %2412 = vmatpush1.msra.mxu0 0.0
    %2413 = vmatprep.subr.mxu0 0.0
    %2414 = vmatpush1.msra.mxu0 0.0
    %2415 = vmatprep.subr.mxu0 0.0
    %2416 = vmatpush1.msra.mxu0 0.0
    %2417 = vmatprep.subr.mxu0 0.0
    %2418 = vmatpush1.msra.mxu0 0.0
    %2419 = vmatprep.subr.mxu0 0.0
    %2420 = vmatpush1.msra.mxu0 0.0
    %2421 = vmatprep.subr.mxu0 0.0
    %2422 = vmatpush1.msra.mxu0 0.0
    %2423 = vmatprep.subr.mxu0 0.0
    %2424 = vmatpush1.msra.mxu0 0.0
    %2425 = vmatprep.subr.mxu0 0.0
    %2426 = vmatpush1.msra.mxu0 0.0
    %2427 = vmatprep.subr.mxu0 0.0
    %2428 = vmatpush1.msra.mxu0 0.0
    %2429 = vmatprep.subr.mxu0 0.0
    %2430 = vmatpush1.msra.mxu0 0.0
    %2431 = vmatprep.subr.mxu0 0.0
    %2432 = vmatpush1.msra.mxu0 0.0
    %2433 = vmatprep.subr.mxu0 0.0
    %2434 = vmatpush1.msra.mxu0 0.0
    %2435 = vmatprep.subr.mxu0 0.0
    %2436 = vmatpush1.msra.mxu0 0.0
    %2437 = vmatprep.subr.mxu0 0.0
    %2438 = vmatpush1.msra.mxu0 0.0
    %2439 = vmatprep.mubr.f32.mxu0 0.0
    %2440 = vmatmul.mubr.f32.gmra.mrb[0].mxu0 %v2364
    %v2441 = vpop.f32.mrb[0].mxu0
    %v2442 = vadd.f32 0.0, %v2441
    %v2443 = vpop.f32.mrb[0].mxu0
    %2444 = vmatprep.mubr.f32.mxu0 0.0
    %2445 = vmatmul.mubr.f32.gmra.mrb[0].mxu0 %v2367
    %v2446 = vpop.f32.mrb[0].mxu0
    %v2447 = vadd.f32 0.0, %v2446
    %v2448 = vpop.f32.mrb[0].mxu0
    %2449 = vmatprep.mubr.f32.mxu0 0.0
    %2450 = vmatmul.mubr.f32.gmra.mrb[0].mxu0 %v2370
    %v2451 = vpop.f32.mrb[0].mxu0
    %v2452 = vadd.f32 0.0, %v2451
    %v2453 = vpop.f32.mrb[0].mxu0
    %2454 = vmatprep.mubr.f32.mxu0 0.0
    %2455 = vmatmul.mubr.f32.gmra.mrb[0].mxu0 %v2373
    %v2456 = vpop.f32.mrb[0].mxu0
    %v2457 = vadd.f32 0.0, %v2456
    %v2458 = vpop.f32.mrb[0].mxu0
    %2459 = vdwg.mxu0
    %v2460 = vsel %vm78, %v2359, 0.0
    %2461 = vadd.xlane.f32.xlu0 %v2460
    %v2462 = vpop.xlane.xlu0 %2461
    %v2463 = vsel %vm78, %v2360, 0.0
    %2464 = vadd.xlane.f32.xlu0 %v2463
    %v2465 = vpop.xlane.xlu0 %2464
    %v2466 = vsel %vm78, %v2361, 0.0
    %2467 = vadd.xlane.f32.xlu0 %v2466
    %v2468 = vpop.xlane.xlu0 %2467
    %v2469 = vsel %vm78, %v2362, 0.0
    %2470 = vadd.xlane.f32.xlu0 %v2469
    %v2471 = vpop.xlane.xlu0 %2470
    %v2472 = vmax.f32 %v2462, 1.0
    %v2473 = vmax.f32 %v2465, 1.0
    %v2474 = vmax.f32 %v2468, 1.0
    %v2475 = vmax.f32 %v2471, 1.0
    %v2476 = vrcp.pop %v2472
    %v2477 = vmul.f32 %v2442, %v2476
    %v2478 = vrcp.pop %v2473
    %v2479 = vmul.f32 %v2447, %v2478
    %v2480 = vrcp.pop %v2474
    %v2481 = vmul.f32 %v2452, %v2480
    %v2482 = vrcp.pop %v2475
    %v2483 = vmul.f32 %v2457, %v2482
    %2484 = vst.msk [vmem:[#allocation4] sm:$0xff] %vm283, %v2477
    %2485 = vst.msk [vmem:[#allocation4 + $0x8] sm:$0xff] %vm283, %v2479
    %2486 = vst.msk [vmem:[#allocation4 + $0x10] sm:$0xff] %vm283, %v2481
    %2487 = vst.msk [vmem:[#allocation4 + $0x18] sm:$0xff] %vm283, %v2483
    // Predicated region
    $region50: #{ast_paths_encoder_forward.1} parent=1 // pred_check
      _
    $region51: #{ast_paths_encoder_forward.1} parent=1 // pred_check_branch
      %2489 = sbr.rel (0) target = $region53
    $region52: #{ast_paths_encoder_forward.1} parent=1 // pred_region
      _
    $region53: #{ast_paths_encoder_forward.1} parent=1 // pred_fallthru
      _
    // Predicated region
    $region54: #{ast_paths_encoder_forward.1} parent=1 // pred_check
      _
    $region55: #{ast_paths_encoder_forward.1} parent=1 // pred_check_branch
      %2491 = sbr.rel (0) target = $region57
    $region56: #{ast_paths_encoder_forward.1} parent=1 // pred_region
      _
    $region57: #{ast_paths_encoder_forward.1} parent=1 // pred_fallthru
      _
    // Predicated region
    $region58: #{ast_paths_encoder_forward.1} parent=1 // pred_check
      _
    $region59: #{ast_paths_encoder_forward.1} parent=1 // pred_check_branch
      %2493 = sbr.rel (0) target = $region61
    $region60: #{ast_paths_encoder_forward.1} parent=1 // pred_region
      %s2495 = ssub.s32 128, 128
      %2496 = vsyncadd [#allocation3], %s2495
      %s2498 = sshll.u32 [#allocation2], 4
      %s2499 = int_to_ptr.vmem [resolvable:$true] %s2498
      %2501 = dma.vmem_to_hbm [thread:$0]  %s2499, 128, %s14, [#allocation3]
    $region61: #{ast_paths_encoder_forward.1} parent=1 // pred_fallthru
      _
    // Predicated region
    $region62: #{ast_paths_encoder_forward.1} parent=1 // pred_check
      _
    $region63: #{ast_paths_encoder_forward.1} parent=1 // pred_check_branch
      %2503 = sbr.rel (0) target = $region65
    $region64: #{ast_paths_encoder_forward.1} parent=1 // pred_region
      %s2505 = ssub.s32 512, 512
      %2506 = vsyncadd [#allocation5], %s2505
      %s2507 = sshll.u32 [#allocation4], 4
      %s2508 = int_to_ptr.vmem [resolvable:$true] %s2507
      %2513 = dma.vmem_to_hbm [thread:$0]  %s2508, 512, %s15, [#allocation5], 128, 128, 8
    $region65: #{ast_paths_encoder_forward.1} parent=1 // pred_fallthru
      _
    // Predicated region
    $region66: #{ast_paths_encoder_forward.1} parent=1 // pred_check
      _
    $region67: #{ast_paths_encoder_forward.1} parent=1 // pred_check_branch
      %2515 = sbr.rel (0) target = $region69
    $region68: #{ast_paths_encoder_forward.1} parent=1 // pred_region
      _
    $region69: #{ast_paths_encoder_forward.1} parent=1 // pred_fallthru
      _
    // Predicated region
    $region70: #{ast_paths_encoder_forward.1} parent=1 // pred_check
      _
    $region71: #{ast_paths_encoder_forward.1} parent=1 // pred_check_branch
      %2517 = sbr.rel (0) target = $region73
    $region72: #{ast_paths_encoder_forward.1} parent=1 // pred_region
      _
    $region73: #{ast_paths_encoder_forward.1} parent=1 // pred_fallthru
      _
    // Predicated region
    $region74: #{ast_paths_encoder_forward.1} parent=1 // pred_check
      _
    $region75: #{ast_paths_encoder_forward.1} parent=1 // pred_check_branch
      %2519 = sbr.rel (0) target = $region77
    $region76: #{ast_paths_encoder_forward.1} parent=1 // pred_region
      %2520 = dma.done [#allocation3], 128
    $region77: #{ast_paths_encoder_forward.1} parent=1 // pred_fallthru
      _
    // Predicated region
    $region78: #{ast_paths_encoder_forward.1} parent=1 // pred_check
      _
    $region79: #{ast_paths_encoder_forward.1} parent=1 // pred_check_branch
      %2522 = sbr.rel (0) target = $region81
    $region80: #{ast_paths_encoder_forward.1} parent=1 // pred_region
      %2523 = dma.done [#allocation5], 512
    $region81: #{ast_paths_encoder_forward.1} parent=1 // pred_fallthru
      _
    %2524 = vsyncpa [#allocation3], 1
    %2525 = vsyncpa [#allocation5], 1

</llo_original>
